<compile_context>
chip_gen: v6e
topology: v6e:2x2x1
jax: 0.10.0
libtpu: 0.0.40
codegen_flags: <defaults>
</compile_context>

<pallas_src>
from functools import partial

import jax
import jax.numpy as jnp
from jax.experimental import pallas as pl
from jax.experimental.pallas import tpu as pltpu


# ------------------------------ Pallas kernel -------------------------------

def _attention_kernel(x_ref, wqkv_ref, wproj_ref, bproj_ref, o_ref, *,
                      num_heads, scale):
    """Fused attention for one batch element.

    x_ref     : (1, N, C)   input tokens
    wqkv_ref  : (C, 3*C)    qkv projection weight (in, out) layout; out dim is
                            ordered (qkv, head, head_dim) like the torch module
    wproj_ref : (C, C)      output projection weight (in, out)
    bproj_ref : (1, C)      output projection bias
    o_ref     : (1, N, C)   output tokens
    """
    x = x_ref[0]                                   # (N, C)
    C = x.shape[-1]
    d = C // num_heads

    # qkv = x @ W_qkv   (qkv_bias=False -> no bias term at all)
    qkv = jnp.dot(x, wqkv_ref[...], preferred_element_type=jnp.float32)  # (N, 3C)

    # Per-head scaled dot-product attention; all heads in this single grid step.
    head_outs = []
    for h in range(num_heads):
        q = qkv[:, h * d:(h + 1) * d]                       # (N, d)
        k = qkv[:, C + h * d:C + (h + 1) * d]               # (N, d)
        v = qkv[:, 2 * C + h * d:2 * C + (h + 1) * d]       # (N, d)

        # dots = (q @ k^T) * scale   (contract last dims -> no explicit k.T)
        s = jax.lax.dot_general(q, k, (((1,), (1,)), ((), ())),
                                preferred_element_type=jnp.float32) * scale
        s = s - jnp.max(s, axis=-1, keepdims=True)
        p = jnp.exp(s)                                       # unnormalized probs
        r = jnp.sum(p, axis=-1, keepdims=True)               # (N, 1) row sums

        # attn @ v first, then normalize with an EUP reciprocal (N x d scaling
        # instead of N x N divides).
        o = jnp.dot(p, v, preferred_element_type=jnp.float32)  # (N, d)
        o = o * pl.reciprocal(r, approx=True)
        head_outs.append(o)

    out = jnp.concatenate(head_outs, axis=-1)                 # 'b h n d -> b n (h d)'

    # Output projection (+ bias); proj_drop(0.0) is identity.
    o_ref[0] = (jnp.dot(out, wproj_ref[...], preferred_element_type=jnp.float32)
                + bproj_ref[...])


# --------------------------------- wrapper ----------------------------------

def attention_forward(x, w_qkv, w_proj, b_proj, *, num_heads):
    """Attention.forward for x of shape (B, N, C)."""
    B, N, C = x.shape
    assert C % num_heads == 0
    d = C // num_heads
    scale = d ** (-0.5)

    kernel = partial(_attention_kernel, num_heads=num_heads, scale=scale)
    return pl.pallas_call(
        kernel,
        grid=(B,),
        in_specs=[
            pl.BlockSpec((1, N, C), lambda b: (b, 0, 0)),     # x
            pl.BlockSpec((C, 3 * C), lambda b: (0, 0)),       # W_qkv (resident)
            pl.BlockSpec((C, C), lambda b: (0, 0)),           # W_proj (resident)
            pl.BlockSpec((1, C), lambda b: (0, 0)),           # b_proj (resident)
        ],
        out_specs=pl.BlockSpec((1, N, C), lambda b: (b, 0, 0)),
        out_shape=jax.ShapeDtypeStruct((B, N, C), jnp.float32),
        compiler_params=pltpu.CompilerParams(
            dimension_semantics=("parallel",)),               # megacore on v7x
    )(x, w_qkv, w_proj, b_proj.reshape(1, C))
    # TODO(synk): for very long sequences (N*C blocks exceeding the VMEM budget,
    # esp. on v7x's 64 MiB) this would need a flash-style query-block grid axis;
    # unnecessary at the module's intended sizes.


# ------------------------- pure-JAX reference (check) ------------------------

def attention_reference(x, w_qkv, w_proj, b_proj, num_heads):
    B, N, C = x.shape
    d = C // num_heads
    qkv = x @ w_qkv                                            # (B, N, 3C)
    qkv = qkv.reshape(B, N, 3, num_heads, d)                   # 'b n (qkv h d)'
    q = jnp.transpose(qkv[:, :, 0], (0, 2, 1, 3))              # (B, H, N, d)
    k = jnp.transpose(qkv[:, :, 1], (0, 2, 1, 3))
    v = jnp.transpose(qkv[:, :, 2], (0, 2, 1, 3))
    dots = jnp.einsum('bhid,bhjd->bhij', q, k) * (d ** (-0.5))
    attn = jax.nn.softmax(dots, axis=-1)
    out = jnp.einsum('bhij,bhjd->bhid', attn, v)
    out = jnp.transpose(out, (0, 2, 1, 3)).reshape(B, N, C)    # 'b h n d -> b n (h d)'
    return out @ w_proj + b_proj


# ----------------------------------- main ------------------------------------

if __name__ == "__main__":
    # Small, module-consistent shapes: batch=2, seq=128, dim=128, heads=8 (d=16).
    B, N, C, H = 2, 128, 128, 8

    key = jax.random.PRNGKey(0)
    kx, kq, kp, kb = jax.random.split(key, 4)
    x = jax.random.normal(kx, (B, N, C), jnp.float32)
    w_qkv = 0.02 * jax.random.normal(kq, (C, 3 * C), jnp.float32)   # (in, out)
    w_proj = 0.02 * jax.random.normal(kp, (C, C), jnp.float32)      # (in, out)
    b_proj = 0.02 * jax.random.normal(kb, (C,), jnp.float32)

    fwd = jax.jit(partial(attention_forward, num_heads=H))
    out = fwd(x, w_qkv, w_proj, b_proj)
    jax.block_until_ready(out)

    assert out.shape == (B, N, C)
    assert bool(jnp.all(jnp.isfinite(out)))

    ref = attention_reference(x, w_qkv, w_proj, b_proj, H)
    rel_err = float(jnp.max(jnp.abs(out - ref)) /
                    (jnp.max(jnp.abs(ref)) + 1e-12))
    assert rel_err < 2e-2, f"relative error too large: {rel_err}"

    print("KERNEL_OK")
</pallas_src>

<mosaic_0001>
module attributes {stable_mosaic.version = 11 : i64} {
  func.func @_attention_kernel(%arg0: i32, %arg1: memref<1x128x128xf32, #tpu.memory_space<vmem>>, %arg2: memref<128x384xf32, #tpu.memory_space<vmem>>, %arg3: memref<128x128xf32, #tpu.memory_space<vmem>>, %arg4: memref<1x128xf32, #tpu.memory_space<vmem>>, %arg5: memref<1x128x128xf32, #tpu.memory_space<vmem>>) attributes {dimension_semantics = [#tpu.dimension_semantics<parallel>], iteration_bounds = array<i64: 2>, scalar_prefetch = 0 : i64, scratch_operands = 0 : i64, tpu.core_type = #tpu.core_type<tc>, window_params = [{transform_indices = @transform_0, window_bounds = array<i64: 1, 128, 128>}, {pipeline_mode = #tpu.pipeline_mode<synchronous>, transform_indices = @transform_1, window_bounds = array<i64: 128, 384>}, {pipeline_mode = #tpu.pipeline_mode<synchronous>, transform_indices = @transform_2, window_bounds = array<i64: 128, 128>}, {pipeline_mode = #tpu.pipeline_mode<synchronous>, transform_indices = @transform_3, window_bounds = array<i64: 1, 128>}, {transform_indices = @transform_4, window_bounds = array<i64: 1, 128, 128>}]} {
    %c0 = arith.constant 0 : index
    %c0_0 = arith.constant 0 : index
    %c0_1 = arith.constant 0 : index
    %0 = vector.load %arg1[%c0, %c0_0, %c0_1] : memref<1x128x128xf32, #tpu.memory_space<vmem>>, vector<1x128x128xf32>
    %1 = vector.shape_cast %0 : vector<1x128x128xf32> to vector<128x128xf32>
    %c0_2 = arith.constant 0 : index
    %c0_3 = arith.constant 0 : index
    %2 = vector.load %arg2[%c0_2, %c0_3] : memref<128x384xf32, #tpu.memory_space<vmem>>, vector<128x384xf32>
    %cst = arith.constant dense<0.000000e+00> : vector<128x384xf32>
    %3 = tpu.matmul %1, %2, %cst {dimension_numbers = #tpu.dot_dimension_numbers<[1], [0], [0], [1], [0, 0, 1, 1], [], []>} : vector<128x128xf32>, vector<128x384xf32>, vector<128x384xf32> -> vector<128x384xf32>
    %4 = vector.extract_strided_slice %3 {offsets = [0, 0], sizes = [128, 16], strides = [1, 1]} : vector<128x384xf32> to vector<128x16xf32>
    %5 = vector.extract_strided_slice %3 {offsets = [0, 128], sizes = [128, 16], strides = [1, 1]} : vector<128x384xf32> to vector<128x16xf32>
    %6 = vector.extract_strided_slice %3 {offsets = [0, 256], sizes = [128, 16], strides = [1, 1]} : vector<128x384xf32> to vector<128x16xf32>
    %cst_4 = arith.constant dense<0.000000e+00> : vector<128x128xf32>
    %7 = tpu.matmul %4, %5, %cst_4 {dimension_numbers = #tpu.dot_dimension_numbers<[1], [1], [0], [0], [0, 0, 1, 0], [], []>} : vector<128x16xf32>, vector<128x16xf32>, vector<128x128xf32> -> vector<128x128xf32>
    %cst_5 = arith.constant 2.500000e-01 : f32
    %8 = vector.broadcast %cst_5 : f32 to vector<128x128xf32>
    %9 = arith.mulf %7, %8 : vector<128x128xf32>
    %cst_6 = arith.constant dense<0xFF800000> : vector<128xf32>
    %10 = vector.multi_reduction <maximumf>, %9, %cst_6 [1] : vector<128x128xf32> to vector<128xf32>
    %11 = vector.shape_cast %10 : vector<128xf32> to vector<128x1xf32>
    %12 = vector.broadcast %11 : vector<128x1xf32> to vector<128x128xf32>
    %13 = arith.subf %9, %12 : vector<128x128xf32>
    %14 = math.exp %13 : vector<128x128xf32>
    %cst_7 = arith.constant dense<0.000000e+00> : vector<128xf32>
    %15 = vector.multi_reduction <add>, %14, %cst_7 [1] : vector<128x128xf32> to vector<128xf32>
    %16 = vector.shape_cast %15 : vector<128xf32> to vector<128x1xf32>
    %cst_8 = arith.constant dense<0.000000e+00> : vector<128x16xf32>
    %17 = tpu.matmul %14, %6, %cst_8 {dimension_numbers = #tpu.dot_dimension_numbers<[1], [0], [0], [1], [0, 0, 1, 1], [], []>} : vector<128x128xf32>, vector<128x16xf32>, vector<128x16xf32> -> vector<128x16xf32>
    %18 = tpu.reciprocal %16 {approx = true} : vector<128x1xf32> -> vector<128x1xf32>
    %19 = vector.broadcast %18 : vector<128x1xf32> to vector<128x16xf32>
    %20 = arith.mulf %17, %19 : vector<128x16xf32>
    %21 = vector.extract_strided_slice %3 {offsets = [0, 16], sizes = [128, 16], strides = [1, 1]} : vector<128x384xf32> to vector<128x16xf32>
    %22 = vector.extract_strided_slice %3 {offsets = [0, 144], sizes = [128, 16], strides = [1, 1]} : vector<128x384xf32> to vector<128x16xf32>
    %23 = vector.extract_strided_slice %3 {offsets = [0, 272], sizes = [128, 16], strides = [1, 1]} : vector<128x384xf32> to vector<128x16xf32>
    %cst_9 = arith.constant dense<0.000000e+00> : vector<128x128xf32>
    %24 = tpu.matmul %21, %22, %cst_9 {dimension_numbers = #tpu.dot_dimension_numbers<[1], [1], [0], [0], [0, 0, 1, 0], [], []>} : vector<128x16xf32>, vector<128x16xf32>, vector<128x128xf32> -> vector<128x128xf32>
    %cst_10 = arith.constant 2.500000e-01 : f32
    %25 = vector.broadcast %cst_10 : f32 to vector<128x128xf32>
    %26 = arith.mulf %24, %25 : vector<128x128xf32>
    %cst_11 = arith.constant dense<0xFF800000> : vector<128xf32>
    %27 = vector.multi_reduction <maximumf>, %26, %cst_11 [1] : vector<128x128xf32> to vector<128xf32>
    %28 = vector.shape_cast %27 : vector<128xf32> to vector<128x1xf32>
    %29 = vector.broadcast %28 : vector<128x1xf32> to vector<128x128xf32>
    %30 = arith.subf %26, %29 : vector<128x128xf32>
    %31 = math.exp %30 : vector<128x128xf32>
    %cst_12 = arith.constant dense<0.000000e+00> : vector<128xf32>
    %32 = vector.multi_reduction <add>, %31, %cst_12 [1] : vector<128x128xf32> to vector<128xf32>
    %33 = vector.shape_cast %32 : vector<128xf32> to vector<128x1xf32>
    %cst_13 = arith.constant dense<0.000000e+00> : vector<128x16xf32>
    %34 = tpu.matmul %31, %23, %cst_13 {dimension_numbers = #tpu.dot_dimension_numbers<[1], [0], [0], [1], [0, 0, 1, 1], [], []>} : vector<128x128xf32>, vector<128x16xf32>, vector<128x16xf32> -> vector<128x16xf32>
    %35 = tpu.reciprocal %33 {approx = true} : vector<128x1xf32> -> vector<128x1xf32>
    %36 = vector.broadcast %35 : vector<128x1xf32> to vector<128x16xf32>
    %37 = arith.mulf %34, %36 : vector<128x16xf32>
    %38 = vector.extract_strided_slice %3 {offsets = [0, 32], sizes = [128, 16], strides = [1, 1]} : vector<128x384xf32> to vector<128x16xf32>
    %39 = vector.extract_strided_slice %3 {offsets = [0, 160], sizes = [128, 16], strides = [1, 1]} : vector<128x384xf32> to vector<128x16xf32>
    %40 = vector.extract_strided_slice %3 {offsets = [0, 288], sizes = [128, 16], strides = [1, 1]} : vector<128x384xf32> to vector<128x16xf32>
    %cst_14 = arith.constant dense<0.000000e+00> : vector<128x128xf32>
    %41 = tpu.matmul %38, %39, %cst_14 {dimension_numbers = #tpu.dot_dimension_numbers<[1], [1], [0], [0], [0, 0, 1, 0], [], []>} : vector<128x16xf32>, vector<128x16xf32>, vector<128x128xf32> -> vector<128x128xf32>
    %cst_15 = arith.constant 2.500000e-01 : f32
    %42 = vector.broadcast %cst_15 : f32 to vector<128x128xf32>
    %43 = arith.mulf %41, %42 : vector<128x128xf32>
    %cst_16 = arith.constant dense<0xFF800000> : vector<128xf32>
    %44 = vector.multi_reduction <maximumf>, %43, %cst_16 [1] : vector<128x128xf32> to vector<128xf32>
    %45 = vector.shape_cast %44 : vector<128xf32> to vector<128x1xf32>
    %46 = vector.broadcast %45 : vector<128x1xf32> to vector<128x128xf32>
    %47 = arith.subf %43, %46 : vector<128x128xf32>
    %48 = math.exp %47 : vector<128x128xf32>
    %cst_17 = arith.constant dense<0.000000e+00> : vector<128xf32>
    %49 = vector.multi_reduction <add>, %48, %cst_17 [1] : vector<128x128xf32> to vector<128xf32>
    %50 = vector.shape_cast %49 : vector<128xf32> to vector<128x1xf32>
    %cst_18 = arith.constant dense<0.000000e+00> : vector<128x16xf32>
    %51 = tpu.matmul %48, %40, %cst_18 {dimension_numbers = #tpu.dot_dimension_numbers<[1], [0], [0], [1], [0, 0, 1, 1], [], []>} : vector<128x128xf32>, vector<128x16xf32>, vector<128x16xf32> -> vector<128x16xf32>
    %52 = tpu.reciprocal %50 {approx = true} : vector<128x1xf32> -> vector<128x1xf32>
    %53 = vector.broadcast %52 : vector<128x1xf32> to vector<128x16xf32>
    %54 = arith.mulf %51, %53 : vector<128x16xf32>
    %55 = vector.extract_strided_slice %3 {offsets = [0, 48], sizes = [128, 16], strides = [1, 1]} : vector<128x384xf32> to vector<128x16xf32>
    %56 = vector.extract_strided_slice %3 {offsets = [0, 176], sizes = [128, 16], strides = [1, 1]} : vector<128x384xf32> to vector<128x16xf32>
    %57 = vector.extract_strided_slice %3 {offsets = [0, 304], sizes = [128, 16], strides = [1, 1]} : vector<128x384xf32> to vector<128x16xf32>
    %cst_19 = arith.constant dense<0.000000e+00> : vector<128x128xf32>
    %58 = tpu.matmul %55, %56, %cst_19 {dimension_numbers = #tpu.dot_dimension_numbers<[1], [1], [0], [0], [0, 0, 1, 0], [], []>} : vector<128x16xf32>, vector<128x16xf32>, vector<128x128xf32> -> vector<128x128xf32>
    %cst_20 = arith.constant 2.500000e-01 : f32
    %59 = vector.broadcast %cst_20 : f32 to vector<128x128xf32>
    %60 = arith.mulf %58, %59 : vector<128x128xf32>
    %cst_21 = arith.constant dense<0xFF800000> : vector<128xf32>
    %61 = vector.multi_reduction <maximumf>, %60, %cst_21 [1] : vector<128x128xf32> to vector<128xf32>
    %62 = vector.shape_cast %61 : vector<128xf32> to vector<128x1xf32>
    %63 = vector.broadcast %62 : vector<128x1xf32> to vector<128x128xf32>
    %64 = arith.subf %60, %63 : vector<128x128xf32>
    %65 = math.exp %64 : vector<128x128xf32>
    %cst_22 = arith.constant dense<0.000000e+00> : vector<128xf32>
    %66 = vector.multi_reduction <add>, %65, %cst_22 [1] : vector<128x128xf32> to vector<128xf32>
    %67 = vector.shape_cast %66 : vector<128xf32> to vector<128x1xf32>
    %cst_23 = arith.constant dense<0.000000e+00> : vector<128x16xf32>
    %68 = tpu.matmul %65, %57, %cst_23 {dimension_numbers = #tpu.dot_dimension_numbers<[1], [0], [0], [1], [0, 0, 1, 1], [], []>} : vector<128x128xf32>, vector<128x16xf32>, vector<128x16xf32> -> vector<128x16xf32>
    %69 = tpu.reciprocal %67 {approx = true} : vector<128x1xf32> -> vector<128x1xf32>
    %70 = vector.broadcast %69 : vector<128x1xf32> to vector<128x16xf32>
    %71 = arith.mulf %68, %70 : vector<128x16xf32>
    %72 = vector.extract_strided_slice %3 {offsets = [0, 64], sizes = [128, 16], strides = [1, 1]} : vector<128x384xf32> to vector<128x16xf32>
    %73 = vector.extract_strided_slice %3 {offsets = [0, 192], sizes = [128, 16], strides = [1, 1]} : vector<128x384xf32> to vector<128x16xf32>
    %74 = vector.extract_strided_slice %3 {offsets = [0, 320], sizes = [128, 16], strides = [1, 1]} : vector<128x384xf32> to vector<128x16xf32>
    %cst_24 = arith.constant dense<0.000000e+00> : vector<128x128xf32>
    %75 = tpu.matmul %72, %73, %cst_24 {dimension_numbers = #tpu.dot_dimension_numbers<[1], [1], [0], [0], [0, 0, 1, 0], [], []>} : vector<128x16xf32>, vector<128x16xf32>, vector<128x128xf32> -> vector<128x128xf32>
    %cst_25 = arith.constant 2.500000e-01 : f32
    %76 = vector.broadcast %cst_25 : f32 to vector<128x128xf32>
    %77 = arith.mulf %75, %76 : vector<128x128xf32>
    %cst_26 = arith.constant dense<0xFF800000> : vector<128xf32>
    %78 = vector.multi_reduction <maximumf>, %77, %cst_26 [1] : vector<128x128xf32> to vector<128xf32>
    %79 = vector.shape_cast %78 : vector<128xf32> to vector<128x1xf32>
    %80 = vector.broadcast %79 : vector<128x1xf32> to vector<128x128xf32>
    %81 = arith.subf %77, %80 : vector<128x128xf32>
    %82 = math.exp %81 : vector<128x128xf32>
    %cst_27 = arith.constant dense<0.000000e+00> : vector<128xf32>
    %83 = vector.multi_reduction <add>, %82, %cst_27 [1] : vector<128x128xf32> to vector<128xf32>
    %84 = vector.shape_cast %83 : vector<128xf32> to vector<128x1xf32>
    %cst_28 = arith.constant dense<0.000000e+00> : vector<128x16xf32>
    %85 = tpu.matmul %82, %74, %cst_28 {dimension_numbers = #tpu.dot_dimension_numbers<[1], [0], [0], [1], [0, 0, 1, 1], [], []>} : vector<128x128xf32>, vector<128x16xf32>, vector<128x16xf32> -> vector<128x16xf32>
    %86 = tpu.reciprocal %84 {approx = true} : vector<128x1xf32> -> vector<128x1xf32>
    %87 = vector.broadcast %86 : vector<128x1xf32> to vector<128x16xf32>
    %88 = arith.mulf %85, %87 : vector<128x16xf32>
    %89 = vector.extract_strided_slice %3 {offsets = [0, 80], sizes = [128, 16], strides = [1, 1]} : vector<128x384xf32> to vector<128x16xf32>
    %90 = vector.extract_strided_slice %3 {offsets = [0, 208], sizes = [128, 16], strides = [1, 1]} : vector<128x384xf32> to vector<128x16xf32>
    %91 = vector.extract_strided_slice %3 {offsets = [0, 336], sizes = [128, 16], strides = [1, 1]} : vector<128x384xf32> to vector<128x16xf32>
    %cst_29 = arith.constant dense<0.000000e+00> : vector<128x128xf32>
    %92 = tpu.matmul %89, %90, %cst_29 {dimension_numbers = #tpu.dot_dimension_numbers<[1], [1], [0], [0], [0, 0, 1, 0], [], []>} : vector<128x16xf32>, vector<128x16xf32>, vector<128x128xf32> -> vector<128x128xf32>
    %cst_30 = arith.constant 2.500000e-01 : f32
    %93 = vector.broadcast %cst_30 : f32 to vector<128x128xf32>
    %94 = arith.mulf %92, %93 : vector<128x128xf32>
    %cst_31 = arith.constant dense<0xFF800000> : vector<128xf32>
    %95 = vector.multi_reduction <maximumf>, %94, %cst_31 [1] : vector<128x128xf32> to vector<128xf32>
    %96 = vector.shape_cast %95 : vector<128xf32> to vector<128x1xf32>
    %97 = vector.broadcast %96 : vector<128x1xf32> to vector<128x128xf32>
    %98 = arith.subf %94, %97 : vector<128x128xf32>
    %99 = math.exp %98 : vector<128x128xf32>
    %cst_32 = arith.constant dense<0.000000e+00> : vector<128xf32>
    %100 = vector.multi_reduction <add>, %99, %cst_32 [1] : vector<128x128xf32> to vector<128xf32>
    %101 = vector.shape_cast %100 : vector<128xf32> to vector<128x1xf32>
    %cst_33 = arith.constant dense<0.000000e+00> : vector<128x16xf32>
    %102 = tpu.matmul %99, %91, %cst_33 {dimension_numbers = #tpu.dot_dimension_numbers<[1], [0], [0], [1], [0, 0, 1, 1], [], []>} : vector<128x128xf32>, vector<128x16xf32>, vector<128x16xf32> -> vector<128x16xf32>
    %103 = tpu.reciprocal %101 {approx = true} : vector<128x1xf32> -> vector<128x1xf32>
    %104 = vector.broadcast %103 : vector<128x1xf32> to vector<128x16xf32>
    %105 = arith.mulf %102, %104 : vector<128x16xf32>
    %106 = vector.extract_strided_slice %3 {offsets = [0, 96], sizes = [128, 16], strides = [1, 1]} : vector<128x384xf32> to vector<128x16xf32>
    %107 = vector.extract_strided_slice %3 {offsets = [0, 224], sizes = [128, 16], strides = [1, 1]} : vector<128x384xf32> to vector<128x16xf32>
    %108 = vector.extract_strided_slice %3 {offsets = [0, 352], sizes = [128, 16], strides = [1, 1]} : vector<128x384xf32> to vector<128x16xf32>
    %cst_34 = arith.constant dense<0.000000e+00> : vector<128x128xf32>
    %109 = tpu.matmul %106, %107, %cst_34 {dimension_numbers = #tpu.dot_dimension_numbers<[1], [1], [0], [0], [0, 0, 1, 0], [], []>} : vector<128x16xf32>, vector<128x16xf32>, vector<128x128xf32> -> vector<128x128xf32>
    %cst_35 = arith.constant 2.500000e-01 : f32
    %110 = vector.broadcast %cst_35 : f32 to vector<128x128xf32>
    %111 = arith.mulf %109, %110 : vector<128x128xf32>
    %cst_36 = arith.constant dense<0xFF800000> : vector<128xf32>
    %112 = vector.multi_reduction <maximumf>, %111, %cst_36 [1] : vector<128x128xf32> to vector<128xf32>
    %113 = vector.shape_cast %112 : vector<128xf32> to vector<128x1xf32>
    %114 = vector.broadcast %113 : vector<128x1xf32> to vector<128x128xf32>
    %115 = arith.subf %111, %114 : vector<128x128xf32>
    %116 = math.exp %115 : vector<128x128xf32>
    %cst_37 = arith.constant dense<0.000000e+00> : vector<128xf32>
    %117 = vector.multi_reduction <add>, %116, %cst_37 [1] : vector<128x128xf32> to vector<128xf32>
    %118 = vector.shape_cast %117 : vector<128xf32> to vector<128x1xf32>
    %cst_38 = arith.constant dense<0.000000e+00> : vector<128x16xf32>
    %119 = tpu.matmul %116, %108, %cst_38 {dimension_numbers = #tpu.dot_dimension_numbers<[1], [0], [0], [1], [0, 0, 1, 1], [], []>} : vector<128x128xf32>, vector<128x16xf32>, vector<128x16xf32> -> vector<128x16xf32>
    %120 = tpu.reciprocal %118 {approx = true} : vector<128x1xf32> -> vector<128x1xf32>
    %121 = vector.broadcast %120 : vector<128x1xf32> to vector<128x16xf32>
    %122 = arith.mulf %119, %121 : vector<128x16xf32>
    %123 = vector.extract_strided_slice %3 {offsets = [0, 112], sizes = [128, 16], strides = [1, 1]} : vector<128x384xf32> to vector<128x16xf32>
    %124 = vector.extract_strided_slice %3 {offsets = [0, 240], sizes = [128, 16], strides = [1, 1]} : vector<128x384xf32> to vector<128x16xf32>
    %125 = vector.extract_strided_slice %3 {offsets = [0, 368], sizes = [128, 16], strides = [1, 1]} : vector<128x384xf32> to vector<128x16xf32>
    %cst_39 = arith.constant dense<0.000000e+00> : vector<128x128xf32>
    %126 = tpu.matmul %123, %124, %cst_39 {dimension_numbers = #tpu.dot_dimension_numbers<[1], [1], [0], [0], [0, 0, 1, 0], [], []>} : vector<128x16xf32>, vector<128x16xf32>, vector<128x128xf32> -> vector<128x128xf32>
    %cst_40 = arith.constant 2.500000e-01 : f32
    %127 = vector.broadcast %cst_40 : f32 to vector<128x128xf32>
    %128 = arith.mulf %126, %127 : vector<128x128xf32>
    %cst_41 = arith.constant dense<0xFF800000> : vector<128xf32>
    %129 = vector.multi_reduction <maximumf>, %128, %cst_41 [1] : vector<128x128xf32> to vector<128xf32>
    %130 = vector.shape_cast %129 : vector<128xf32> to vector<128x1xf32>
    %131 = vector.broadcast %130 : vector<128x1xf32> to vector<128x128xf32>
    %132 = arith.subf %128, %131 : vector<128x128xf32>
    %133 = math.exp %132 : vector<128x128xf32>
    %cst_42 = arith.constant dense<0.000000e+00> : vector<128xf32>
    %134 = vector.multi_reduction <add>, %133, %cst_42 [1] : vector<128x128xf32> to vector<128xf32>
    %135 = vector.shape_cast %134 : vector<128xf32> to vector<128x1xf32>
    %cst_43 = arith.constant dense<0.000000e+00> : vector<128x16xf32>
    %136 = tpu.matmul %133, %125, %cst_43 {dimension_numbers = #tpu.dot_dimension_numbers<[1], [0], [0], [1], [0, 0, 1, 1], [], []>} : vector<128x128xf32>, vector<128x16xf32>, vector<128x16xf32> -> vector<128x16xf32>
    %137 = tpu.reciprocal %135 {approx = true} : vector<128x1xf32> -> vector<128x1xf32>
    %138 = vector.broadcast %137 : vector<128x1xf32> to vector<128x16xf32>
    %139 = arith.mulf %136, %138 : vector<128x16xf32>
    %140 = tpu.concatenate %20, %37, %54, %71, %88, %105, %122, %139 in 1 : vector<128x16xf32>, vector<128x16xf32>, vector<128x16xf32>, vector<128x16xf32>, vector<128x16xf32>, vector<128x16xf32>, vector<128x16xf32>, vector<128x16xf32> -> vector<128x128xf32>
    %c0_44 = arith.constant 0 : index
    %c0_45 = arith.constant 0 : index
    %141 = vector.load %arg3[%c0_44, %c0_45] : memref<128x128xf32, #tpu.memory_space<vmem>>, vector<128x128xf32>
    %cst_46 = arith.constant dense<0.000000e+00> : vector<128x128xf32>
    %142 = tpu.matmul %140, %141, %cst_46 {dimension_numbers = #tpu.dot_dimension_numbers<[1], [0], [0], [1], [0, 0, 1, 1], [], []>} : vector<128x128xf32>, vector<128x128xf32>, vector<128x128xf32> -> vector<128x128xf32>
    %c0_47 = arith.constant 0 : index
    %c0_48 = arith.constant 0 : index
    %143 = vector.load %arg4[%c0_47, %c0_48] : memref<1x128xf32, #tpu.memory_space<vmem>>, vector<1x128xf32>
    %144 = vector.broadcast %143 : vector<1x128xf32> to vector<128x128xf32>
    %145 = arith.addf %142, %144 : vector<128x128xf32>
    %c0_49 = arith.constant 0 : index
    %c0_50 = arith.constant 0 : index
    %c0_51 = arith.constant 0 : index
    %146 = vector.load %arg5[%c0_49, %c0_50, %c0_51] : memref<1x128x128xf32, #tpu.memory_space<vmem>>, vector<1x128x128xf32>
    %147 = vector.shape_cast %146 : vector<1x128x128xf32> to vector<128x128xf32>
    %148 = vector.shape_cast %145 : vector<128x128xf32> to vector<1x128x128xf32>
    tpu.vector_store %arg5[%c0_49, %c0_50, %c0_51], %148 {strides = array<i32>} : memref<1x128x128xf32, #tpu.memory_space<vmem>>, vector<1x128x128xf32>,
    return
  }
  func.func @transform_0(%arg0: i32) -> (i32, i32, i32) {
    %c0_i32 = arith.constant 0 : i32
    %c0_i32_0 = arith.constant 0 : i32
    %c0_i32_1 = arith.constant 0 : i32
    return %arg0, %c0_i32, %c0_i32_0 : i32, i32, i32
  }
  func.func @transform_1(%arg0: i32) -> (i32, i32) {
    %c0_i32 = arith.constant 0 : i32
    %c0_i32_0 = arith.constant 0 : i32
    %c0_i32_1 = arith.constant 0 : i32
    return %c0_i32, %c0_i32_0 : i32, i32
  }
  func.func @transform_2(%arg0: i32) -> (i32, i32) {
    %c0_i32 = arith.constant 0 : i32
    %c0_i32_0 = arith.constant 0 : i32
    %c0_i32_1 = arith.constant 0 : i32
    return %c0_i32, %c0_i32_0 : i32, i32
  }
  func.func @transform_3(%arg0: i32) -> (i32, i32) {
    %c0_i32 = arith.constant 0 : i32
    %c0_i32_0 = arith.constant 0 : i32
    %c0_i32_1 = arith.constant 0 : i32
    return %c0_i32, %c0_i32_0 : i32, i32
  }
  func.func @transform_4(%arg0: i32) -> (i32, i32, i32) {
    %c0_i32 = arith.constant 0 : i32
    %c0_i32_0 = arith.constant 0 : i32
    %c0_i32_1 = arith.constant 0 : i32
    return %arg0, %c0_i32, %c0_i32_0 : i32, i32, i32
  }
}

</mosaic_0001>

<llo_original>
// kernel: attention_forward.1
$region0: #{attention_forward.1}
  #allocation0 [shape = 'u32[]', space=smem, size = 0x4, offset = 0x4, fixed_abs, tag = 'smem constant byte address 0x4 - core index']
  #allocation1 [shape = 'u32[144,128]{1,0:T(1,128)}', space=vmem, size = 0x12000, scoped, tag = 'internal scratch']
  %s0 = inlined_call_operand.hbm [shape: f32[2,128,128], index: 0, kind: input, shape index: {}]
  %s1 = inlined_call_operand.hbm [shape: f32[128,384], index: 1, kind: input, shape index: {}]
  %s2 = inlined_call_operand.hbm [shape: f32[128,128], index: 2, kind: input, shape index: {}]
  %s3 = inlined_call_operand.vmem [shape: f32[1,128], index: 3, kind: input, shape index: {}]
  %s4 = inlined_call_operand.hbm [shape: f32[2,128,128], index: 4, kind: output, shape index: {}]
  %s5 = sld [smem:[#allocation0]]
  $region61: #{attention_forward.1} parent=0
    _
  %s7 = ssub.s32 1, %s5
  %s8 = scalar_select 0, %s7, %s5
  $region1: #{attention_forward.1} parent=0
    #allocation2 [shape = 'u8[131072]{0}', space=vmem, size = 0x20000, scoped, tag = 'input window, operand 0']
    #allocation3 [shape = 's32[2]{0}', space=sflag, size = 0x8, scoped, tag = 'scoped memory for attention_forward.1']
    #allocation4 [shape = 's32[2]{0}', space=sflag, size = 0x8, scoped, tag = 'scoped memory for attention_forward.1']
    #allocation5 [shape = 'u8[196608]{0}', space=vmem, size = 0x30000, scoped, tag = 'input window, operand 1, single buffered']
    #allocation6 [shape = 's32[1]{0}', space=sflag, size = 0x4, scoped, tag = 'scoped memory for attention_forward.1']
    #allocation7 [shape = 'u8[65536]{0}', space=vmem, size = 0x10000, scoped, tag = 'input window, operand 2, single buffered']
    #allocation8 [shape = 'u8[131072]{0}', space=vmem, size = 0x20000, scoped, tag = 'output window, operand 0']
    %9 = vsyncpa [#allocation3], 0
    %s10 = scalar_lea.sflag [#allocation3], 1
    %11 = vsyncpa %s10, 0
    %12 = vsyncpa [#allocation6], 0
    %13 = vsyncpa [#allocation4], 0
    %s14 = scalar_lea.sflag [#allocation4], 1
    %15 = vsyncpa %s14, 0
    loop: start=0, step=1, limit=4
    $region2: #{attention_forward.1} parent=1 // loop_pre_header
      _
    $region3: #{attention_forward.1} parent=1 // loop_header
      %s17 = sphi 0, %s21
      %p18 = scmp.ge.s32.totalorder %s17, 4
      %s27 = sphi 0, %s29
      %s30 = sphi 0, %s27
      %s31 = sphi 0, %s30
      %s47 = sphi 0, %s31
      %s51 = sphi 0, %s51
      %s53 = sphi 0, %s51
      %s54 = sphi 0, %s53
      %s68 = sphi 0, %s54
      %s72 = sphi 0, %s72
      %s74 = sphi 0, %s72
      %s75 = sphi 0, %s74
      %s89 = sphi 0, %s75
      %s93 = sphi 0, %s93
      %s95 = sphi 0, %s93
      %s96 = sphi 0, %s95
      %s110 = sphi 0, %s96
      %s116 = sphi 0, %s118
      %s119 = sphi 0, %s116
      %s120 = sphi 0, %s119
      %s136 = sphi 0, %s120
    $region4: #{attention_forward.1} parent=1 // loop_header_branch
      %20 = sbr.rel (%p18) target = $region8
    $region5: #{attention_forward.1} parent=1 // loop_body
      %s22 = ssub.s32 %s17, 1
      %s23 = ssub.s32 %s17, 2
      %s24 = sadd.s32 %s17, 1
      %s25 = ssub.s32 %s17, %s24
      %p26 = scmp.eq.s32.totalorder %s25, 0
      %s28 = sadd.s32 %s27, 1
      %s29 = scalar_select %p26, %s27, %s28
      %p32 = pneg %p26
      %p33 = scmp.eq.s32.totalorder %s17, 1
      %p34 = por %p32, %p33
      %p35 = scmp.ne.s32.totalorder %s27, %s30
      %p36 = scmp.eq.s32.totalorder %s17, 0
      %p37 = por %p35, %p36
      %p38 = scmp.ne.s32.totalorder %s27, %s30
      %p39 = scmp.eq.s32.totalorder %s22, 1
      %p40 = por %p38, %p39
      %p41 = scmp.ne.s32.totalorder %s30, %s31
      %p42 = scmp.eq.s32.totalorder %s22, 0
      %p43 = por %p41, %p42
      %p44 = scmp.ne.s32.totalorder %s30, %s31
      %p45 = scmp.eq.s32.totalorder %s23, 1
      %p46 = por %p44, %p45
      %p48 = scmp.ne.s32.totalorder %s31, %s47
      %p49 = scmp.eq.s32.totalorder %s23, 0
      %p50 = por %p48, %p49
      %s52 = sadd.s32 %s51, 1
      %p55 = scmp.eq.s32.totalorder %s17, 1
      %p56 = scmp.ne.s32.totalorder %s51, %s53
      %p57 = scmp.eq.s32.totalorder %s17, 0
      %p58 = por %p56, %p57
      %p59 = scmp.ne.s32.totalorder %s51, %s53
      %p60 = scmp.eq.s32.totalorder %s22, 1
      %p61 = por %p59, %p60
      %p62 = scmp.ne.s32.totalorder %s53, %s54
      %p63 = scmp.eq.s32.totalorder %s22, 0
      %p64 = por %p62, %p63
      %p65 = scmp.ne.s32.totalorder %s53, %s54
      %p66 = scmp.eq.s32.totalorder %s23, 1
      %p67 = por %p65, %p66
      %p69 = scmp.ne.s32.totalorder %s54, %s68
      %p70 = scmp.eq.s32.totalorder %s23, 0
      %p71 = por %p69, %p70
      %s73 = sadd.s32 %s72, 1
      %p76 = scmp.eq.s32.totalorder %s17, 1
      %p77 = scmp.ne.s32.totalorder %s72, %s74
      %p78 = scmp.eq.s32.totalorder %s17, 0
      %p79 = por %p77, %p78
      %p80 = scmp.ne.s32.totalorder %s72, %s74
      %p81 = scmp.eq.s32.totalorder %s22, 1
      %p82 = por %p80, %p81
      %p83 = scmp.ne.s32.totalorder %s74, %s75
      %p84 = scmp.eq.s32.totalorder %s22, 0
      %p85 = por %p83, %p84
      %p86 = scmp.ne.s32.totalorder %s74, %s75
      %p87 = scmp.eq.s32.totalorder %s23, 1
      %p88 = por %p86, %p87
      %p90 = scmp.ne.s32.totalorder %s75, %s89
      %p91 = scmp.eq.s32.totalorder %s23, 0
      %p92 = por %p90, %p91
      %s94 = sadd.s32 %s93, 1
      %p97 = scmp.eq.s32.totalorder %s17, 1
      %p98 = scmp.ne.s32.totalorder %s93, %s95
      %p99 = scmp.eq.s32.totalorder %s17, 0
      %p100 = por %p98, %p99
      %p101 = scmp.ne.s32.totalorder %s93, %s95
      %p102 = scmp.eq.s32.totalorder %s22, 1
      %p103 = por %p101, %p102
      %p104 = scmp.ne.s32.totalorder %s95, %s96
      %p105 = scmp.eq.s32.totalorder %s22, 0
      %p106 = por %p104, %p105
      %p107 = scmp.ne.s32.totalorder %s95, %s96
      %p108 = scmp.eq.s32.totalorder %s23, 1
      %p109 = por %p107, %p108
      %p111 = scmp.ne.s32.totalorder %s96, %s110
      %p112 = scmp.eq.s32.totalorder %s23, 0
      %p113 = por %p111, %p112
      %s114 = ssub.s32 %s17, %s24
      %p115 = scmp.eq.s32.totalorder %s114, 0
      %s117 = sadd.s32 %s116, 1
      %s118 = scalar_select %p115, %s116, %s117
      %p121 = pneg %p115
      %p122 = scmp.eq.s32.totalorder %s17, 1
      %p123 = por %p121, %p122
      %p124 = scmp.ne.s32.totalorder %s116, %s119
      %p125 = scmp.eq.s32.totalorder %s17, 0
      %p126 = por %p124, %p125
      %p127 = scmp.ne.s32.totalorder %s116, %s119
      %p128 = scmp.eq.s32.totalorder %s22, 1
      %p129 = por %p127, %p128
      %p130 = scmp.ne.s32.totalorder %s119, %s120
      %p131 = scmp.eq.s32.totalorder %s22, 0
      %p132 = por %p130, %p131
      %p133 = scmp.ne.s32.totalorder %s119, %s120
      %p134 = scmp.eq.s32.totalorder %s23, 1
      %p135 = por %p133, %p134
      %p137 = scmp.ne.s32.totalorder %s120, %s136
      %p138 = scmp.eq.s32.totalorder %s23, 0
      %p139 = por %p137, %p138
      %p140 = scmp.le.s32.totalorder 1, %s17
      %p141 = scmp.lt.s32.totalorder %s17, 3
      %p142 = pnand %p140, %p141
      %p143 = pneg %p142
      // Predicated region
      $region9: #{attention_forward.1} parent=5 // pred_check
        _
      $region10: #{attention_forward.1} parent=5 // pred_check_branch
        %145 = sbr.rel (%p142) target = $region12
      $region11: #{attention_forward.1} parent=5 // pred_region
        %s146 = ssub.s32 %s17, 1
        // Predicated region
        $region13: #{attention_forward.1} parent=11 // pred_check
          %p147 = pneg %p64
        $region14: #{attention_forward.1} parent=11 // pred_check_branch
          %149 = sbr.rel (%p147) target = $region16
        $region15: #{attention_forward.1} parent=11 // pred_region
          %s151 = ssub.s32 6144, 6144
          %152 = vsyncadd [#allocation6], %s151
          %s153 = sshll.u32 [#allocation5], 4
          %s154 = int_to_ptr.vmem [resolvable:$true] %s153
          %159 = dma.hbm_to_vmem [thread:$0]  %s1, 6144, %s154, [#allocation6], 384, 384, 24
        $region16: #{attention_forward.1} parent=11 // pred_fallthru
          _
        // Predicated region
        $region17: #{attention_forward.1} parent=11 // pred_check
          %p160 = pneg %p85
        $region18: #{attention_forward.1} parent=11 // pred_check_branch
          %162 = sbr.rel (%p160) target = $region20
        $region19: #{attention_forward.1} parent=11 // pred_region
          %s164 = ssub.s32 2048, 2048
          %165 = vsyncadd [#allocation6], %s164
          %s166 = sshll.u32 [#allocation7], 4
          %s167 = int_to_ptr.vmem [resolvable:$true] %s166
          %172 = dma.hbm_to_vmem [thread:$0]  %s2, 2048, %s167, [#allocation6], 128, 128, 8
        $region20: #{attention_forward.1} parent=11 // pred_fallthru
          _
        // Predicated region
        $region21: #{attention_forward.1} parent=11 // pred_check
          %p173 = pneg %p106
        $region22: #{attention_forward.1} parent=11 // pred_check_branch
          %175 = sbr.rel (%p173) target = $region24
        $region23: #{attention_forward.1} parent=11 // pred_region
          _
        $region24: #{attention_forward.1} parent=11 // pred_fallthru
          _
      $region12: #{attention_forward.1} parent=5 // pred_fallthru
        _
      %p176 = scmp.lt.s32.totalorder %s17, 2
      // Predicated region
      $region25: #{attention_forward.1} parent=5 // pred_check
        %p177 = pneg %p176
      $region26: #{attention_forward.1} parent=5 // pred_check_branch
        %179 = sbr.rel (%p177) target = $region28
      $region27: #{attention_forward.1} parent=5 // pred_region
        // Predicated region
        $region29: #{attention_forward.1} parent=27 // pred_check
          %p180 = pneg %p37
        $region30: #{attention_forward.1} parent=27 // pred_check_branch
          %182 = sbr.rel (%p180) target = $region32
        $region31: #{attention_forward.1} parent=27 // pred_region
          %s183 = sand.u32 %s27, 1
          %s184 = scalar_lea.sflag [#allocation3], %s183
          %s185 = sand.u32 %s27, 1
          %s186 = smul.addr %s185, 128
          %s187 = scalar_lea.vmem [#allocation2], %s186
          %s189 = ssub.s32 2048, 2048
          %190 = vsyncadd %s184, %s189
          %s191 = smul.addr %s17, 16
          %s192 = smul.addr %s191, 128
          %s193 = scalar_lea.hbm %s0, %s192
          %s194 = sshll.u32 %s187, 4
          %s195 = int_to_ptr.vmem [resolvable:$true] %s194
          %200 = dma.hbm_to_vmem [thread:$0]  %s193, 2048, %s195, %s184, 128, 128, 8
        $region32: #{attention_forward.1} parent=27 // pred_fallthru
          _
      $region28: #{attention_forward.1} parent=5 // pred_fallthru
        _
      %p201 = scmp.le.s32.totalorder 1, %s17
      %p202 = scmp.lt.s32.totalorder %s17, 3
      %p203 = pnand %p201, %p202
      %p204 = pneg %p203
      // Predicated region
      $region33: #{attention_forward.1} parent=5 // pred_check
        _
      $region34: #{attention_forward.1} parent=5 // pred_check_branch
        %206 = sbr.rel (%p203) target = $region36
      $region35: #{attention_forward.1} parent=5 // pred_region
        %s207 = ssub.s32 %s17, 1
        %s208 = sand.u32 %s30, 1
        %s209 = scalar_lea.sflag [#allocation3], %s208
        %s210 = sand.u32 %s30, 1
        %s211 = smul.addr %s210, 128
        %s212 = scalar_lea.vmem [#allocation2], %s211
        // Predicated region
        $region37: #{attention_forward.1} parent=35 // pred_check
          %p213 = pneg %p43
        $region38: #{attention_forward.1} parent=35 // pred_check_branch
          %215 = sbr.rel (%p213) target = $region40
        $region39: #{attention_forward.1} parent=35 // pred_region
          %216 = dma.done %s209, 2048
        $region40: #{attention_forward.1} parent=35 // pred_fallthru
          _
        // Predicated region
        $region41: #{attention_forward.1} parent=35 // pred_check
          %p217 = pneg %p64
        $region42: #{attention_forward.1} parent=35 // pred_check_branch
          %219 = sbr.rel (%p217) target = $region44
        $region43: #{attention_forward.1} parent=35 // pred_region
          %220 = dma.done [#allocation6], 6144
        $region44: #{attention_forward.1} parent=35 // pred_fallthru
          _
        // Predicated region
        $region45: #{attention_forward.1} parent=35 // pred_check
          %p221 = pneg %p85
        $region46: #{attention_forward.1} parent=35 // pred_check_branch
          %223 = sbr.rel (%p221) target = $region48
        $region47: #{attention_forward.1} parent=35 // pred_region
          %224 = dma.done [#allocation6], 2048
        $region48: #{attention_forward.1} parent=35 // pred_fallthru
          _
        %s225 = sand.u32 %s30, 1
        %s226 = scalar_lea.sflag [#allocation3], %s225
        %s227 = sand.u32 %s30, 1
        %s228 = smul.addr %s227, 128
        %s229 = scalar_lea.vmem [#allocation2], %s228
        %p230 = pneg %p43
        %p231 = pneg %p40
        %p232 = pneg %p64
        %p233 = pneg %p61
        %p234 = pneg %p85
        %p235 = pneg %p82
        %p236 = pneg %p106
        %p237 = pneg %p103
        %p238 = pneg %p132
        %p239 = pneg %p129
        %s240 = sand.u32 %s119, 1
        %s241 = scalar_lea.sflag [#allocation4], %s240
        %s242 = sand.u32 %s119, 1
        %s243 = smul.addr %s242, 128
        %s244 = scalar_lea.vmem [#allocation8], %s243
        %v245 = vld [vmem:[%s212] sm:$0xff]
        %v246 = vld [vmem:[%s212 + $0x8] sm:$0xff]
        %v247 = vld [vmem:[%s212 + $0x10] sm:$0xff]
        %v248 = vld [vmem:[%s212 + $0x18] sm:$0xff]
        %v249 = vld [vmem:[%s212 + $0x20] sm:$0xff]
        %v250 = vld [vmem:[%s212 + $0x28] sm:$0xff]
        %v251 = vld [vmem:[%s212 + $0x30] sm:$0xff]
        %v252 = vld [vmem:[%s212 + $0x38] sm:$0xff]
        %v253 = vld [vmem:[%s212 + $0x40] sm:$0xff]
        %v254 = vld [vmem:[%s212 + $0x48] sm:$0xff]
        %v255 = vld [vmem:[%s212 + $0x50] sm:$0xff]
        %v256 = vld [vmem:[%s212 + $0x58] sm:$0xff]
        %v257 = vld [vmem:[%s212 + $0x60] sm:$0xff]
        %v258 = vld [vmem:[%s212 + $0x68] sm:$0xff]
        %v259 = vld [vmem:[%s212 + $0x70] sm:$0xff]
        %v260 = vld [vmem:[%s212 + $0x78] sm:$0xff]
        %v261 = vld [vmem:[#allocation5] sm:$0xff]
        %v262 = vld [vmem:[#allocation5 + $0x8] sm:$0xff]
        %v263 = vld [vmem:[#allocation5 + $0x10] sm:$0xff]
        %v264 = vld [vmem:[#allocation5 + $0x18] sm:$0xff]
        %v265 = vld [vmem:[#allocation5 + $0x20] sm:$0xff]
        %v266 = vld [vmem:[#allocation5 + $0x28] sm:$0xff]
        %v267 = vld [vmem:[#allocation5 + $0x30] sm:$0xff]
        %v268 = vld [vmem:[#allocation5 + $0x38] sm:$0xff]
        %v269 = vld [vmem:[#allocation5 + $0x40] sm:$0xff]
        %v270 = vld [vmem:[#allocation5 + $0x48] sm:$0xff]
        %v271 = vld [vmem:[#allocation5 + $0x50] sm:$0xff]
        %v272 = vld [vmem:[#allocation5 + $0x58] sm:$0xff]
        %v273 = vld [vmem:[#allocation5 + $0x60] sm:$0xff]
        %v274 = vld [vmem:[#allocation5 + $0x68] sm:$0xff]
        %v275 = vld [vmem:[#allocation5 + $0x70] sm:$0xff]
        %v276 = vld [vmem:[#allocation5 + $0x78] sm:$0xff]
        %v277 = vld [vmem:[#allocation5 + $0x80] sm:$0xff]
        %v278 = vld [vmem:[#allocation5 + $0x88] sm:$0xff]
        %v279 = vld [vmem:[#allocation5 + $0x90] sm:$0xff]
        %v280 = vld [vmem:[#allocation5 + $0x98] sm:$0xff]
        %v281 = vld [vmem:[#allocation5 + $0xa0] sm:$0xff]
        %v282 = vld [vmem:[#allocation5 + $0xa8] sm:$0xff]
        %v283 = vld [vmem:[#allocation5 + $0xb0] sm:$0xff]
        %v284 = vld [vmem:[#allocation5 + $0xb8] sm:$0xff]
        %v285 = vld [vmem:[#allocation5 + $0xc0] sm:$0xff]
        %v286 = vld [vmem:[#allocation5 + $0xc8] sm:$0xff]
        %v287 = vld [vmem:[#allocation5 + $0xd0] sm:$0xff]
        %v288 = vld [vmem:[#allocation5 + $0xd8] sm:$0xff]
        %v289 = vld [vmem:[#allocation5 + $0xe0] sm:$0xff]
        %v290 = vld [vmem:[#allocation5 + $0xe8] sm:$0xff]
        %v291 = vld [vmem:[#allocation5 + $0xf0] sm:$0xff]
        %v292 = vld [vmem:[#allocation5 + $0xf8] sm:$0xff]
        %v293 = vld [vmem:[#allocation5 + $0x100] sm:$0xff]
        %v294 = vld [vmem:[#allocation5 + $0x108] sm:$0xff]
        %v295 = vld [vmem:[#allocation5 + $0x110] sm:$0xff]
        %v296 = vld [vmem:[#allocation5 + $0x118] sm:$0xff]
        %v297 = vld [vmem:[#allocation5 + $0x120] sm:$0xff]
        %v298 = vld [vmem:[#allocation5 + $0x128] sm:$0xff]
        %v299 = vld [vmem:[#allocation5 + $0x130] sm:$0xff]
        %v300 = vld [vmem:[#allocation5 + $0x138] sm:$0xff]
        %v301 = vld [vmem:[#allocation5 + $0x140] sm:$0xff]
        %v302 = vld [vmem:[#allocation5 + $0x148] sm:$0xff]
        %v303 = vld [vmem:[#allocation5 + $0x150] sm:$0xff]
        %v304 = vld [vmem:[#allocation5 + $0x158] sm:$0xff]
        %v305 = vld [vmem:[#allocation5 + $0x160] sm:$0xff]
        %v306 = vld [vmem:[#allocation5 + $0x168] sm:$0xff]
        %v307 = vld [vmem:[#allocation5 + $0x170] sm:$0xff]
        %v308 = vld [vmem:[#allocation5 + $0x178] sm:$0xff]
        %309 = vmatprep.subr.mxu0 %v307
        %310 = vmatpush1.msra.mxu0 %v306
        %311 = vmatprep.subr.mxu0 %v304
        %312 = vmatpush1.msra.mxu0 %v303
        %313 = vmatprep.subr.mxu0 %v301
        %314 = vmatpush1.msra.mxu0 %v300
        %315 = vmatprep.subr.mxu0 %v298
        %316 = vmatpush1.msra.mxu0 %v297
        %317 = vmatprep.subr.mxu0 %v295
        %318 = vmatpush1.msra.mxu0 %v294
        %319 = vmatprep.subr.mxu0 %v292
        %320 = vmatpush1.msra.mxu0 %v291
        %321 = vmatprep.subr.mxu0 %v289
        %322 = vmatpush1.msra.mxu0 %v288
        %323 = vmatprep.subr.mxu0 %v286
        %324 = vmatpush1.msra.mxu0 %v285
        %325 = vmatprep.subr.mxu0 %v283
        %326 = vmatpush1.msra.mxu0 %v282
        %327 = vmatprep.subr.mxu0 %v280
        %328 = vmatpush1.msra.mxu0 %v279
        %329 = vmatprep.subr.mxu0 %v277
        %330 = vmatpush1.msra.mxu0 %v276
        %331 = vmatprep.subr.mxu0 %v274
        %332 = vmatpush1.msra.mxu0 %v273
        %333 = vmatprep.subr.mxu0 %v271
        %334 = vmatpush1.msra.mxu0 %v270
        %335 = vmatprep.subr.mxu0 %v268
        %336 = vmatpush1.msra.mxu0 %v267
        %337 = vmatprep.subr.mxu0 %v265
        %338 = vmatpush1.msra.mxu0 %v264
        %339 = vmatprep.subr.mxu0 %v262
        %340 = vmatpush1.msra.mxu0 %v261
        %341 = vmatprep.subr.mxu0 0.0
        %342 = vmatpush2.msra.mxu0 0.0
        %343 = vmatprep.subr.mxu0 0.0
        %344 = vmatpush2.msra.mxu0 0.0
        %345 = vmatprep.subr.mxu0 0.0
        %346 = vmatpush2.msra.mxu0 0.0
        %347 = vmatprep.subr.mxu0 0.0
        %348 = vmatpush2.msra.mxu0 0.0
        %349 = vmatprep.subr.mxu0 0.0
        %350 = vmatpush2.msra.mxu0 0.0
        %351 = vmatprep.subr.mxu0 0.0
        %352 = vmatpush2.msra.mxu0 0.0
        %353 = vmatprep.subr.mxu0 0.0
        %354 = vmatpush2.msra.mxu0 0.0
        %355 = vmatprep.subr.mxu0 0.0
        %356 = vmatpush2.msra.mxu0 0.0
        %357 = vmatprep.subr.mxu0 0.0
        %358 = vmatpush2.msra.mxu0 0.0
        %359 = vmatprep.subr.mxu0 0.0
        %360 = vmatpush2.msra.mxu0 0.0
        %361 = vmatprep.subr.mxu0 0.0
        %362 = vmatpush2.msra.mxu0 0.0
        %363 = vmatprep.subr.mxu0 0.0
        %364 = vmatpush2.msra.mxu0 0.0
        %365 = vmatprep.subr.mxu0 0.0
        %366 = vmatpush2.msra.mxu0 0.0
        %367 = vmatprep.subr.mxu0 0.0
        %368 = vmatpush2.msra.mxu0 0.0
        %369 = vmatprep.subr.mxu0 0.0
        %370 = vmatpush2.msra.mxu0 0.0
        %371 = vmatprep.subr.mxu0 0.0
        %372 = vmatpush2.msra.mxu0 0.0
        %373 = vmatprep.mubr.f32.mxu0 0.0
        %374 = vmatmul.mubr.f32.gmra.mxu0 %v245
        %v375 = vpop.f32.mrf.mxu0
        %v376 = vadd.f32 0.0, %v375
        %v377 = vpop.f32.mrf.mxu0
        %v378 = vadd.f32 0.0, %v377
        %379 = vmatprep.mubr.f32.mxu0 0.0
        %380 = vmatmul.mubr.f32.gmra.mxu0 %v246
        %v381 = vpop.f32.mrf.mxu0
        %v382 = vadd.f32 0.0, %v381
        %v383 = vpop.f32.mrf.mxu0
        %v384 = vadd.f32 0.0, %v383
        %385 = vmatprep.mubr.f32.mxu0 0.0
        %386 = vmatmul.mubr.f32.gmra.mxu0 %v247
        %v387 = vpop.f32.mrf.mxu0
        %v388 = vadd.f32 0.0, %v387
        %v389 = vpop.f32.mrf.mxu0
        %v390 = vadd.f32 0.0, %v389
        %391 = vmatprep.mubr.f32.mxu0 0.0
        %392 = vmatmul.mubr.f32.gmra.mxu0 %v248
        %v393 = vpop.f32.mrf.mxu0
        %v394 = vadd.f32 0.0, %v393
        %v395 = vpop.f32.mrf.mxu0
        %v396 = vadd.f32 0.0, %v395
        %397 = vmatprep.mubr.f32.mxu0 0.0
        %398 = vmatmul.mubr.f32.gmra.mxu0 %v249
        %v399 = vpop.f32.mrf.mxu0
        %v400 = vadd.f32 0.0, %v399
        %v401 = vpop.f32.mrf.mxu0
        %v402 = vadd.f32 0.0, %v401
        %403 = vmatprep.mubr.f32.mxu0 0.0
        %404 = vmatmul.mubr.f32.gmra.mxu0 %v250
        %v405 = vpop.f32.mrf.mxu0
        %v406 = vadd.f32 0.0, %v405
        %v407 = vpop.f32.mrf.mxu0
        %v408 = vadd.f32 0.0, %v407
        %409 = vmatprep.mubr.f32.mxu0 0.0
        %410 = vmatmul.mubr.f32.gmra.mxu0 %v251
        %v411 = vpop.f32.mrf.mxu0
        %v412 = vadd.f32 0.0, %v411
        %v413 = vpop.f32.mrf.mxu0
        %v414 = vadd.f32 0.0, %v413
        %415 = vmatprep.mubr.f32.mxu0 0.0
        %416 = vmatmul.mubr.f32.gmra.mxu0 %v252
        %v417 = vpop.f32.mrf.mxu0
        %v418 = vadd.f32 0.0, %v417
        %v419 = vpop.f32.mrf.mxu0
        %v420 = vadd.f32 0.0, %v419
        %421 = vmatprep.mubr.f32.mxu0 0.0
        %422 = vmatmul.mubr.f32.gmra.mxu0 %v253
        %v423 = vpop.f32.mrf.mxu0
        %v424 = vadd.f32 0.0, %v423
        %v425 = vpop.f32.mrf.mxu0
        %v426 = vadd.f32 0.0, %v425
        %427 = vmatprep.mubr.f32.mxu0 0.0
        %428 = vmatmul.mubr.f32.gmra.mxu0 %v254
        %v429 = vpop.f32.mrf.mxu0
        %v430 = vadd.f32 0.0, %v429
        %v431 = vpop.f32.mrf.mxu0
        %v432 = vadd.f32 0.0, %v431
        %433 = vmatprep.mubr.f32.mxu0 0.0
        %434 = vmatmul.mubr.f32.gmra.mxu0 %v255
        %v435 = vpop.f32.mrf.mxu0
        %v436 = vadd.f32 0.0, %v435
        %v437 = vpop.f32.mrf.mxu0
        %v438 = vadd.f32 0.0, %v437
        %439 = vmatprep.mubr.f32.mxu0 0.0
        %440 = vmatmul.mubr.f32.gmra.mxu0 %v256
        %v441 = vpop.f32.mrf.mxu0
        %v442 = vadd.f32 0.0, %v441
        %v443 = vpop.f32.mrf.mxu0
        %v444 = vadd.f32 0.0, %v443
        %445 = vmatprep.mubr.f32.mxu0 0.0
        %446 = vmatmul.mubr.f32.gmra.mxu0 %v257
        %v447 = vpop.f32.mrf.mxu0
        %v448 = vadd.f32 0.0, %v447
        %v449 = vpop.f32.mrf.mxu0
        %v450 = vadd.f32 0.0, %v449
        %451 = vmatprep.mubr.f32.mxu0 0.0
        %452 = vmatmul.mubr.f32.gmra.mxu0 %v258
        %v453 = vpop.f32.mrf.mxu0
        %v454 = vadd.f32 0.0, %v453
        %v455 = vpop.f32.mrf.mxu0
        %v456 = vadd.f32 0.0, %v455
        %457 = vmatprep.mubr.f32.mxu0 0.0
        %458 = vmatmul.mubr.f32.gmra.mxu0 %v259
        %v459 = vpop.f32.mrf.mxu0
        %v460 = vadd.f32 0.0, %v459
        %v461 = vpop.f32.mrf.mxu0
        %v462 = vadd.f32 0.0, %v461
        %463 = vmatprep.mubr.f32.mxu0 0.0
        %464 = vmatmul.mubr.f32.gmra.mxu0 %v260
        %v465 = vpop.f32.mrf.mxu0
        %v466 = vadd.f32 0.0, %v465
        %v467 = vpop.f32.mrf.mxu0
        %v468 = vadd.f32 0.0, %v467
        %469 = vdwg.mxu0
        %470 = vmatprep.subr.mxu0 0.0
        %471 = vmatpush1.msra.mxu0 %v308
        %472 = vmatprep.subr.mxu0 0.0
        %473 = vmatpush1.msra.mxu0 %v305
        %474 = vmatprep.subr.mxu0 0.0
        %475 = vmatpush1.msra.mxu0 %v302
        %476 = vmatprep.subr.mxu0 0.0
        %477 = vmatpush1.msra.mxu0 %v299
        %478 = vmatprep.subr.mxu0 0.0
        %479 = vmatpush1.msra.mxu0 %v296
        %480 = vmatprep.subr.mxu0 0.0
        %481 = vmatpush1.msra.mxu0 %v293
        %482 = vmatprep.subr.mxu0 0.0
        %483 = vmatpush1.msra.mxu0 %v290
        %484 = vmatprep.subr.mxu0 0.0
        %485 = vmatpush1.msra.mxu0 %v287
        %486 = vmatprep.subr.mxu0 0.0
        %487 = vmatpush1.msra.mxu0 %v284
        %488 = vmatprep.subr.mxu0 0.0
        %489 = vmatpush1.msra.mxu0 %v281
        %490 = vmatprep.subr.mxu0 0.0
        %491 = vmatpush1.msra.mxu0 %v278
        %492 = vmatprep.subr.mxu0 0.0
        %493 = vmatpush1.msra.mxu0 %v275
        %494 = vmatprep.subr.mxu0 0.0
        %495 = vmatpush1.msra.mxu0 %v272
        %496 = vmatprep.subr.mxu0 0.0
        %497 = vmatpush1.msra.mxu0 %v269
        %498 = vmatprep.subr.mxu0 0.0
        %499 = vmatpush1.msra.mxu0 %v266
        %500 = vmatprep.subr.mxu0 0.0
        %501 = vmatpush1.msra.mxu0 %v263
        %502 = vmatprep.subr.mxu0 0.0
        %503 = vmatpush2.msra.mxu0 0.0
        %504 = vmatprep.subr.mxu0 0.0
        %505 = vmatpush2.msra.mxu0 0.0
        %506 = vmatprep.subr.mxu0 0.0
        %507 = vmatpush2.msra.mxu0 0.0
        %508 = vmatprep.subr.mxu0 0.0
        %509 = vmatpush2.msra.mxu0 0.0
        %510 = vmatprep.subr.mxu0 0.0
        %511 = vmatpush2.msra.mxu0 0.0
        %512 = vmatprep.subr.mxu0 0.0
        %513 = vmatpush2.msra.mxu0 0.0
        %514 = vmatprep.subr.mxu0 0.0
        %515 = vmatpush2.msra.mxu0 0.0
        %516 = vmatprep.subr.mxu0 0.0
        %517 = vmatpush2.msra.mxu0 0.0
        %518 = vmatprep.subr.mxu0 0.0
        %519 = vmatpush2.msra.mxu0 0.0
        %520 = vmatprep.subr.mxu0 0.0
        %521 = vmatpush2.msra.mxu0 0.0
        %522 = vmatprep.subr.mxu0 0.0
        %523 = vmatpush2.msra.mxu0 0.0
        %524 = vmatprep.subr.mxu0 0.0
        %525 = vmatpush2.msra.mxu0 0.0
        %526 = vmatprep.subr.mxu0 0.0
        %527 = vmatpush2.msra.mxu0 0.0
        %528 = vmatprep.subr.mxu0 0.0
        %529 = vmatpush2.msra.mxu0 0.0
        %530 = vmatprep.subr.mxu0 0.0
        %531 = vmatpush2.msra.mxu0 0.0
        %532 = vmatprep.subr.mxu0 0.0
        %533 = vmatpush2.msra.mxu0 0.0
        %534 = vmatprep.mubr.f32.mxu0 0.0
        %535 = vmatmul.mubr.f32.gmra.mxu0 %v245
        %v536 = vpop.f32.mrf.mxu0
        %v537 = vadd.f32 0.0, %v536
        %v538 = vpop.f32.mrf.mxu0
        %539 = vmatprep.mubr.f32.mxu0 0.0
        %540 = vmatmul.mubr.f32.gmra.mxu0 %v246
        %v541 = vpop.f32.mrf.mxu0
        %v542 = vadd.f32 0.0, %v541
        %v543 = vpop.f32.mrf.mxu0
        %544 = vmatprep.mubr.f32.mxu0 0.0
        %545 = vmatmul.mubr.f32.gmra.mxu0 %v247
        %v546 = vpop.f32.mrf.mxu0
        %v547 = vadd.f32 0.0, %v546
        %v548 = vpop.f32.mrf.mxu0
        %549 = vmatprep.mubr.f32.mxu0 0.0
        %550 = vmatmul.mubr.f32.gmra.mxu0 %v248
        %v551 = vpop.f32.mrf.mxu0
        %v552 = vadd.f32 0.0, %v551
        %v553 = vpop.f32.mrf.mxu0
        %554 = vmatprep.mubr.f32.mxu0 0.0
        %555 = vmatmul.mubr.f32.gmra.mxu0 %v249
        %v556 = vpop.f32.mrf.mxu0
        %v557 = vadd.f32 0.0, %v556
        %v558 = vpop.f32.mrf.mxu0
        %559 = vmatprep.mubr.f32.mxu0 0.0
        %560 = vmatmul.mubr.f32.gmra.mxu0 %v250
        %v561 = vpop.f32.mrf.mxu0
        %v562 = vadd.f32 0.0, %v561
        %v563 = vpop.f32.mrf.mxu0
        %564 = vmatprep.mubr.f32.mxu0 0.0
        %565 = vmatmul.mubr.f32.gmra.mxu0 %v251
        %v566 = vpop.f32.mrf.mxu0
        %v567 = vadd.f32 0.0, %v566
        %v568 = vpop.f32.mrf.mxu0
        %569 = vmatprep.mubr.f32.mxu0 0.0
        %570 = vmatmul.mubr.f32.gmra.mxu0 %v252
        %v571 = vpop.f32.mrf.mxu0
        %v572 = vadd.f32 0.0, %v571
        %v573 = vpop.f32.mrf.mxu0
        %574 = vmatprep.mubr.f32.mxu0 0.0
        %575 = vmatmul.mubr.f32.gmra.mxu0 %v253
        %v576 = vpop.f32.mrf.mxu0
        %v577 = vadd.f32 0.0, %v576
        %v578 = vpop.f32.mrf.mxu0
        %579 = vmatprep.mubr.f32.mxu0 0.0
        %580 = vmatmul.mubr.f32.gmra.mxu0 %v254
        %v581 = vpop.f32.mrf.mxu0
        %v582 = vadd.f32 0.0, %v581
        %v583 = vpop.f32.mrf.mxu0
        %584 = vmatprep.mubr.f32.mxu0 0.0
        %585 = vmatmul.mubr.f32.gmra.mxu0 %v255
        %v586 = vpop.f32.mrf.mxu0
        %v587 = vadd.f32 0.0, %v586
        %v588 = vpop.f32.mrf.mxu0
        %589 = vmatprep.mubr.f32.mxu0 0.0
        %590 = vmatmul.mubr.f32.gmra.mxu0 %v256
        %v591 = vpop.f32.mrf.mxu0
        %v592 = vadd.f32 0.0, %v591
        %v593 = vpop.f32.mrf.mxu0
        %594 = vmatprep.mubr.f32.mxu0 0.0
        %595 = vmatmul.mubr.f32.gmra.mxu0 %v257
        %v596 = vpop.f32.mrf.mxu0
        %v597 = vadd.f32 0.0, %v596
        %v598 = vpop.f32.mrf.mxu0
        %599 = vmatprep.mubr.f32.mxu0 0.0
        %600 = vmatmul.mubr.f32.gmra.mxu0 %v258
        %v601 = vpop.f32.mrf.mxu0
        %v602 = vadd.f32 0.0, %v601
        %v603 = vpop.f32.mrf.mxu0
        %604 = vmatprep.mubr.f32.mxu0 0.0
        %605 = vmatmul.mubr.f32.gmra.mxu0 %v259
        %v606 = vpop.f32.mrf.mxu0
        %v607 = vadd.f32 0.0, %v606
        %v608 = vpop.f32.mrf.mxu0
        %609 = vmatprep.mubr.f32.mxu0 0.0
        %610 = vmatmul.mubr.f32.gmra.mxu0 %v260
        %v611 = vpop.f32.mrf.mxu0
        %v612 = vadd.f32 0.0, %v611
        %v613 = vpop.f32.mrf.mxu0
        %614 = vdwg.mxu0
        %vm615 = vcmask 130048
        %v617 = vsel %vm615, %v376, 0
        %v620 = vsel %vm615, %v382, 0
        %v623 = vsel %vm615, %v388, 0
        %v626 = vsel %vm615, %v394, 0
        %v629 = vsel %vm615, %v400, 0
        %v632 = vsel %vm615, %v406, 0
        %v635 = vsel %vm615, %v412, 0
        %v638 = vsel %vm615, %v418, 0
        %v641 = vsel %vm615, %v424, 0
        %v644 = vsel %vm615, %v430, 0
        %v647 = vsel %vm615, %v436, 0
        %v650 = vsel %vm615, %v442, 0
        %v653 = vsel %vm615, %v448, 0
        %v656 = vsel %vm615, %v454, 0
        %v659 = vsel %vm615, %v460, 0
        %v662 = vsel %vm615, %v466, 0
        %v665 = vsel %vm615, %v378, 0
        %v668 = vsel %vm615, %v384, 0
        %v671 = vsel %vm615, %v390, 0
        %v674 = vsel %vm615, %v396, 0
        %v677 = vsel %vm615, %v402, 0
        %v680 = vsel %vm615, %v408, 0
        %v683 = vsel %vm615, %v414, 0
        %v686 = vsel %vm615, %v420, 0
        %v689 = vsel %vm615, %v426, 0
        %v692 = vsel %vm615, %v432, 0
        %v695 = vsel %vm615, %v438, 0
        %v698 = vsel %vm615, %v444, 0
        %v701 = vsel %vm615, %v450, 0
        %v704 = vsel %vm615, %v456, 0
        %v707 = vsel %vm615, %v462, 0
        %v710 = vsel %vm615, %v468, 0
        %712 = vmatprep.subr.mxu0 0.0
        %713 = vmatpush1.xpose.msra.mxu0 %v710
        %714 = vmatprep.subr.mxu0 0.0
        %715 = vmatpush1.xpose.msra.mxu0 %v707
        %716 = vmatprep.subr.mxu0 0.0
        %717 = vmatpush1.xpose.msra.mxu0 %v704
        %718 = vmatprep.subr.mxu0 0.0
        %719 = vmatpush1.xpose.msra.mxu0 %v701
        %720 = vmatprep.subr.mxu0 0.0
        %721 = vmatpush1.xpose.msra.mxu0 %v698
        %722 = vmatprep.subr.mxu0 0.0
        %723 = vmatpush1.xpose.msra.mxu0 %v695
        %724 = vmatprep.subr.mxu0 0.0
        %725 = vmatpush1.xpose.msra.mxu0 %v692
        %726 = vmatprep.subr.mxu0 0.0
        %727 = vmatpush1.xpose.msra.mxu0 %v689
        %728 = vmatprep.subr.mxu0 0.0
        %729 = vmatpush1.xpose.msra.mxu0 %v686
        %730 = vmatprep.subr.mxu0 0.0
        %731 = vmatpush1.xpose.msra.mxu0 %v683
        %732 = vmatprep.subr.mxu0 0.0
        %733 = vmatpush1.xpose.msra.mxu0 %v680
        %734 = vmatprep.subr.mxu0 0.0
        %735 = vmatpush1.xpose.msra.mxu0 %v677
        %736 = vmatprep.subr.mxu0 0.0
        %737 = vmatpush1.xpose.msra.mxu0 %v674
        %738 = vmatprep.subr.mxu0 0.0
        %739 = vmatpush1.xpose.msra.mxu0 %v671
        %740 = vmatprep.subr.mxu0 0.0
        %741 = vmatpush1.xpose.msra.mxu0 %v668
        %742 = vmatprep.subr.mxu0 0.0
        %743 = vmatpush1.xpose.msra.mxu0 %v665
        %744 = vmatprep.subr.mxu0 0.0
        %745 = vmatpush2.xpose.msra.mxu0 0.0
        %746 = vmatprep.subr.mxu0 0.0
        %747 = vmatpush2.xpose.msra.mxu0 0.0
        %748 = vmatprep.subr.mxu0 0.0
        %749 = vmatpush2.xpose.msra.mxu0 0.0
        %750 = vmatprep.subr.mxu0 0.0
        %751 = vmatpush2.xpose.msra.mxu0 0.0
        %752 = vmatprep.subr.mxu0 0.0
        %753 = vmatpush2.xpose.msra.mxu0 0.0
        %754 = vmatprep.subr.mxu0 0.0
        %755 = vmatpush2.xpose.msra.mxu0 0.0
        %756 = vmatprep.subr.mxu0 0.0
        %757 = vmatpush2.xpose.msra.mxu0 0.0
        %758 = vmatprep.subr.mxu0 0.0
        %759 = vmatpush2.xpose.msra.mxu0 0.0
        %760 = vmatprep.subr.mxu0 0.0
        %761 = vmatpush2.xpose.msra.mxu0 0.0
        %762 = vmatprep.subr.mxu0 0.0
        %763 = vmatpush2.xpose.msra.mxu0 0.0
        %764 = vmatprep.subr.mxu0 0.0
        %765 = vmatpush2.xpose.msra.mxu0 0.0
        %766 = vmatprep.subr.mxu0 0.0
        %767 = vmatpush2.xpose.msra.mxu0 0.0
        %768 = vmatprep.subr.mxu0 0.0
        %769 = vmatpush2.xpose.msra.mxu0 0.0
        %770 = vmatprep.subr.mxu0 0.0
        %771 = vmatpush2.xpose.msra.mxu0 0.0
        %772 = vmatprep.subr.mxu0 0.0
        %773 = vmatpush2.xpose.msra.mxu0 0.0
        %774 = vmatprep.subr.mxu0 0.0
        %775 = vmatpush2.xpose.msra.mxu0 0.0
        %776 = vmatprep.mubr.f32.mxu0 0.0
        %777 = vmatmul.mubr.f32.gmra.mxu0 %v617
        %v778 = vpop.f32.mrf.mxu0
        %v779 = vadd.f32 0.0, %v778
        %v780 = vpop.f32.mrf.mxu0
        %781 = vmatprep.mubr.f32.mxu0 0.0
        %782 = vmatmul.mubr.f32.gmra.mxu0 %v620
        %v783 = vpop.f32.mrf.mxu0
        %v784 = vadd.f32 0.0, %v783
        %v785 = vpop.f32.mrf.mxu0
        %786 = vmatprep.mubr.f32.mxu0 0.0
        %787 = vmatmul.mubr.f32.gmra.mxu0 %v623
        %v788 = vpop.f32.mrf.mxu0
        %v789 = vadd.f32 0.0, %v788
        %v790 = vpop.f32.mrf.mxu0
        %791 = vmatprep.mubr.f32.mxu0 0.0
        %792 = vmatmul.mubr.f32.gmra.mxu0 %v626
        %v793 = vpop.f32.mrf.mxu0
        %v794 = vadd.f32 0.0, %v793
        %v795 = vpop.f32.mrf.mxu0
        %796 = vmatprep.mubr.f32.mxu0 0.0
        %797 = vmatmul.mubr.f32.gmra.mxu0 %v629
        %v798 = vpop.f32.mrf.mxu0
        %v799 = vadd.f32 0.0, %v798
        %v800 = vpop.f32.mrf.mxu0
        %801 = vmatprep.mubr.f32.mxu0 0.0
        %802 = vmatmul.mubr.f32.gmra.mxu0 %v632
        %v803 = vpop.f32.mrf.mxu0
        %v804 = vadd.f32 0.0, %v803
        %v805 = vpop.f32.mrf.mxu0
        %806 = vmatprep.mubr.f32.mxu0 0.0
        %807 = vmatmul.mubr.f32.gmra.mxu0 %v635
        %v808 = vpop.f32.mrf.mxu0
        %v809 = vadd.f32 0.0, %v808
        %v810 = vpop.f32.mrf.mxu0
        %811 = vmatprep.mubr.f32.mxu0 0.0
        %812 = vmatmul.mubr.f32.gmra.mxu0 %v638
        %v813 = vpop.f32.mrf.mxu0
        %v814 = vadd.f32 0.0, %v813
        %v815 = vpop.f32.mrf.mxu0
        %816 = vmatprep.mubr.f32.mxu0 0.0
        %817 = vmatmul.mubr.f32.gmra.mxu0 %v641
        %v818 = vpop.f32.mrf.mxu0
        %v819 = vadd.f32 0.0, %v818
        %v820 = vpop.f32.mrf.mxu0
        %821 = vmatprep.mubr.f32.mxu0 0.0
        %822 = vmatmul.mubr.f32.gmra.mxu0 %v644
        %v823 = vpop.f32.mrf.mxu0
        %v824 = vadd.f32 0.0, %v823
        %v825 = vpop.f32.mrf.mxu0
        %826 = vmatprep.mubr.f32.mxu0 0.0
        %827 = vmatmul.mubr.f32.gmra.mxu0 %v647
        %v828 = vpop.f32.mrf.mxu0
        %v829 = vadd.f32 0.0, %v828
        %v830 = vpop.f32.mrf.mxu0
        %831 = vmatprep.mubr.f32.mxu0 0.0
        %832 = vmatmul.mubr.f32.gmra.mxu0 %v650
        %v833 = vpop.f32.mrf.mxu0
        %v834 = vadd.f32 0.0, %v833
        %v835 = vpop.f32.mrf.mxu0
        %836 = vmatprep.mubr.f32.mxu0 0.0
        %837 = vmatmul.mubr.f32.gmra.mxu0 %v653
        %v838 = vpop.f32.mrf.mxu0
        %v839 = vadd.f32 0.0, %v838
        %v840 = vpop.f32.mrf.mxu0
        %841 = vmatprep.mubr.f32.mxu0 0.0
        %842 = vmatmul.mubr.f32.gmra.mxu0 %v656
        %v843 = vpop.f32.mrf.mxu0
        %v844 = vadd.f32 0.0, %v843
        %v845 = vpop.f32.mrf.mxu0
        %846 = vmatprep.mubr.f32.mxu0 0.0
        %847 = vmatmul.mubr.f32.gmra.mxu0 %v659
        %v848 = vpop.f32.mrf.mxu0
        %v849 = vadd.f32 0.0, %v848
        %v850 = vpop.f32.mrf.mxu0
        %851 = vmatprep.mubr.f32.mxu0 0.0
        %852 = vmatmul.mubr.f32.gmra.mxu0 %v662
        %v853 = vpop.f32.mrf.mxu0
        %v854 = vadd.f32 0.0, %v853
        %v855 = vpop.f32.mrf.mxu0
        %856 = vdwg.mxu0
        %v857 = vmul.f32 %v779, 0.25
        %v858 = vmul.f32 %v784, 0.25
        %v859 = vmul.f32 %v789, 0.25
        %v860 = vmul.f32 %v794, 0.25
        %v861 = vmul.f32 %v799, 0.25
        %v862 = vmul.f32 %v804, 0.25
        %v863 = vmul.f32 %v809, 0.25
        %v864 = vmul.f32 %v814, 0.25
        %v865 = vmul.f32 %v819, 0.25
        %v866 = vmul.f32 %v824, 0.25
        %v867 = vmul.f32 %v829, 0.25
        %v868 = vmul.f32 %v834, 0.25
        %v869 = vmul.f32 %v839, 0.25
        %v870 = vmul.f32 %v844, 0.25
        %v871 = vmul.f32 %v849, 0.25
        %v872 = vmul.f32 %v854, 0.25
        %873 = vmax.xlane.f32.xlu0 %v857
        %v874 = vpop.xlane.xlu0 %873
        %875 = vmax.xlane.f32.xlu0 %v858
        %v876 = vpop.xlane.xlu0 %875
        %877 = vmax.xlane.f32.xlu0 %v859
        %v878 = vpop.xlane.xlu0 %877
        %879 = vmax.xlane.f32.xlu0 %v860
        %v880 = vpop.xlane.xlu0 %879
        %881 = vmax.xlane.f32.xlu0 %v861
        %v882 = vpop.xlane.xlu0 %881
        %883 = vmax.xlane.f32.xlu0 %v862
        %v884 = vpop.xlane.xlu0 %883
        %885 = vmax.xlane.f32.xlu0 %v863
        %v886 = vpop.xlane.xlu0 %885
        %887 = vmax.xlane.f32.xlu0 %v864
        %v888 = vpop.xlane.xlu0 %887
        %889 = vmax.xlane.f32.xlu0 %v865
        %v890 = vpop.xlane.xlu0 %889
        %891 = vmax.xlane.f32.xlu0 %v866
        %v892 = vpop.xlane.xlu0 %891
        %893 = vmax.xlane.f32.xlu0 %v867
        %v894 = vpop.xlane.xlu0 %893
        %895 = vmax.xlane.f32.xlu0 %v868
        %v896 = vpop.xlane.xlu0 %895
        %897 = vmax.xlane.f32.xlu0 %v869
        %v898 = vpop.xlane.xlu0 %897
        %899 = vmax.xlane.f32.xlu0 %v870
        %v900 = vpop.xlane.xlu0 %899
        %901 = vmax.xlane.f32.xlu0 %v871
        %v902 = vpop.xlane.xlu0 %901
        %903 = vmax.xlane.f32.xlu0 %v872
        %v904 = vpop.xlane.xlu0 %903
        %v905 = vsub.f32 %v857, %v874
        %v906 = vsub.f32 %v858, %v876
        %v907 = vsub.f32 %v859, %v878
        %v908 = vsub.f32 %v860, %v880
        %v909 = vsub.f32 %v861, %v882
        %v910 = vsub.f32 %v862, %v884
        %v911 = vsub.f32 %v863, %v886
        %v912 = vsub.f32 %v864, %v888
        %v913 = vsub.f32 %v865, %v890
        %v914 = vsub.f32 %v866, %v892
        %v915 = vsub.f32 %v867, %v894
        %v916 = vsub.f32 %v868, %v896
        %v917 = vsub.f32 %v869, %v898
        %v918 = vsub.f32 %v870, %v900
        %v919 = vsub.f32 %v871, %v902
        %v920 = vsub.f32 %v872, %v904
        %v921 = vmul.f32 %v905, 1.442695
        %v922 = vpow.pop %v921
        %v923 = vmul.f32 %v906, 1.442695
        %v924 = vpow.pop %v923
        %v925 = vmul.f32 %v907, 1.442695
        %v926 = vpow.pop %v925
        %v927 = vmul.f32 %v908, 1.442695
        %v928 = vpow.pop %v927
        %v929 = vmul.f32 %v909, 1.442695
        %v930 = vpow.pop %v929
        %v931 = vmul.f32 %v910, 1.442695
        %v932 = vpow.pop %v931
        %v933 = vmul.f32 %v911, 1.442695
        %v934 = vpow.pop %v933
        %v935 = vmul.f32 %v912, 1.442695
        %v936 = vpow.pop %v935
        %v937 = vmul.f32 %v913, 1.442695
        %v938 = vpow.pop %v937
        %v939 = vmul.f32 %v914, 1.442695
        %v940 = vpow.pop %v939
        %v941 = vmul.f32 %v915, 1.442695
        %v942 = vpow.pop %v941
        %v943 = vmul.f32 %v916, 1.442695
        %v944 = vpow.pop %v943
        %v945 = vmul.f32 %v917, 1.442695
        %v946 = vpow.pop %v945
        %v947 = vmul.f32 %v918, 1.442695
        %v948 = vpow.pop %v947
        %v949 = vmul.f32 %v919, 1.442695
        %v950 = vpow.pop %v949
        %v951 = vmul.f32 %v920, 1.442695
        %v952 = vpow.pop %v951
        %953 = vadd.xlane.f32.xlu0 %v922
        %v954 = vpop.xlane.xlu0 %953
        %955 = vadd.xlane.f32.xlu0 %v924
        %v956 = vpop.xlane.xlu0 %955
        %957 = vadd.xlane.f32.xlu0 %v926
        %v958 = vpop.xlane.xlu0 %957
        %959 = vadd.xlane.f32.xlu0 %v928
        %v960 = vpop.xlane.xlu0 %959
        %961 = vadd.xlane.f32.xlu0 %v930
        %v962 = vpop.xlane.xlu0 %961
        %963 = vadd.xlane.f32.xlu0 %v932
        %v964 = vpop.xlane.xlu0 %963
        %965 = vadd.xlane.f32.xlu0 %v934
        %v966 = vpop.xlane.xlu0 %965
        %967 = vadd.xlane.f32.xlu0 %v936
        %v968 = vpop.xlane.xlu0 %967
        %969 = vadd.xlane.f32.xlu0 %v938
        %v970 = vpop.xlane.xlu0 %969
        %971 = vadd.xlane.f32.xlu0 %v940
        %v972 = vpop.xlane.xlu0 %971
        %973 = vadd.xlane.f32.xlu0 %v942
        %v974 = vpop.xlane.xlu0 %973
        %975 = vadd.xlane.f32.xlu0 %v944
        %v976 = vpop.xlane.xlu0 %975
        %977 = vadd.xlane.f32.xlu0 %v946
        %v978 = vpop.xlane.xlu0 %977
        %979 = vadd.xlane.f32.xlu0 %v948
        %v980 = vpop.xlane.xlu0 %979
        %981 = vadd.xlane.f32.xlu0 %v950
        %v982 = vpop.xlane.xlu0 %981
        %983 = vadd.xlane.f32.xlu0 %v952
        %v984 = vpop.xlane.xlu0 %983
        %985 = vmatprep.subr.mxu0 0.0
        %986 = vmatpush1.msra.mxu0 %v612
        %987 = vmatprep.subr.mxu0 0.0
        %988 = vmatpush1.msra.mxu0 %v607
        %989 = vmatprep.subr.mxu0 0.0
        %990 = vmatpush1.msra.mxu0 %v602
        %991 = vmatprep.subr.mxu0 0.0
        %992 = vmatpush1.msra.mxu0 %v597
        %993 = vmatprep.subr.mxu0 0.0
        %994 = vmatpush1.msra.mxu0 %v592
        %995 = vmatprep.subr.mxu0 0.0
        %996 = vmatpush1.msra.mxu0 %v587
        %997 = vmatprep.subr.mxu0 0.0
        %998 = vmatpush1.msra.mxu0 %v582
        %999 = vmatprep.subr.mxu0 0.0
        %1000 = vmatpush1.msra.mxu0 %v577
        %1001 = vmatprep.subr.mxu0 0.0
        %1002 = vmatpush1.msra.mxu0 %v572
        %1003 = vmatprep.subr.mxu0 0.0
        %1004 = vmatpush1.msra.mxu0 %v567
        %1005 = vmatprep.subr.mxu0 0.0
        %1006 = vmatpush1.msra.mxu0 %v562
        %1007 = vmatprep.subr.mxu0 0.0
        %1008 = vmatpush1.msra.mxu0 %v557
        %1009 = vmatprep.subr.mxu0 0.0
        %1010 = vmatpush1.msra.mxu0 %v552
        %1011 = vmatprep.subr.mxu0 0.0
        %1012 = vmatpush1.msra.mxu0 %v547
        %1013 = vmatprep.subr.mxu0 0.0
        %1014 = vmatpush1.msra.mxu0 %v542
        %1015 = vmatprep.subr.mxu0 0.0
        %1016 = vmatpush1.msra.mxu0 %v537
        %1017 = vmatprep.subr.mxu0 0.0
        %1018 = vmatpush2.msra.mxu0 0.0
        %1019 = vmatprep.subr.mxu0 0.0
        %1020 = vmatpush2.msra.mxu0 0.0
        %1021 = vmatprep.subr.mxu0 0.0
        %1022 = vmatpush2.msra.mxu0 0.0
        %1023 = vmatprep.subr.mxu0 0.0
        %1024 = vmatpush2.msra.mxu0 0.0
        %1025 = vmatprep.subr.mxu0 0.0
        %1026 = vmatpush2.msra.mxu0 0.0
        %1027 = vmatprep.subr.mxu0 0.0
        %1028 = vmatpush2.msra.mxu0 0.0
        %1029 = vmatprep.subr.mxu0 0.0
        %1030 = vmatpush2.msra.mxu0 0.0
        %1031 = vmatprep.subr.mxu0 0.0
        %1032 = vmatpush2.msra.mxu0 0.0
        %1033 = vmatprep.subr.mxu0 0.0
        %1034 = vmatpush2.msra.mxu0 0.0
        %1035 = vmatprep.subr.mxu0 0.0
        %1036 = vmatpush2.msra.mxu0 0.0
        %1037 = vmatprep.subr.mxu0 0.0
        %1038 = vmatpush2.msra.mxu0 0.0
        %1039 = vmatprep.subr.mxu0 0.0
        %1040 = vmatpush2.msra.mxu0 0.0
        %1041 = vmatprep.subr.mxu0 0.0
        %1042 = vmatpush2.msra.mxu0 0.0
        %1043 = vmatprep.subr.mxu0 0.0
        %1044 = vmatpush2.msra.mxu0 0.0
        %1045 = vmatprep.subr.mxu0 0.0
        %1046 = vmatpush2.msra.mxu0 0.0
        %1047 = vmatprep.subr.mxu0 0.0
        %1048 = vmatpush2.msra.mxu0 0.0
        %1049 = vmatprep.mubr.f32.mxu0 0.0
        %1050 = vmatmul.mubr.f32.gmra.mxu0 %v922
        %v1051 = vpop.f32.mrf.mxu0
        %v1052 = vadd.f32 0.0, %v1051
        %v1053 = vpop.f32.mrf.mxu0
        %1054 = vmatprep.mubr.f32.mxu0 0.0
        %1055 = vmatmul.mubr.f32.gmra.mxu0 %v924
        %v1056 = vpop.f32.mrf.mxu0
        %v1057 = vadd.f32 0.0, %v1056
        %v1058 = vpop.f32.mrf.mxu0
        %1059 = vmatprep.mubr.f32.mxu0 0.0
        %1060 = vmatmul.mubr.f32.gmra.mxu0 %v926
        %v1061 = vpop.f32.mrf.mxu0
        %v1062 = vadd.f32 0.0, %v1061
        %v1063 = vpop.f32.mrf.mxu0
        %1064 = vmatprep.mubr.f32.mxu0 0.0
        %1065 = vmatmul.mubr.f32.gmra.mxu0 %v928
        %v1066 = vpop.f32.mrf.mxu0
        %v1067 = vadd.f32 0.0, %v1066
        %v1068 = vpop.f32.mrf.mxu0
        %1069 = vmatprep.mubr.f32.mxu0 0.0
        %1070 = vmatmul.mubr.f32.gmra.mxu0 %v930
        %v1071 = vpop.f32.mrf.mxu0
        %v1072 = vadd.f32 0.0, %v1071
        %v1073 = vpop.f32.mrf.mxu0
        %1074 = vmatprep.mubr.f32.mxu0 0.0
        %1075 = vmatmul.mubr.f32.gmra.mxu0 %v932
        %v1076 = vpop.f32.mrf.mxu0
        %v1077 = vadd.f32 0.0, %v1076
        %v1078 = vpop.f32.mrf.mxu0
        %1079 = vmatprep.mubr.f32.mxu0 0.0
        %1080 = vmatmul.mubr.f32.gmra.mxu0 %v934
        %v1081 = vpop.f32.mrf.mxu0
        %v1082 = vadd.f32 0.0, %v1081
        %v1083 = vpop.f32.mrf.mxu0
        %1084 = vmatprep.mubr.f32.mxu0 0.0
        %1085 = vmatmul.mubr.f32.gmra.mxu0 %v936
        %v1086 = vpop.f32.mrf.mxu0
        %v1087 = vadd.f32 0.0, %v1086
        %v1088 = vpop.f32.mrf.mxu0
        %1089 = vmatprep.mubr.f32.mxu0 0.0
        %1090 = vmatmul.mubr.f32.gmra.mxu0 %v938
        %v1091 = vpop.f32.mrf.mxu0
        %v1092 = vadd.f32 0.0, %v1091
        %v1093 = vpop.f32.mrf.mxu0
        %1094 = vmatprep.mubr.f32.mxu0 0.0
        %1095 = vmatmul.mubr.f32.gmra.mxu0 %v940
        %v1096 = vpop.f32.mrf.mxu0
        %v1097 = vadd.f32 0.0, %v1096
        %v1098 = vpop.f32.mrf.mxu0
        %1099 = vmatprep.mubr.f32.mxu0 0.0
        %1100 = vmatmul.mubr.f32.gmra.mxu0 %v942
        %v1101 = vpop.f32.mrf.mxu0
        %v1102 = vadd.f32 0.0, %v1101
        %v1103 = vpop.f32.mrf.mxu0
        %1104 = vmatprep.mubr.f32.mxu0 0.0
        %1105 = vmatmul.mubr.f32.gmra.mxu0 %v944
        %v1106 = vpop.f32.mrf.mxu0
        %v1107 = vadd.f32 0.0, %v1106
        %v1108 = vpop.f32.mrf.mxu0
        %1109 = vmatprep.mubr.f32.mxu0 0.0
        %1110 = vmatmul.mubr.f32.gmra.mxu0 %v946
        %v1111 = vpop.f32.mrf.mxu0
        %v1112 = vadd.f32 0.0, %v1111
        %v1113 = vpop.f32.mrf.mxu0
        %1114 = vmatprep.mubr.f32.mxu0 0.0
        %1115 = vmatmul.mubr.f32.gmra.mxu0 %v948
        %v1116 = vpop.f32.mrf.mxu0
        %v1117 = vadd.f32 0.0, %v1116
        %v1118 = vpop.f32.mrf.mxu0
        %1119 = vmatprep.mubr.f32.mxu0 0.0
        %1120 = vmatmul.mubr.f32.gmra.mxu0 %v950
        %v1121 = vpop.f32.mrf.mxu0
        %v1122 = vadd.f32 0.0, %v1121
        %v1123 = vpop.f32.mrf.mxu0
        %1124 = vmatprep.mubr.f32.mxu0 0.0
        %1125 = vmatmul.mubr.f32.gmra.mxu0 %v952
        %v1126 = vpop.f32.mrf.mxu0
        %v1127 = vadd.f32 0.0, %v1126
        %v1128 = vpop.f32.mrf.mxu0
        %1129 = vdwg.mxu0
        %v1130 = vrcp.pop %v954
        %v1131 = vrcp.pop %v956
        %v1132 = vrcp.pop %v958
        %v1133 = vrcp.pop %v960
        %v1134 = vrcp.pop %v962
        %v1135 = vrcp.pop %v964
        %v1136 = vrcp.pop %v966
        %v1137 = vrcp.pop %v968
        %v1138 = vrcp.pop %v970
        %v1139 = vrcp.pop %v972
        %v1140 = vrcp.pop %v974
        %v1141 = vrcp.pop %v976
        %v1142 = vrcp.pop %v978
        %v1143 = vrcp.pop %v980
        %v1144 = vrcp.pop %v982
        %v1145 = vrcp.pop %v984
        %v1146 = vmul.f32 %v1052, %v1130
        %v1147 = vmul.f32 %v1057, %v1131
        %v1148 = vmul.f32 %v1062, %v1132
        %v1149 = vmul.f32 %v1067, %v1133
        %v1150 = vmul.f32 %v1072, %v1134
        %v1151 = vmul.f32 %v1077, %v1135
        %v1152 = vmul.f32 %v1082, %v1136
        %v1153 = vmul.f32 %v1087, %v1137
        %v1154 = vmul.f32 %v1092, %v1138
        %v1155 = vmul.f32 %v1097, %v1139
        %v1156 = vmul.f32 %v1102, %v1140
        %v1157 = vmul.f32 %v1107, %v1141
        %v1158 = vmul.f32 %v1112, %v1142
        %v1159 = vmul.f32 %v1117, %v1143
        %v1160 = vmul.f32 %v1122, %v1144
        %v1161 = vmul.f32 %v1127, %v1145
        %1162 = vrot.lane.b32.xlu0 %v376, 112
        %v1163 = vpop.permute.xlu0 %1162
        %1164 = vrot.lane.b32.xlu0 %v382, 112
        %v1165 = vpop.permute.xlu0 %1164
        %1166 = vrot.lane.b32.xlu0 %v388, 112
        %v1167 = vpop.permute.xlu0 %1166
        %1168 = vrot.lane.b32.xlu0 %v394, 112
        %v1169 = vpop.permute.xlu0 %1168
        %1170 = vrot.lane.b32.xlu0 %v400, 112
        %v1171 = vpop.permute.xlu0 %1170
        %1172 = vrot.lane.b32.xlu0 %v406, 112
        %v1173 = vpop.permute.xlu0 %1172
        %1174 = vrot.lane.b32.xlu0 %v412, 112
        %v1175 = vpop.permute.xlu0 %1174
        %1176 = vrot.lane.b32.xlu0 %v418, 112
        %v1177 = vpop.permute.xlu0 %1176
        %1178 = vrot.lane.b32.xlu0 %v424, 112
        %v1179 = vpop.permute.xlu0 %1178
        %1180 = vrot.lane.b32.xlu0 %v430, 112
        %v1181 = vpop.permute.xlu0 %1180
        %1182 = vrot.lane.b32.xlu0 %v436, 112
        %v1183 = vpop.permute.xlu0 %1182
        %1184 = vrot.lane.b32.xlu0 %v442, 112
        %v1185 = vpop.permute.xlu0 %1184
        %1186 = vrot.lane.b32.xlu0 %v448, 112
        %v1187 = vpop.permute.xlu0 %1186
        %1188 = vrot.lane.b32.xlu0 %v454, 112
        %v1189 = vpop.permute.xlu0 %1188
        %1190 = vrot.lane.b32.xlu0 %v460, 112
        %v1191 = vpop.permute.xlu0 %1190
        %1192 = vrot.lane.b32.xlu0 %v466, 112
        %v1193 = vpop.permute.xlu0 %1192
        %1194 = vrot.lane.b32.xlu0 %v378, 112
        %v1195 = vpop.permute.xlu0 %1194
        %1196 = vrot.lane.b32.xlu0 %v384, 112
        %v1197 = vpop.permute.xlu0 %1196
        %1198 = vrot.lane.b32.xlu0 %v390, 112
        %v1199 = vpop.permute.xlu0 %1198
        %1200 = vrot.lane.b32.xlu0 %v396, 112
        %v1201 = vpop.permute.xlu0 %1200
        %1202 = vrot.lane.b32.xlu0 %v402, 112
        %v1203 = vpop.permute.xlu0 %1202
        %1204 = vrot.lane.b32.xlu0 %v408, 112
        %v1205 = vpop.permute.xlu0 %1204
        %1206 = vrot.lane.b32.xlu0 %v414, 112
        %v1207 = vpop.permute.xlu0 %1206
        %1208 = vrot.lane.b32.xlu0 %v420, 112
        %v1209 = vpop.permute.xlu0 %1208
        %1210 = vrot.lane.b32.xlu0 %v426, 112
        %v1211 = vpop.permute.xlu0 %1210
        %1212 = vrot.lane.b32.xlu0 %v432, 112
        %v1213 = vpop.permute.xlu0 %1212
        %1214 = vrot.lane.b32.xlu0 %v438, 112
        %v1215 = vpop.permute.xlu0 %1214
        %1216 = vrot.lane.b32.xlu0 %v444, 112
        %v1217 = vpop.permute.xlu0 %1216
        %1218 = vrot.lane.b32.xlu0 %v450, 112
        %v1219 = vpop.permute.xlu0 %1218
        %1220 = vrot.lane.b32.xlu0 %v456, 112
        %v1221 = vpop.permute.xlu0 %1220
        %1222 = vrot.lane.b32.xlu0 %v462, 112
        %v1223 = vpop.permute.xlu0 %1222
        %1224 = vrot.lane.b32.xlu0 %v468, 112
        %v1225 = vpop.permute.xlu0 %1224
        %v1226 = vsel %vm615, %v1163, 0
        %v1228 = vsel %vm615, %v1165, 0
        %v1230 = vsel %vm615, %v1167, 0
        %v1232 = vsel %vm615, %v1169, 0
        %v1234 = vsel %vm615, %v1171, 0
        %v1236 = vsel %vm615, %v1173, 0
        %v1238 = vsel %vm615, %v1175, 0
        %v1240 = vsel %vm615, %v1177, 0
        %v1242 = vsel %vm615, %v1179, 0
        %v1244 = vsel %vm615, %v1181, 0
        %v1246 = vsel %vm615, %v1183, 0
        %v1248 = vsel %vm615, %v1185, 0
        %v1250 = vsel %vm615, %v1187, 0
        %v1252 = vsel %vm615, %v1189, 0
        %v1254 = vsel %vm615, %v1191, 0
        %v1256 = vsel %vm615, %v1193, 0
        %v1258 = vsel %vm615, %v1195, 0
        %v1260 = vsel %vm615, %v1197, 0
        %v1262 = vsel %vm615, %v1199, 0
        %v1264 = vsel %vm615, %v1201, 0
        %v1266 = vsel %vm615, %v1203, 0
        %v1268 = vsel %vm615, %v1205, 0
        %v1270 = vsel %vm615, %v1207, 0
        %v1272 = vsel %vm615, %v1209, 0
        %v1274 = vsel %vm615, %v1211, 0
        %v1276 = vsel %vm615, %v1213, 0
        %v1278 = vsel %vm615, %v1215, 0
        %v1280 = vsel %vm615, %v1217, 0
        %v1282 = vsel %vm615, %v1219, 0
        %v1284 = vsel %vm615, %v1221, 0
        %v1286 = vsel %vm615, %v1223, 0
        %v1288 = vsel %vm615, %v1225, 0
        %1290 = vmatprep.subr.mxu0 0.0
        %1291 = vmatpush1.xpose.msra.mxu0 %v1288
        %1292 = vmatprep.subr.mxu0 0.0
        %1293 = vmatpush1.xpose.msra.mxu0 %v1286
        %1294 = vmatprep.subr.mxu0 0.0
        %1295 = vmatpush1.xpose.msra.mxu0 %v1284
        %1296 = vmatprep.subr.mxu0 0.0
        %1297 = vmatpush1.xpose.msra.mxu0 %v1282
        %1298 = vmatprep.subr.mxu0 0.0
        %1299 = vmatpush1.xpose.msra.mxu0 %v1280
        %1300 = vmatprep.subr.mxu0 0.0
        %1301 = vmatpush1.xpose.msra.mxu0 %v1278
        %1302 = vmatprep.subr.mxu0 0.0
        %1303 = vmatpush1.xpose.msra.mxu0 %v1276
        %1304 = vmatprep.subr.mxu0 0.0
        %1305 = vmatpush1.xpose.msra.mxu0 %v1274
        %1306 = vmatprep.subr.mxu0 0.0
        %1307 = vmatpush1.xpose.msra.mxu0 %v1272
        %1308 = vmatprep.subr.mxu0 0.0
        %1309 = vmatpush1.xpose.msra.mxu0 %v1270
        %1310 = vmatprep.subr.mxu0 0.0
        %1311 = vmatpush1.xpose.msra.mxu0 %v1268
        %1312 = vmatprep.subr.mxu0 0.0
        %1313 = vmatpush1.xpose.msra.mxu0 %v1266
        %1314 = vmatprep.subr.mxu0 0.0
        %1315 = vmatpush1.xpose.msra.mxu0 %v1264
        %1316 = vmatprep.subr.mxu0 0.0
        %1317 = vmatpush1.xpose.msra.mxu0 %v1262
        %1318 = vmatprep.subr.mxu0 0.0
        %1319 = vmatpush1.xpose.msra.mxu0 %v1260
        %1320 = vmatprep.subr.mxu0 0.0
        %1321 = vmatpush1.xpose.msra.mxu0 %v1258
        %1322 = vmatprep.subr.mxu0 0.0
        %1323 = vmatpush2.xpose.msra.mxu0 0.0
        %1324 = vmatprep.subr.mxu0 0.0
        %1325 = vmatpush2.xpose.msra.mxu0 0.0
        %1326 = vmatprep.subr.mxu0 0.0
        %1327 = vmatpush2.xpose.msra.mxu0 0.0
        %1328 = vmatprep.subr.mxu0 0.0
        %1329 = vmatpush2.xpose.msra.mxu0 0.0
        %1330 = vmatprep.subr.mxu0 0.0
        %1331 = vmatpush2.xpose.msra.mxu0 0.0
        %1332 = vmatprep.subr.mxu0 0.0
        %1333 = vmatpush2.xpose.msra.mxu0 0.0
        %1334 = vmatprep.subr.mxu0 0.0
        %1335 = vmatpush2.xpose.msra.mxu0 0.0
        %1336 = vmatprep.subr.mxu0 0.0
        %1337 = vmatpush2.xpose.msra.mxu0 0.0
        %1338 = vmatprep.subr.mxu0 0.0
        %1339 = vmatpush2.xpose.msra.mxu0 0.0
        %1340 = vmatprep.subr.mxu0 0.0
        %1341 = vmatpush2.xpose.msra.mxu0 0.0
        %1342 = vmatprep.subr.mxu0 0.0
        %1343 = vmatpush2.xpose.msra.mxu0 0.0
        %1344 = vmatprep.subr.mxu0 0.0
        %1345 = vmatpush2.xpose.msra.mxu0 0.0
        %1346 = vmatprep.subr.mxu0 0.0
        %1347 = vmatpush2.xpose.msra.mxu0 0.0
        %1348 = vmatprep.subr.mxu0 0.0
        %1349 = vmatpush2.xpose.msra.mxu0 0.0
        %1350 = vmatprep.subr.mxu0 0.0
        %1351 = vmatpush2.xpose.msra.mxu0 0.0
        %1352 = vmatprep.subr.mxu0 0.0
        %1353 = vmatpush2.xpose.msra.mxu0 0.0
        %1354 = vmatprep.mubr.f32.mxu0 0.0
        %1355 = vmatmul.mubr.f32.gmra.mxu0 %v1226
        %v1356 = vpop.f32.mrf.mxu0
        %v1357 = vadd.f32 0.0, %v1356
        %v1358 = vpop.f32.mrf.mxu0
        %1359 = vmatprep.mubr.f32.mxu0 0.0
        %1360 = vmatmul.mubr.f32.gmra.mxu0 %v1228
        %v1361 = vpop.f32.mrf.mxu0
        %v1362 = vadd.f32 0.0, %v1361
        %v1363 = vpop.f32.mrf.mxu0
        %1364 = vmatprep.mubr.f32.mxu0 0.0
        %1365 = vmatmul.mubr.f32.gmra.mxu0 %v1230
        %v1366 = vpop.f32.mrf.mxu0
        %v1367 = vadd.f32 0.0, %v1366
        %v1368 = vpop.f32.mrf.mxu0
        %1369 = vmatprep.mubr.f32.mxu0 0.0
        %1370 = vmatmul.mubr.f32.gmra.mxu0 %v1232
        %v1371 = vpop.f32.mrf.mxu0
        %v1372 = vadd.f32 0.0, %v1371
        %v1373 = vpop.f32.mrf.mxu0
        %1374 = vmatprep.mubr.f32.mxu0 0.0
        %1375 = vmatmul.mubr.f32.gmra.mxu0 %v1234
        %v1376 = vpop.f32.mrf.mxu0
        %v1377 = vadd.f32 0.0, %v1376
        %v1378 = vpop.f32.mrf.mxu0
        %1379 = vmatprep.mubr.f32.mxu0 0.0
        %1380 = vmatmul.mubr.f32.gmra.mxu0 %v1236
        %v1381 = vpop.f32.mrf.mxu0
        %v1382 = vadd.f32 0.0, %v1381
        %v1383 = vpop.f32.mrf.mxu0
        %1384 = vmatprep.mubr.f32.mxu0 0.0
        %1385 = vmatmul.mubr.f32.gmra.mxu0 %v1238
        %v1386 = vpop.f32.mrf.mxu0
        %v1387 = vadd.f32 0.0, %v1386
        %v1388 = vpop.f32.mrf.mxu0
        %1389 = vmatprep.mubr.f32.mxu0 0.0
        %1390 = vmatmul.mubr.f32.gmra.mxu0 %v1240
        %v1391 = vpop.f32.mrf.mxu0
        %v1392 = vadd.f32 0.0, %v1391
        %v1393 = vpop.f32.mrf.mxu0
        %1394 = vmatprep.mubr.f32.mxu0 0.0
        %1395 = vmatmul.mubr.f32.gmra.mxu0 %v1242
        %v1396 = vpop.f32.mrf.mxu0
        %v1397 = vadd.f32 0.0, %v1396
        %v1398 = vpop.f32.mrf.mxu0
        %1399 = vmatprep.mubr.f32.mxu0 0.0
        %1400 = vmatmul.mubr.f32.gmra.mxu0 %v1244
        %v1401 = vpop.f32.mrf.mxu0
        %v1402 = vadd.f32 0.0, %v1401
        %v1403 = vpop.f32.mrf.mxu0
        %1404 = vmatprep.mubr.f32.mxu0 0.0
        %1405 = vmatmul.mubr.f32.gmra.mxu0 %v1246
        %v1406 = vpop.f32.mrf.mxu0
        %v1407 = vadd.f32 0.0, %v1406
        %v1408 = vpop.f32.mrf.mxu0
        %1409 = vmatprep.mubr.f32.mxu0 0.0
        %1410 = vmatmul.mubr.f32.gmra.mxu0 %v1248
        %v1411 = vpop.f32.mrf.mxu0
        %v1412 = vadd.f32 0.0, %v1411
        %v1413 = vpop.f32.mrf.mxu0
        %1414 = vmatprep.mubr.f32.mxu0 0.0
        %1415 = vmatmul.mubr.f32.gmra.mxu0 %v1250
        %v1416 = vpop.f32.mrf.mxu0
        %v1417 = vadd.f32 0.0, %v1416
        %v1418 = vpop.f32.mrf.mxu0
        %1419 = vmatprep.mubr.f32.mxu0 0.0
        %1420 = vmatmul.mubr.f32.gmra.mxu0 %v1252
        %v1421 = vpop.f32.mrf.mxu0
        %v1422 = vadd.f32 0.0, %v1421
        %v1423 = vpop.f32.mrf.mxu0
        %1424 = vmatprep.mubr.f32.mxu0 0.0
        %1425 = vmatmul.mubr.f32.gmra.mxu0 %v1254
        %v1426 = vpop.f32.mrf.mxu0
        %v1427 = vadd.f32 0.0, %v1426
        %v1428 = vpop.f32.mrf.mxu0
        %1429 = vmatprep.mubr.f32.mxu0 0.0
        %1430 = vmatmul.mubr.f32.gmra.mxu0 %v1256
        %v1431 = vpop.f32.mrf.mxu0
        %v1432 = vadd.f32 0.0, %v1431
        %v1433 = vpop.f32.mrf.mxu0
        %1434 = vdwg.mxu0
        %v1435 = vmul.f32 %v1357, 0.25
        %v1436 = vmul.f32 %v1362, 0.25
        %v1437 = vmul.f32 %v1367, 0.25
        %v1438 = vmul.f32 %v1372, 0.25
        %v1439 = vmul.f32 %v1377, 0.25
        %v1440 = vmul.f32 %v1382, 0.25
        %v1441 = vmul.f32 %v1387, 0.25
        %v1442 = vmul.f32 %v1392, 0.25
        %v1443 = vmul.f32 %v1397, 0.25
        %v1444 = vmul.f32 %v1402, 0.25
        %v1445 = vmul.f32 %v1407, 0.25
        %v1446 = vmul.f32 %v1412, 0.25
        %v1447 = vmul.f32 %v1417, 0.25
        %v1448 = vmul.f32 %v1422, 0.25
        %v1449 = vmul.f32 %v1427, 0.25
        %v1450 = vmul.f32 %v1432, 0.25
        %1451 = vmax.xlane.f32.xlu0 %v1435
        %v1452 = vpop.xlane.xlu0 %1451
        %1453 = vmax.xlane.f32.xlu0 %v1436
        %v1454 = vpop.xlane.xlu0 %1453
        %1455 = vmax.xlane.f32.xlu0 %v1437
        %v1456 = vpop.xlane.xlu0 %1455
        %1457 = vmax.xlane.f32.xlu0 %v1438
        %v1458 = vpop.xlane.xlu0 %1457
        %1459 = vmax.xlane.f32.xlu0 %v1439
        %v1460 = vpop.xlane.xlu0 %1459
        %1461 = vmax.xlane.f32.xlu0 %v1440
        %v1462 = vpop.xlane.xlu0 %1461
        %1463 = vmax.xlane.f32.xlu0 %v1441
        %v1464 = vpop.xlane.xlu0 %1463
        %1465 = vmax.xlane.f32.xlu0 %v1442
        %v1466 = vpop.xlane.xlu0 %1465
        %1467 = vmax.xlane.f32.xlu0 %v1443
        %v1468 = vpop.xlane.xlu0 %1467
        %1469 = vmax.xlane.f32.xlu0 %v1444
        %v1470 = vpop.xlane.xlu0 %1469
        %1471 = vmax.xlane.f32.xlu0 %v1445
        %v1472 = vpop.xlane.xlu0 %1471
        %1473 = vmax.xlane.f32.xlu0 %v1446
        %v1474 = vpop.xlane.xlu0 %1473
        %1475 = vmax.xlane.f32.xlu0 %v1447
        %v1476 = vpop.xlane.xlu0 %1475
        %1477 = vmax.xlane.f32.xlu0 %v1448
        %v1478 = vpop.xlane.xlu0 %1477
        %1479 = vmax.xlane.f32.xlu0 %v1449
        %v1480 = vpop.xlane.xlu0 %1479
        %1481 = vmax.xlane.f32.xlu0 %v1450
        %v1482 = vpop.xlane.xlu0 %1481
        %v1483 = vsub.f32 %v1435, %v1452
        %v1484 = vsub.f32 %v1436, %v1454
        %v1485 = vsub.f32 %v1437, %v1456
        %v1486 = vsub.f32 %v1438, %v1458
        %v1487 = vsub.f32 %v1439, %v1460
        %v1488 = vsub.f32 %v1440, %v1462
        %v1489 = vsub.f32 %v1441, %v1464
        %v1490 = vsub.f32 %v1442, %v1466
        %v1491 = vsub.f32 %v1443, %v1468
        %v1492 = vsub.f32 %v1444, %v1470
        %v1493 = vsub.f32 %v1445, %v1472
        %v1494 = vsub.f32 %v1446, %v1474
        %v1495 = vsub.f32 %v1447, %v1476
        %v1496 = vsub.f32 %v1448, %v1478
        %v1497 = vsub.f32 %v1449, %v1480
        %v1498 = vsub.f32 %v1450, %v1482
        %v1499 = vmul.f32 %v1483, 1.442695
        %v1500 = vpow.pop %v1499
        %v1501 = vmul.f32 %v1484, 1.442695
        %v1502 = vpow.pop %v1501
        %v1503 = vmul.f32 %v1485, 1.442695
        %v1504 = vpow.pop %v1503
        %v1505 = vmul.f32 %v1486, 1.442695
        %v1506 = vpow.pop %v1505
        %v1507 = vmul.f32 %v1487, 1.442695
        %v1508 = vpow.pop %v1507
        %v1509 = vmul.f32 %v1488, 1.442695
        %v1510 = vpow.pop %v1509
        %v1511 = vmul.f32 %v1489, 1.442695
        %v1512 = vpow.pop %v1511
        %v1513 = vmul.f32 %v1490, 1.442695
        %v1514 = vpow.pop %v1513
        %v1515 = vmul.f32 %v1491, 1.442695
        %v1516 = vpow.pop %v1515
        %v1517 = vmul.f32 %v1492, 1.442695
        %v1518 = vpow.pop %v1517
        %v1519 = vmul.f32 %v1493, 1.442695
        %v1520 = vpow.pop %v1519
        %v1521 = vmul.f32 %v1494, 1.442695
        %v1522 = vpow.pop %v1521
        %v1523 = vmul.f32 %v1495, 1.442695
        %v1524 = vpow.pop %v1523
        %v1525 = vmul.f32 %v1496, 1.442695
        %v1526 = vpow.pop %v1525
        %v1527 = vmul.f32 %v1497, 1.442695
        %v1528 = vpow.pop %v1527
        %v1529 = vmul.f32 %v1498, 1.442695
        %v1530 = vpow.pop %v1529
        %1531 = vadd.xlane.f32.xlu0 %v1500
        %v1532 = vpop.xlane.xlu0 %1531
        %1533 = vadd.xlane.f32.xlu0 %v1502
        %v1534 = vpop.xlane.xlu0 %1533
        %1535 = vadd.xlane.f32.xlu0 %v1504
        %v1536 = vpop.xlane.xlu0 %1535
        %1537 = vadd.xlane.f32.xlu0 %v1506
        %v1538 = vpop.xlane.xlu0 %1537
        %1539 = vadd.xlane.f32.xlu0 %v1508
        %v1540 = vpop.xlane.xlu0 %1539
        %1541 = vadd.xlane.f32.xlu0 %v1510
        %v1542 = vpop.xlane.xlu0 %1541
        %1543 = vadd.xlane.f32.xlu0 %v1512
        %v1544 = vpop.xlane.xlu0 %1543
        %1545 = vadd.xlane.f32.xlu0 %v1514
        %v1546 = vpop.xlane.xlu0 %1545
        %1547 = vadd.xlane.f32.xlu0 %v1516
        %v1548 = vpop.xlane.xlu0 %1547
        %1549 = vadd.xlane.f32.xlu0 %v1518
        %v1550 = vpop.xlane.xlu0 %1549
        %1551 = vadd.xlane.f32.xlu0 %v1520
        %v1552 = vpop.xlane.xlu0 %1551
        %1553 = vadd.xlane.f32.xlu0 %v1522
        %v1554 = vpop.xlane.xlu0 %1553
        %1555 = vadd.xlane.f32.xlu0 %v1524
        %v1556 = vpop.xlane.xlu0 %1555
        %1557 = vadd.xlane.f32.xlu0 %v1526
        %v1558 = vpop.xlane.xlu0 %1557
        %1559 = vadd.xlane.f32.xlu0 %v1528
        %v1560 = vpop.xlane.xlu0 %1559
        %1561 = vadd.xlane.f32.xlu0 %v1530
        %v1562 = vpop.xlane.xlu0 %1561
        %1579 = vrot.lane.b32.xlu0 %v537, 112
        %v1580 = vpop.permute.xlu0 %1579
        %1581 = vrot.lane.b32.xlu0 %v542, 112
        %v1582 = vpop.permute.xlu0 %1581
        %1583 = vrot.lane.b32.xlu0 %v547, 112
        %v1584 = vpop.permute.xlu0 %1583
        %1585 = vrot.lane.b32.xlu0 %v552, 112
        %v1586 = vpop.permute.xlu0 %1585
        %1587 = vrot.lane.b32.xlu0 %v557, 112
        %v1588 = vpop.permute.xlu0 %1587
        %1589 = vrot.lane.b32.xlu0 %v562, 112
        %v1590 = vpop.permute.xlu0 %1589
        %1591 = vrot.lane.b32.xlu0 %v567, 112
        %v1592 = vpop.permute.xlu0 %1591
        %1593 = vrot.lane.b32.xlu0 %v572, 112
        %v1594 = vpop.permute.xlu0 %1593
        %1595 = vrot.lane.b32.xlu0 %v577, 112
        %v1596 = vpop.permute.xlu0 %1595
        %1597 = vrot.lane.b32.xlu0 %v582, 112
        %v1598 = vpop.permute.xlu0 %1597
        %1599 = vrot.lane.b32.xlu0 %v587, 112
        %v1600 = vpop.permute.xlu0 %1599
        %1601 = vrot.lane.b32.xlu0 %v592, 112
        %v1602 = vpop.permute.xlu0 %1601
        %1603 = vrot.lane.b32.xlu0 %v597, 112
        %v1604 = vpop.permute.xlu0 %1603
        %1605 = vrot.lane.b32.xlu0 %v602, 112
        %v1606 = vpop.permute.xlu0 %1605
        %1607 = vrot.lane.b32.xlu0 %v607, 112
        %v1608 = vpop.permute.xlu0 %1607
        %1609 = vrot.lane.b32.xlu0 %v612, 112
        %v1610 = vpop.permute.xlu0 %1609
        %1627 = vmatprep.subr.mxu0 0.0
        %1628 = vmatpush1.msra.mxu0 %v1610
        %1629 = vmatprep.subr.mxu0 0.0
        %1630 = vmatpush1.msra.mxu0 %v1608
        %1631 = vmatprep.subr.mxu0 0.0
        %1632 = vmatpush1.msra.mxu0 %v1606
        %1633 = vmatprep.subr.mxu0 0.0
        %1634 = vmatpush1.msra.mxu0 %v1604
        %1635 = vmatprep.subr.mxu0 0.0
        %1636 = vmatpush1.msra.mxu0 %v1602
        %1637 = vmatprep.subr.mxu0 0.0
        %1638 = vmatpush1.msra.mxu0 %v1600
        %1639 = vmatprep.subr.mxu0 0.0
        %1640 = vmatpush1.msra.mxu0 %v1598
        %1641 = vmatprep.subr.mxu0 0.0
        %1642 = vmatpush1.msra.mxu0 %v1596
        %1643 = vmatprep.subr.mxu0 0.0
        %1644 = vmatpush1.msra.mxu0 %v1594
        %1645 = vmatprep.subr.mxu0 0.0
        %1646 = vmatpush1.msra.mxu0 %v1592
        %1647 = vmatprep.subr.mxu0 0.0
        %1648 = vmatpush1.msra.mxu0 %v1590
        %1649 = vmatprep.subr.mxu0 0.0
        %1650 = vmatpush1.msra.mxu0 %v1588
        %1651 = vmatprep.subr.mxu0 0.0
        %1652 = vmatpush1.msra.mxu0 %v1586
        %1653 = vmatprep.subr.mxu0 0.0
        %1654 = vmatpush1.msra.mxu0 %v1584
        %1655 = vmatprep.subr.mxu0 0.0
        %1656 = vmatpush1.msra.mxu0 %v1582
        %1657 = vmatprep.subr.mxu0 0.0
        %1658 = vmatpush1.msra.mxu0 %v1580
        %1659 = vmatprep.subr.mxu0 0.0
        %1660 = vmatpush2.msra.mxu0 0.0
        %1661 = vmatprep.subr.mxu0 0.0
        %1662 = vmatpush2.msra.mxu0 0.0
        %1663 = vmatprep.subr.mxu0 0.0
        %1664 = vmatpush2.msra.mxu0 0.0
        %1665 = vmatprep.subr.mxu0 0.0
        %1666 = vmatpush2.msra.mxu0 0.0
        %1667 = vmatprep.subr.mxu0 0.0
        %1668 = vmatpush2.msra.mxu0 0.0
        %1669 = vmatprep.subr.mxu0 0.0
        %1670 = vmatpush2.msra.mxu0 0.0
        %1671 = vmatprep.subr.mxu0 0.0
        %1672 = vmatpush2.msra.mxu0 0.0
        %1673 = vmatprep.subr.mxu0 0.0
        %1674 = vmatpush2.msra.mxu0 0.0
        %1675 = vmatprep.subr.mxu0 0.0
        %1676 = vmatpush2.msra.mxu0 0.0
        %1677 = vmatprep.subr.mxu0 0.0
        %1678 = vmatpush2.msra.mxu0 0.0
        %1679 = vmatprep.subr.mxu0 0.0
        %1680 = vmatpush2.msra.mxu0 0.0
        %1681 = vmatprep.subr.mxu0 0.0
        %1682 = vmatpush2.msra.mxu0 0.0
        %1683 = vmatprep.subr.mxu0 0.0
        %1684 = vmatpush2.msra.mxu0 0.0
        %1685 = vmatprep.subr.mxu0 0.0
        %1686 = vmatpush2.msra.mxu0 0.0
        %1687 = vmatprep.subr.mxu0 0.0
        %1688 = vmatpush2.msra.mxu0 0.0
        %1689 = vmatprep.subr.mxu0 0.0
        %1690 = vmatpush2.msra.mxu0 0.0
        %1691 = vmatprep.mubr.f32.mxu0 0.0
        %1692 = vmatmul.mubr.f32.gmra.mxu0 %v1500
        %v1693 = vpop.f32.mrf.mxu0
        %v1694 = vadd.f32 0.0, %v1693
        %v1695 = vpop.f32.mrf.mxu0
        %1696 = vmatprep.mubr.f32.mxu0 0.0
        %1697 = vmatmul.mubr.f32.gmra.mxu0 %v1502
        %v1698 = vpop.f32.mrf.mxu0
        %v1699 = vadd.f32 0.0, %v1698
        %v1700 = vpop.f32.mrf.mxu0
        %1701 = vmatprep.mubr.f32.mxu0 0.0
        %1702 = vmatmul.mubr.f32.gmra.mxu0 %v1504
        %v1703 = vpop.f32.mrf.mxu0
        %v1704 = vadd.f32 0.0, %v1703
        %v1705 = vpop.f32.mrf.mxu0
        %1706 = vmatprep.mubr.f32.mxu0 0.0
        %1707 = vmatmul.mubr.f32.gmra.mxu0 %v1506
        %v1708 = vpop.f32.mrf.mxu0
        %v1709 = vadd.f32 0.0, %v1708
        %v1710 = vpop.f32.mrf.mxu0
        %1711 = vmatprep.mubr.f32.mxu0 0.0
        %1712 = vmatmul.mubr.f32.gmra.mxu0 %v1508
        %v1713 = vpop.f32.mrf.mxu0
        %v1714 = vadd.f32 0.0, %v1713
        %v1715 = vpop.f32.mrf.mxu0
        %1716 = vmatprep.mubr.f32.mxu0 0.0
        %1717 = vmatmul.mubr.f32.gmra.mxu0 %v1510
        %v1718 = vpop.f32.mrf.mxu0
        %v1719 = vadd.f32 0.0, %v1718
        %v1720 = vpop.f32.mrf.mxu0
        %1721 = vmatprep.mubr.f32.mxu0 0.0
        %1722 = vmatmul.mubr.f32.gmra.mxu0 %v1512
        %v1723 = vpop.f32.mrf.mxu0
        %v1724 = vadd.f32 0.0, %v1723
        %v1725 = vpop.f32.mrf.mxu0
        %1726 = vmatprep.mubr.f32.mxu0 0.0
        %1727 = vmatmul.mubr.f32.gmra.mxu0 %v1514
        %v1728 = vpop.f32.mrf.mxu0
        %v1729 = vadd.f32 0.0, %v1728
        %v1730 = vpop.f32.mrf.mxu0
        %1731 = vmatprep.mubr.f32.mxu0 0.0
        %1732 = vmatmul.mubr.f32.gmra.mxu0 %v1516
        %v1733 = vpop.f32.mrf.mxu0
        %v1734 = vadd.f32 0.0, %v1733
        %v1735 = vpop.f32.mrf.mxu0
        %1736 = vmatprep.mubr.f32.mxu0 0.0
        %1737 = vmatmul.mubr.f32.gmra.mxu0 %v1518
        %v1738 = vpop.f32.mrf.mxu0
        %v1739 = vadd.f32 0.0, %v1738
        %v1740 = vpop.f32.mrf.mxu0
        %1741 = vmatprep.mubr.f32.mxu0 0.0
        %1742 = vmatmul.mubr.f32.gmra.mxu0 %v1520
        %v1743 = vpop.f32.mrf.mxu0
        %v1744 = vadd.f32 0.0, %v1743
        %v1745 = vpop.f32.mrf.mxu0
        %1746 = vmatprep.mubr.f32.mxu0 0.0
        %1747 = vmatmul.mubr.f32.gmra.mxu0 %v1522
        %v1748 = vpop.f32.mrf.mxu0
        %v1749 = vadd.f32 0.0, %v1748
        %v1750 = vpop.f32.mrf.mxu0
        %1751 = vmatprep.mubr.f32.mxu0 0.0
        %1752 = vmatmul.mubr.f32.gmra.mxu0 %v1524
        %v1753 = vpop.f32.mrf.mxu0
        %v1754 = vadd.f32 0.0, %v1753
        %v1755 = vpop.f32.mrf.mxu0
        %1756 = vmatprep.mubr.f32.mxu0 0.0
        %1757 = vmatmul.mubr.f32.gmra.mxu0 %v1526
        %v1758 = vpop.f32.mrf.mxu0
        %v1759 = vadd.f32 0.0, %v1758
        %v1760 = vpop.f32.mrf.mxu0
        %1761 = vmatprep.mubr.f32.mxu0 0.0
        %1762 = vmatmul.mubr.f32.gmra.mxu0 %v1528
        %v1763 = vpop.f32.mrf.mxu0
        %v1764 = vadd.f32 0.0, %v1763
        %v1765 = vpop.f32.mrf.mxu0
        %1766 = vmatprep.mubr.f32.mxu0 0.0
        %1767 = vmatmul.mubr.f32.gmra.mxu0 %v1530
        %v1768 = vpop.f32.mrf.mxu0
        %v1769 = vadd.f32 0.0, %v1768
        %v1770 = vpop.f32.mrf.mxu0
        %1771 = vdwg.mxu0
        %v1772 = vrcp.pop %v1532
        %v1773 = vrcp.pop %v1534
        %v1774 = vrcp.pop %v1536
        %v1775 = vrcp.pop %v1538
        %v1776 = vrcp.pop %v1540
        %v1777 = vrcp.pop %v1542
        %v1778 = vrcp.pop %v1544
        %v1779 = vrcp.pop %v1546
        %v1780 = vrcp.pop %v1548
        %v1781 = vrcp.pop %v1550
        %v1782 = vrcp.pop %v1552
        %v1783 = vrcp.pop %v1554
        %v1784 = vrcp.pop %v1556
        %v1785 = vrcp.pop %v1558
        %v1786 = vrcp.pop %v1560
        %v1787 = vrcp.pop %v1562
        %v1788 = vmul.f32 %v1694, %v1772
        %v1789 = vmul.f32 %v1699, %v1773
        %v1790 = vmul.f32 %v1704, %v1774
        %v1791 = vmul.f32 %v1709, %v1775
        %v1792 = vmul.f32 %v1714, %v1776
        %v1793 = vmul.f32 %v1719, %v1777
        %v1794 = vmul.f32 %v1724, %v1778
        %v1795 = vmul.f32 %v1729, %v1779
        %v1796 = vmul.f32 %v1734, %v1780
        %v1797 = vmul.f32 %v1739, %v1781
        %v1798 = vmul.f32 %v1744, %v1782
        %v1799 = vmul.f32 %v1749, %v1783
        %v1800 = vmul.f32 %v1754, %v1784
        %v1801 = vmul.f32 %v1759, %v1785
        %v1802 = vmul.f32 %v1764, %v1786
        %v1803 = vmul.f32 %v1769, %v1787
        %1804 = vrot.lane.b32.xlu0 %v376, 96
        %v1805 = vpop.permute.xlu0 %1804
        %1806 = vrot.lane.b32.xlu0 %v382, 96
        %v1807 = vpop.permute.xlu0 %1806
        %1808 = vrot.lane.b32.xlu0 %v388, 96
        %v1809 = vpop.permute.xlu0 %1808
        %1810 = vrot.lane.b32.xlu0 %v394, 96
        %v1811 = vpop.permute.xlu0 %1810
        %1812 = vrot.lane.b32.xlu0 %v400, 96
        %v1813 = vpop.permute.xlu0 %1812
        %1814 = vrot.lane.b32.xlu0 %v406, 96
        %v1815 = vpop.permute.xlu0 %1814
        %1816 = vrot.lane.b32.xlu0 %v412, 96
        %v1817 = vpop.permute.xlu0 %1816
        %1818 = vrot.lane.b32.xlu0 %v418, 96
        %v1819 = vpop.permute.xlu0 %1818
        %1820 = vrot.lane.b32.xlu0 %v424, 96
        %v1821 = vpop.permute.xlu0 %1820
        %1822 = vrot.lane.b32.xlu0 %v430, 96
        %v1823 = vpop.permute.xlu0 %1822
        %1824 = vrot.lane.b32.xlu0 %v436, 96
        %v1825 = vpop.permute.xlu0 %1824
        %1826 = vrot.lane.b32.xlu0 %v442, 96
        %v1827 = vpop.permute.xlu0 %1826
        %1828 = vrot.lane.b32.xlu0 %v448, 96
        %v1829 = vpop.permute.xlu0 %1828
        %1830 = vrot.lane.b32.xlu0 %v454, 96
        %v1831 = vpop.permute.xlu0 %1830
        %1832 = vrot.lane.b32.xlu0 %v460, 96
        %v1833 = vpop.permute.xlu0 %1832
        %1834 = vrot.lane.b32.xlu0 %v466, 96
        %v1835 = vpop.permute.xlu0 %1834
        %1836 = vrot.lane.b32.xlu0 %v378, 96
        %v1837 = vpop.permute.xlu0 %1836
        %1838 = vrot.lane.b32.xlu0 %v384, 96
        %v1839 = vpop.permute.xlu0 %1838
        %1840 = vrot.lane.b32.xlu0 %v390, 96
        %v1841 = vpop.permute.xlu0 %1840
        %1842 = vrot.lane.b32.xlu0 %v396, 96
        %v1843 = vpop.permute.xlu0 %1842
        %1844 = vrot.lane.b32.xlu0 %v402, 96
        %v1845 = vpop.permute.xlu0 %1844
        %1846 = vrot.lane.b32.xlu0 %v408, 96
        %v1847 = vpop.permute.xlu0 %1846
        %1848 = vrot.lane.b32.xlu0 %v414, 96
        %v1849 = vpop.permute.xlu0 %1848
        %1850 = vrot.lane.b32.xlu0 %v420, 96
        %v1851 = vpop.permute.xlu0 %1850
        %1852 = vrot.lane.b32.xlu0 %v426, 96
        %v1853 = vpop.permute.xlu0 %1852
        %1854 = vrot.lane.b32.xlu0 %v432, 96
        %v1855 = vpop.permute.xlu0 %1854
        %1856 = vrot.lane.b32.xlu0 %v438, 96
        %v1857 = vpop.permute.xlu0 %1856
        %1858 = vrot.lane.b32.xlu0 %v444, 96
        %v1859 = vpop.permute.xlu0 %1858
        %1860 = vrot.lane.b32.xlu0 %v450, 96
        %v1861 = vpop.permute.xlu0 %1860
        %1862 = vrot.lane.b32.xlu0 %v456, 96
        %v1863 = vpop.permute.xlu0 %1862
        %1864 = vrot.lane.b32.xlu0 %v462, 96
        %v1865 = vpop.permute.xlu0 %1864
        %1866 = vrot.lane.b32.xlu0 %v468, 96
        %v1867 = vpop.permute.xlu0 %1866
        %v1868 = vsel %vm615, %v1805, 0
        %v1870 = vsel %vm615, %v1807, 0
        %v1872 = vsel %vm615, %v1809, 0
        %v1874 = vsel %vm615, %v1811, 0
        %v1876 = vsel %vm615, %v1813, 0
        %v1878 = vsel %vm615, %v1815, 0
        %v1880 = vsel %vm615, %v1817, 0
        %v1882 = vsel %vm615, %v1819, 0
        %v1884 = vsel %vm615, %v1821, 0
        %v1886 = vsel %vm615, %v1823, 0
        %v1888 = vsel %vm615, %v1825, 0
        %v1890 = vsel %vm615, %v1827, 0
        %v1892 = vsel %vm615, %v1829, 0
        %v1894 = vsel %vm615, %v1831, 0
        %v1896 = vsel %vm615, %v1833, 0
        %v1898 = vsel %vm615, %v1835, 0
        %v1900 = vsel %vm615, %v1837, 0
        %v1902 = vsel %vm615, %v1839, 0
        %v1904 = vsel %vm615, %v1841, 0
        %v1906 = vsel %vm615, %v1843, 0
        %v1908 = vsel %vm615, %v1845, 0
        %v1910 = vsel %vm615, %v1847, 0
        %v1912 = vsel %vm615, %v1849, 0
        %v1914 = vsel %vm615, %v1851, 0
        %v1916 = vsel %vm615, %v1853, 0
        %v1918 = vsel %vm615, %v1855, 0
        %v1920 = vsel %vm615, %v1857, 0
        %v1922 = vsel %vm615, %v1859, 0
        %v1924 = vsel %vm615, %v1861, 0
        %v1926 = vsel %vm615, %v1863, 0
        %v1928 = vsel %vm615, %v1865, 0
        %v1930 = vsel %vm615, %v1867, 0
        %1932 = vmatprep.subr.mxu0 0.0
        %1933 = vmatpush1.xpose.msra.mxu0 %v1930
        %1934 = vmatprep.subr.mxu0 0.0
        %1935 = vmatpush1.xpose.msra.mxu0 %v1928
        %1936 = vmatprep.subr.mxu0 0.0
        %1937 = vmatpush1.xpose.msra.mxu0 %v1926
        %1938 = vmatprep.subr.mxu0 0.0
        %1939 = vmatpush1.xpose.msra.mxu0 %v1924
        %1940 = vmatprep.subr.mxu0 0.0
        %1941 = vmatpush1.xpose.msra.mxu0 %v1922
        %1942 = vmatprep.subr.mxu0 0.0
        %1943 = vmatpush1.xpose.msra.mxu0 %v1920
        %1944 = vmatprep.subr.mxu0 0.0
        %1945 = vmatpush1.xpose.msra.mxu0 %v1918
        %1946 = vmatprep.subr.mxu0 0.0
        %1947 = vmatpush1.xpose.msra.mxu0 %v1916
        %1948 = vmatprep.subr.mxu0 0.0
        %1949 = vmatpush1.xpose.msra.mxu0 %v1914
        %1950 = vmatprep.subr.mxu0 0.0
        %1951 = vmatpush1.xpose.msra.mxu0 %v1912
        %1952 = vmatprep.subr.mxu0 0.0
        %1953 = vmatpush1.xpose.msra.mxu0 %v1910
        %1954 = vmatprep.subr.mxu0 0.0
        %1955 = vmatpush1.xpose.msra.mxu0 %v1908
        %1956 = vmatprep.subr.mxu0 0.0
        %1957 = vmatpush1.xpose.msra.mxu0 %v1906
        %1958 = vmatprep.subr.mxu0 0.0
        %1959 = vmatpush1.xpose.msra.mxu0 %v1904
        %1960 = vmatprep.subr.mxu0 0.0
        %1961 = vmatpush1.xpose.msra.mxu0 %v1902
        %1962 = vmatprep.subr.mxu0 0.0
        %1963 = vmatpush1.xpose.msra.mxu0 %v1900
        %1964 = vmatprep.subr.mxu0 0.0
        %1965 = vmatpush2.xpose.msra.mxu0 0.0
        %1966 = vmatprep.subr.mxu0 0.0
        %1967 = vmatpush2.xpose.msra.mxu0 0.0
        %1968 = vmatprep.subr.mxu0 0.0
        %1969 = vmatpush2.xpose.msra.mxu0 0.0
        %1970 = vmatprep.subr.mxu0 0.0
        %1971 = vmatpush2.xpose.msra.mxu0 0.0
        %1972 = vmatprep.subr.mxu0 0.0
        %1973 = vmatpush2.xpose.msra.mxu0 0.0
        %1974 = vmatprep.subr.mxu0 0.0
        %1975 = vmatpush2.xpose.msra.mxu0 0.0
        %1976 = vmatprep.subr.mxu0 0.0
        %1977 = vmatpush2.xpose.msra.mxu0 0.0
        %1978 = vmatprep.subr.mxu0 0.0
        %1979 = vmatpush2.xpose.msra.mxu0 0.0
        %1980 = vmatprep.subr.mxu0 0.0
        %1981 = vmatpush2.xpose.msra.mxu0 0.0
        %1982 = vmatprep.subr.mxu0 0.0
        %1983 = vmatpush2.xpose.msra.mxu0 0.0
        %1984 = vmatprep.subr.mxu0 0.0
        %1985 = vmatpush2.xpose.msra.mxu0 0.0
        %1986 = vmatprep.subr.mxu0 0.0
        %1987 = vmatpush2.xpose.msra.mxu0 0.0
        %1988 = vmatprep.subr.mxu0 0.0
        %1989 = vmatpush2.xpose.msra.mxu0 0.0
        %1990 = vmatprep.subr.mxu0 0.0
        %1991 = vmatpush2.xpose.msra.mxu0 0.0
        %1992 = vmatprep.subr.mxu0 0.0
        %1993 = vmatpush2.xpose.msra.mxu0 0.0
        %1994 = vmatprep.subr.mxu0 0.0
        %1995 = vmatpush2.xpose.msra.mxu0 0.0
        %1996 = vmatprep.mubr.f32.mxu0 0.0
        %1997 = vmatmul.mubr.f32.gmra.mxu0 %v1868
        %v1998 = vpop.f32.mrf.mxu0
        %v1999 = vadd.f32 0.0, %v1998
        %v2000 = vpop.f32.mrf.mxu0
        %2001 = vmatprep.mubr.f32.mxu0 0.0
        %2002 = vmatmul.mubr.f32.gmra.mxu0 %v1870
        %v2003 = vpop.f32.mrf.mxu0
        %v2004 = vadd.f32 0.0, %v2003
        %v2005 = vpop.f32.mrf.mxu0
        %2006 = vmatprep.mubr.f32.mxu0 0.0
        %2007 = vmatmul.mubr.f32.gmra.mxu0 %v1872
        %v2008 = vpop.f32.mrf.mxu0
        %v2009 = vadd.f32 0.0, %v2008
        %v2010 = vpop.f32.mrf.mxu0
        %2011 = vmatprep.mubr.f32.mxu0 0.0
        %2012 = vmatmul.mubr.f32.gmra.mxu0 %v1874
        %v2013 = vpop.f32.mrf.mxu0
        %v2014 = vadd.f32 0.0, %v2013
        %v2015 = vpop.f32.mrf.mxu0
        %2016 = vmatprep.mubr.f32.mxu0 0.0
        %2017 = vmatmul.mubr.f32.gmra.mxu0 %v1876
        %v2018 = vpop.f32.mrf.mxu0
        %v2019 = vadd.f32 0.0, %v2018
        %v2020 = vpop.f32.mrf.mxu0
        %2021 = vmatprep.mubr.f32.mxu0 0.0
        %2022 = vmatmul.mubr.f32.gmra.mxu0 %v1878
        %v2023 = vpop.f32.mrf.mxu0
        %v2024 = vadd.f32 0.0, %v2023
        %v2025 = vpop.f32.mrf.mxu0
        %2026 = vmatprep.mubr.f32.mxu0 0.0
        %2027 = vmatmul.mubr.f32.gmra.mxu0 %v1880
        %v2028 = vpop.f32.mrf.mxu0
        %v2029 = vadd.f32 0.0, %v2028
        %v2030 = vpop.f32.mrf.mxu0
        %2031 = vmatprep.mubr.f32.mxu0 0.0
        %2032 = vmatmul.mubr.f32.gmra.mxu0 %v1882
        %v2033 = vpop.f32.mrf.mxu0
        %v2034 = vadd.f32 0.0, %v2033
        %v2035 = vpop.f32.mrf.mxu0
        %2036 = vmatprep.mubr.f32.mxu0 0.0
        %2037 = vmatmul.mubr.f32.gmra.mxu0 %v1884
        %v2038 = vpop.f32.mrf.mxu0
        %v2039 = vadd.f32 0.0, %v2038
        %v2040 = vpop.f32.mrf.mxu0
        %2041 = vmatprep.mubr.f32.mxu0 0.0
        %2042 = vmatmul.mubr.f32.gmra.mxu0 %v1886
        %v2043 = vpop.f32.mrf.mxu0
        %v2044 = vadd.f32 0.0, %v2043
        %v2045 = vpop.f32.mrf.mxu0
        %2046 = vmatprep.mubr.f32.mxu0 0.0
        %2047 = vmatmul.mubr.f32.gmra.mxu0 %v1888
        %v2048 = vpop.f32.mrf.mxu0
        %v2049 = vadd.f32 0.0, %v2048
        %v2050 = vpop.f32.mrf.mxu0
        %2051 = vmatprep.mubr.f32.mxu0 0.0
        %2052 = vmatmul.mubr.f32.gmra.mxu0 %v1890
        %v2053 = vpop.f32.mrf.mxu0
        %v2054 = vadd.f32 0.0, %v2053
        %v2055 = vpop.f32.mrf.mxu0
        %2056 = vmatprep.mubr.f32.mxu0 0.0
        %2057 = vmatmul.mubr.f32.gmra.mxu0 %v1892
        %v2058 = vpop.f32.mrf.mxu0
        %v2059 = vadd.f32 0.0, %v2058
        %v2060 = vpop.f32.mrf.mxu0
        %2061 = vmatprep.mubr.f32.mxu0 0.0
        %2062 = vmatmul.mubr.f32.gmra.mxu0 %v1894
        %v2063 = vpop.f32.mrf.mxu0
        %v2064 = vadd.f32 0.0, %v2063
        %v2065 = vpop.f32.mrf.mxu0
        %2066 = vmatprep.mubr.f32.mxu0 0.0
        %2067 = vmatmul.mubr.f32.gmra.mxu0 %v1896
        %v2068 = vpop.f32.mrf.mxu0
        %v2069 = vadd.f32 0.0, %v2068
        %v2070 = vpop.f32.mrf.mxu0
        %2071 = vmatprep.mubr.f32.mxu0 0.0
        %2072 = vmatmul.mubr.f32.gmra.mxu0 %v1898
        %v2073 = vpop.f32.mrf.mxu0
        %v2074 = vadd.f32 0.0, %v2073
        %v2075 = vpop.f32.mrf.mxu0
        %2076 = vdwg.mxu0
        %v2077 = vmul.f32 %v1999, 0.25
        %v2078 = vmul.f32 %v2004, 0.25
        %v2079 = vmul.f32 %v2009, 0.25
        %v2080 = vmul.f32 %v2014, 0.25
        %v2081 = vmul.f32 %v2019, 0.25
        %v2082 = vmul.f32 %v2024, 0.25
        %v2083 = vmul.f32 %v2029, 0.25
        %v2084 = vmul.f32 %v2034, 0.25
        %v2085 = vmul.f32 %v2039, 0.25
        %v2086 = vmul.f32 %v2044, 0.25
        %v2087 = vmul.f32 %v2049, 0.25
        %v2088 = vmul.f32 %v2054, 0.25
        %v2089 = vmul.f32 %v2059, 0.25
        %v2090 = vmul.f32 %v2064, 0.25
        %v2091 = vmul.f32 %v2069, 0.25
        %v2092 = vmul.f32 %v2074, 0.25
        %2093 = vmax.xlane.f32.xlu0 %v2077
        %v2094 = vpop.xlane.xlu0 %2093
        %2095 = vmax.xlane.f32.xlu0 %v2078
        %v2096 = vpop.xlane.xlu0 %2095
        %2097 = vmax.xlane.f32.xlu0 %v2079
        %v2098 = vpop.xlane.xlu0 %2097
        %2099 = vmax.xlane.f32.xlu0 %v2080
        %v2100 = vpop.xlane.xlu0 %2099
        %2101 = vmax.xlane.f32.xlu0 %v2081
        %v2102 = vpop.xlane.xlu0 %2101
        %2103 = vmax.xlane.f32.xlu0 %v2082
        %v2104 = vpop.xlane.xlu0 %2103
        %2105 = vmax.xlane.f32.xlu0 %v2083
        %v2106 = vpop.xlane.xlu0 %2105
        %2107 = vmax.xlane.f32.xlu0 %v2084
        %v2108 = vpop.xlane.xlu0 %2107
        %2109 = vmax.xlane.f32.xlu0 %v2085
        %v2110 = vpop.xlane.xlu0 %2109
        %2111 = vmax.xlane.f32.xlu0 %v2086
        %v2112 = vpop.xlane.xlu0 %2111
        %2113 = vmax.xlane.f32.xlu0 %v2087
        %v2114 = vpop.xlane.xlu0 %2113
        %2115 = vmax.xlane.f32.xlu0 %v2088
        %v2116 = vpop.xlane.xlu0 %2115
        %2117 = vmax.xlane.f32.xlu0 %v2089
        %v2118 = vpop.xlane.xlu0 %2117
        %2119 = vmax.xlane.f32.xlu0 %v2090
        %v2120 = vpop.xlane.xlu0 %2119
        %2121 = vmax.xlane.f32.xlu0 %v2091
        %v2122 = vpop.xlane.xlu0 %2121
        %2123 = vmax.xlane.f32.xlu0 %v2092
        %v2124 = vpop.xlane.xlu0 %2123
        %v2125 = vsub.f32 %v2077, %v2094
        %v2126 = vsub.f32 %v2078, %v2096
        %v2127 = vsub.f32 %v2079, %v2098
        %v2128 = vsub.f32 %v2080, %v2100
        %v2129 = vsub.f32 %v2081, %v2102
        %v2130 = vsub.f32 %v2082, %v2104
        %v2131 = vsub.f32 %v2083, %v2106
        %v2132 = vsub.f32 %v2084, %v2108
        %v2133 = vsub.f32 %v2085, %v2110
        %v2134 = vsub.f32 %v2086, %v2112
        %v2135 = vsub.f32 %v2087, %v2114
        %v2136 = vsub.f32 %v2088, %v2116
        %v2137 = vsub.f32 %v2089, %v2118
        %v2138 = vsub.f32 %v2090, %v2120
        %v2139 = vsub.f32 %v2091, %v2122
        %v2140 = vsub.f32 %v2092, %v2124
        %v2141 = vmul.f32 %v2125, 1.442695
        %v2142 = vpow.pop %v2141
        %v2143 = vmul.f32 %v2126, 1.442695
        %v2144 = vpow.pop %v2143
        %v2145 = vmul.f32 %v2127, 1.442695
        %v2146 = vpow.pop %v2145
        %v2147 = vmul.f32 %v2128, 1.442695
        %v2148 = vpow.pop %v2147
        %v2149 = vmul.f32 %v2129, 1.442695
        %v2150 = vpow.pop %v2149
        %v2151 = vmul.f32 %v2130, 1.442695
        %v2152 = vpow.pop %v2151
        %v2153 = vmul.f32 %v2131, 1.442695
        %v2154 = vpow.pop %v2153
        %v2155 = vmul.f32 %v2132, 1.442695
        %v2156 = vpow.pop %v2155
        %v2157 = vmul.f32 %v2133, 1.442695
        %v2158 = vpow.pop %v2157
        %v2159 = vmul.f32 %v2134, 1.442695
        %v2160 = vpow.pop %v2159
        %v2161 = vmul.f32 %v2135, 1.442695
        %v2162 = vpow.pop %v2161
        %v2163 = vmul.f32 %v2136, 1.442695
        %v2164 = vpow.pop %v2163
        %v2165 = vmul.f32 %v2137, 1.442695
        %v2166 = vpow.pop %v2165
        %v2167 = vmul.f32 %v2138, 1.442695
        %v2168 = vpow.pop %v2167
        %v2169 = vmul.f32 %v2139, 1.442695
        %v2170 = vpow.pop %v2169
        %v2171 = vmul.f32 %v2140, 1.442695
        %v2172 = vpow.pop %v2171
        %2173 = vadd.xlane.f32.xlu0 %v2142
        %v2174 = vpop.xlane.xlu0 %2173
        %2175 = vadd.xlane.f32.xlu0 %v2144
        %v2176 = vpop.xlane.xlu0 %2175
        %2177 = vadd.xlane.f32.xlu0 %v2146
        %v2178 = vpop.xlane.xlu0 %2177
        %2179 = vadd.xlane.f32.xlu0 %v2148
        %v2180 = vpop.xlane.xlu0 %2179
        %2181 = vadd.xlane.f32.xlu0 %v2150
        %v2182 = vpop.xlane.xlu0 %2181
        %2183 = vadd.xlane.f32.xlu0 %v2152
        %v2184 = vpop.xlane.xlu0 %2183
        %2185 = vadd.xlane.f32.xlu0 %v2154
        %v2186 = vpop.xlane.xlu0 %2185
        %2187 = vadd.xlane.f32.xlu0 %v2156
        %v2188 = vpop.xlane.xlu0 %2187
        %2189 = vadd.xlane.f32.xlu0 %v2158
        %v2190 = vpop.xlane.xlu0 %2189
        %2191 = vadd.xlane.f32.xlu0 %v2160
        %v2192 = vpop.xlane.xlu0 %2191
        %2193 = vadd.xlane.f32.xlu0 %v2162
        %v2194 = vpop.xlane.xlu0 %2193
        %2195 = vadd.xlane.f32.xlu0 %v2164
        %v2196 = vpop.xlane.xlu0 %2195
        %2197 = vadd.xlane.f32.xlu0 %v2166
        %v2198 = vpop.xlane.xlu0 %2197
        %2199 = vadd.xlane.f32.xlu0 %v2168
        %v2200 = vpop.xlane.xlu0 %2199
        %2201 = vadd.xlane.f32.xlu0 %v2170
        %v2202 = vpop.xlane.xlu0 %2201
        %2203 = vadd.xlane.f32.xlu0 %v2172
        %v2204 = vpop.xlane.xlu0 %2203
        %2205 = vrot.lane.b32.xlu0 %v537, 96
        %v2206 = vpop.permute.xlu0 %2205
        %2207 = vrot.lane.b32.xlu0 %v542, 96
        %v2208 = vpop.permute.xlu0 %2207
        %2209 = vrot.lane.b32.xlu0 %v547, 96
        %v2210 = vpop.permute.xlu0 %2209
        %2211 = vrot.lane.b32.xlu0 %v552, 96
        %v2212 = vpop.permute.xlu0 %2211
        %2213 = vrot.lane.b32.xlu0 %v557, 96
        %v2214 = vpop.permute.xlu0 %2213
        %2215 = vrot.lane.b32.xlu0 %v562, 96
        %v2216 = vpop.permute.xlu0 %2215
        %2217 = vrot.lane.b32.xlu0 %v567, 96
        %v2218 = vpop.permute.xlu0 %2217
        %2219 = vrot.lane.b32.xlu0 %v572, 96
        %v2220 = vpop.permute.xlu0 %2219
        %2221 = vrot.lane.b32.xlu0 %v577, 96
        %v2222 = vpop.permute.xlu0 %2221
        %2223 = vrot.lane.b32.xlu0 %v582, 96
        %v2224 = vpop.permute.xlu0 %2223
        %2225 = vrot.lane.b32.xlu0 %v587, 96
        %v2226 = vpop.permute.xlu0 %2225
        %2227 = vrot.lane.b32.xlu0 %v592, 96
        %v2228 = vpop.permute.xlu0 %2227
        %2229 = vrot.lane.b32.xlu0 %v597, 96
        %v2230 = vpop.permute.xlu0 %2229
        %2231 = vrot.lane.b32.xlu0 %v602, 96
        %v2232 = vpop.permute.xlu0 %2231
        %2233 = vrot.lane.b32.xlu0 %v607, 96
        %v2234 = vpop.permute.xlu0 %2233
        %2235 = vrot.lane.b32.xlu0 %v612, 96
        %v2236 = vpop.permute.xlu0 %2235
        %2253 = vmatprep.subr.mxu0 0.0
        %2254 = vmatpush1.msra.mxu0 %v2236
        %2255 = vmatprep.subr.mxu0 0.0
        %2256 = vmatpush1.msra.mxu0 %v2234
        %2257 = vmatprep.subr.mxu0 0.0
        %2258 = vmatpush1.msra.mxu0 %v2232
        %2259 = vmatprep.subr.mxu0 0.0
        %2260 = vmatpush1.msra.mxu0 %v2230
        %2261 = vmatprep.subr.mxu0 0.0
        %2262 = vmatpush1.msra.mxu0 %v2228
        %2263 = vmatprep.subr.mxu0 0.0
        %2264 = vmatpush1.msra.mxu0 %v2226
        %2265 = vmatprep.subr.mxu0 0.0
        %2266 = vmatpush1.msra.mxu0 %v2224
        %2267 = vmatprep.subr.mxu0 0.0
        %2268 = vmatpush1.msra.mxu0 %v2222
        %2269 = vmatprep.subr.mxu0 0.0
        %2270 = vmatpush1.msra.mxu0 %v2220
        %2271 = vmatprep.subr.mxu0 0.0
        %2272 = vmatpush1.msra.mxu0 %v2218
        %2273 = vmatprep.subr.mxu0 0.0
        %2274 = vmatpush1.msra.mxu0 %v2216
        %2275 = vmatprep.subr.mxu0 0.0
        %2276 = vmatpush1.msra.mxu0 %v2214
        %2277 = vmatprep.subr.mxu0 0.0
        %2278 = vmatpush1.msra.mxu0 %v2212
        %2279 = vmatprep.subr.mxu0 0.0
        %2280 = vmatpush1.msra.mxu0 %v2210
        %2281 = vmatprep.subr.mxu0 0.0
        %2282 = vmatpush1.msra.mxu0 %v2208
        %2283 = vmatprep.subr.mxu0 0.0
        %2284 = vmatpush1.msra.mxu0 %v2206
        %2285 = vmatprep.subr.mxu0 0.0
        %2286 = vmatpush2.msra.mxu0 0.0
        %2287 = vmatprep.subr.mxu0 0.0
        %2288 = vmatpush2.msra.mxu0 0.0
        %2289 = vmatprep.subr.mxu0 0.0
        %2290 = vmatpush2.msra.mxu0 0.0
        %2291 = vmatprep.subr.mxu0 0.0
        %2292 = vmatpush2.msra.mxu0 0.0
        %2293 = vmatprep.subr.mxu0 0.0
        %2294 = vmatpush2.msra.mxu0 0.0
        %2295 = vmatprep.subr.mxu0 0.0
        %2296 = vmatpush2.msra.mxu0 0.0
        %2297 = vmatprep.subr.mxu0 0.0
        %2298 = vmatpush2.msra.mxu0 0.0
        %2299 = vmatprep.subr.mxu0 0.0
        %2300 = vmatpush2.msra.mxu0 0.0
        %2301 = vmatprep.subr.mxu0 0.0
        %2302 = vmatpush2.msra.mxu0 0.0
        %2303 = vmatprep.subr.mxu0 0.0
        %2304 = vmatpush2.msra.mxu0 0.0
        %2305 = vmatprep.subr.mxu0 0.0
        %2306 = vmatpush2.msra.mxu0 0.0
        %2307 = vmatprep.subr.mxu0 0.0
        %2308 = vmatpush2.msra.mxu0 0.0
        %2309 = vmatprep.subr.mxu0 0.0
        %2310 = vmatpush2.msra.mxu0 0.0
        %2311 = vmatprep.subr.mxu0 0.0
        %2312 = vmatpush2.msra.mxu0 0.0
        %2313 = vmatprep.subr.mxu0 0.0
        %2314 = vmatpush2.msra.mxu0 0.0
        %2315 = vmatprep.subr.mxu0 0.0
        %2316 = vmatpush2.msra.mxu0 0.0
        %2317 = vmatprep.mubr.f32.mxu0 0.0
        %2318 = vmatmul.mubr.f32.gmra.mxu0 %v2142
        %v2319 = vpop.f32.mrf.mxu0
        %v2320 = vadd.f32 0.0, %v2319
        %v2321 = vpop.f32.mrf.mxu0
        %2322 = vmatprep.mubr.f32.mxu0 0.0
        %2323 = vmatmul.mubr.f32.gmra.mxu0 %v2144
        %v2324 = vpop.f32.mrf.mxu0
        %v2325 = vadd.f32 0.0, %v2324
        %v2326 = vpop.f32.mrf.mxu0
        %2327 = vmatprep.mubr.f32.mxu0 0.0
        %2328 = vmatmul.mubr.f32.gmra.mxu0 %v2146
        %v2329 = vpop.f32.mrf.mxu0
        %v2330 = vadd.f32 0.0, %v2329
        %v2331 = vpop.f32.mrf.mxu0
        %2332 = vmatprep.mubr.f32.mxu0 0.0
        %2333 = vmatmul.mubr.f32.gmra.mxu0 %v2148
        %v2334 = vpop.f32.mrf.mxu0
        %v2335 = vadd.f32 0.0, %v2334
        %v2336 = vpop.f32.mrf.mxu0
        %2337 = vmatprep.mubr.f32.mxu0 0.0
        %2338 = vmatmul.mubr.f32.gmra.mxu0 %v2150
        %v2339 = vpop.f32.mrf.mxu0
        %v2340 = vadd.f32 0.0, %v2339
        %v2341 = vpop.f32.mrf.mxu0
        %2342 = vmatprep.mubr.f32.mxu0 0.0
        %2343 = vmatmul.mubr.f32.gmra.mxu0 %v2152
        %v2344 = vpop.f32.mrf.mxu0
        %v2345 = vadd.f32 0.0, %v2344
        %v2346 = vpop.f32.mrf.mxu0
        %2347 = vmatprep.mubr.f32.mxu0 0.0
        %2348 = vmatmul.mubr.f32.gmra.mxu0 %v2154
        %v2349 = vpop.f32.mrf.mxu0
        %v2350 = vadd.f32 0.0, %v2349
        %v2351 = vpop.f32.mrf.mxu0
        %2352 = vmatprep.mubr.f32.mxu0 0.0
        %2353 = vmatmul.mubr.f32.gmra.mxu0 %v2156
        %v2354 = vpop.f32.mrf.mxu0
        %v2355 = vadd.f32 0.0, %v2354
        %v2356 = vpop.f32.mrf.mxu0
        %2357 = vmatprep.mubr.f32.mxu0 0.0
        %2358 = vmatmul.mubr.f32.gmra.mxu0 %v2158
        %v2359 = vpop.f32.mrf.mxu0
        %v2360 = vadd.f32 0.0, %v2359
        %v2361 = vpop.f32.mrf.mxu0
        %2362 = vmatprep.mubr.f32.mxu0 0.0
        %2363 = vmatmul.mubr.f32.gmra.mxu0 %v2160
        %v2364 = vpop.f32.mrf.mxu0
        %v2365 = vadd.f32 0.0, %v2364
        %v2366 = vpop.f32.mrf.mxu0
        %2367 = vmatprep.mubr.f32.mxu0 0.0
        %2368 = vmatmul.mubr.f32.gmra.mxu0 %v2162
        %v2369 = vpop.f32.mrf.mxu0
        %v2370 = vadd.f32 0.0, %v2369
        %v2371 = vpop.f32.mrf.mxu0
        %2372 = vmatprep.mubr.f32.mxu0 0.0
        %2373 = vmatmul.mubr.f32.gmra.mxu0 %v2164
        %v2374 = vpop.f32.mrf.mxu0
        %v2375 = vadd.f32 0.0, %v2374
        %v2376 = vpop.f32.mrf.mxu0
        %2377 = vmatprep.mubr.f32.mxu0 0.0
        %2378 = vmatmul.mubr.f32.gmra.mxu0 %v2166
        %v2379 = vpop.f32.mrf.mxu0
        %v2380 = vadd.f32 0.0, %v2379
        %v2381 = vpop.f32.mrf.mxu0
        %2382 = vmatprep.mubr.f32.mxu0 0.0
        %2383 = vmatmul.mubr.f32.gmra.mxu0 %v2168
        %v2384 = vpop.f32.mrf.mxu0
        %v2385 = vadd.f32 0.0, %v2384
        %v2386 = vpop.f32.mrf.mxu0
        %2387 = vmatprep.mubr.f32.mxu0 0.0
        %2388 = vmatmul.mubr.f32.gmra.mxu0 %v2170
        %v2389 = vpop.f32.mrf.mxu0
        %v2390 = vadd.f32 0.0, %v2389
        %v2391 = vpop.f32.mrf.mxu0
        %2392 = vmatprep.mubr.f32.mxu0 0.0
        %2393 = vmatmul.mubr.f32.gmra.mxu0 %v2172
        %v2394 = vpop.f32.mrf.mxu0
        %v2395 = vadd.f32 0.0, %v2394
        %v2396 = vpop.f32.mrf.mxu0
        %2397 = vdwg.mxu0
        %v2398 = vrcp.pop %v2174
        %v2399 = vrcp.pop %v2176
        %v2400 = vrcp.pop %v2178
        %v2401 = vrcp.pop %v2180
        %v2402 = vrcp.pop %v2182
        %v2403 = vrcp.pop %v2184
        %v2404 = vrcp.pop %v2186
        %v2405 = vrcp.pop %v2188
        %v2406 = vrcp.pop %v2190
        %v2407 = vrcp.pop %v2192
        %v2408 = vrcp.pop %v2194
        %v2409 = vrcp.pop %v2196
        %v2410 = vrcp.pop %v2198
        %v2411 = vrcp.pop %v2200
        %v2412 = vrcp.pop %v2202
        %v2413 = vrcp.pop %v2204
        %v2414 = vmul.f32 %v2320, %v2398
        %v2415 = vmul.f32 %v2325, %v2399
        %v2416 = vmul.f32 %v2330, %v2400
        %v2417 = vmul.f32 %v2335, %v2401
        %v2418 = vmul.f32 %v2340, %v2402
        %v2419 = vmul.f32 %v2345, %v2403
        %v2420 = vmul.f32 %v2350, %v2404
        %v2421 = vmul.f32 %v2355, %v2405
        %v2422 = vmul.f32 %v2360, %v2406
        %v2423 = vmul.f32 %v2365, %v2407
        %v2424 = vmul.f32 %v2370, %v2408
        %v2425 = vmul.f32 %v2375, %v2409
        %v2426 = vmul.f32 %v2380, %v2410
        %v2427 = vmul.f32 %v2385, %v2411
        %v2428 = vmul.f32 %v2390, %v2412
        %v2429 = vmul.f32 %v2395, %v2413
        %2430 = vrot.lane.b32.xlu0 %v376, 80
        %v2431 = vpop.permute.xlu0 %2430
        %2432 = vrot.lane.b32.xlu0 %v382, 80
        %v2433 = vpop.permute.xlu0 %2432
        %2434 = vrot.lane.b32.xlu0 %v388, 80
        %v2435 = vpop.permute.xlu0 %2434
        %2436 = vrot.lane.b32.xlu0 %v394, 80
        %v2437 = vpop.permute.xlu0 %2436
        %2438 = vrot.lane.b32.xlu0 %v400, 80
        %v2439 = vpop.permute.xlu0 %2438
        %2440 = vrot.lane.b32.xlu0 %v406, 80
        %v2441 = vpop.permute.xlu0 %2440
        %2442 = vrot.lane.b32.xlu0 %v412, 80
        %v2443 = vpop.permute.xlu0 %2442
        %2444 = vrot.lane.b32.xlu0 %v418, 80
        %v2445 = vpop.permute.xlu0 %2444
        %2446 = vrot.lane.b32.xlu0 %v424, 80
        %v2447 = vpop.permute.xlu0 %2446
        %2448 = vrot.lane.b32.xlu0 %v430, 80
        %v2449 = vpop.permute.xlu0 %2448
        %2450 = vrot.lane.b32.xlu0 %v436, 80
        %v2451 = vpop.permute.xlu0 %2450
        %2452 = vrot.lane.b32.xlu0 %v442, 80
        %v2453 = vpop.permute.xlu0 %2452
        %2454 = vrot.lane.b32.xlu0 %v448, 80
        %v2455 = vpop.permute.xlu0 %2454
        %2456 = vrot.lane.b32.xlu0 %v454, 80
        %v2457 = vpop.permute.xlu0 %2456
        %2458 = vrot.lane.b32.xlu0 %v460, 80
        %v2459 = vpop.permute.xlu0 %2458
        %2460 = vrot.lane.b32.xlu0 %v466, 80
        %v2461 = vpop.permute.xlu0 %2460
        %2462 = vrot.lane.b32.xlu0 %v378, 80
        %v2463 = vpop.permute.xlu0 %2462
        %2464 = vrot.lane.b32.xlu0 %v384, 80
        %v2465 = vpop.permute.xlu0 %2464
        %2466 = vrot.lane.b32.xlu0 %v390, 80
        %v2467 = vpop.permute.xlu0 %2466
        %2468 = vrot.lane.b32.xlu0 %v396, 80
        %v2469 = vpop.permute.xlu0 %2468
        %2470 = vrot.lane.b32.xlu0 %v402, 80
        %v2471 = vpop.permute.xlu0 %2470
        %2472 = vrot.lane.b32.xlu0 %v408, 80
        %v2473 = vpop.permute.xlu0 %2472
        %2474 = vrot.lane.b32.xlu0 %v414, 80
        %v2475 = vpop.permute.xlu0 %2474
        %2476 = vrot.lane.b32.xlu0 %v420, 80
        %v2477 = vpop.permute.xlu0 %2476
        %2478 = vrot.lane.b32.xlu0 %v426, 80
        %v2479 = vpop.permute.xlu0 %2478
        %2480 = vrot.lane.b32.xlu0 %v432, 80
        %v2481 = vpop.permute.xlu0 %2480
        %2482 = vrot.lane.b32.xlu0 %v438, 80
        %v2483 = vpop.permute.xlu0 %2482
        %2484 = vrot.lane.b32.xlu0 %v444, 80
        %v2485 = vpop.permute.xlu0 %2484
        %2486 = vrot.lane.b32.xlu0 %v450, 80
        %v2487 = vpop.permute.xlu0 %2486
        %2488 = vrot.lane.b32.xlu0 %v456, 80
        %v2489 = vpop.permute.xlu0 %2488
        %2490 = vrot.lane.b32.xlu0 %v462, 80
        %v2491 = vpop.permute.xlu0 %2490
        %2492 = vrot.lane.b32.xlu0 %v468, 80
        %v2493 = vpop.permute.xlu0 %2492
        %v2494 = vsel %vm615, %v2431, 0
        %v2496 = vsel %vm615, %v2433, 0
        %v2498 = vsel %vm615, %v2435, 0
        %v2500 = vsel %vm615, %v2437, 0
        %v2502 = vsel %vm615, %v2439, 0
        %v2504 = vsel %vm615, %v2441, 0
        %v2506 = vsel %vm615, %v2443, 0
        %v2508 = vsel %vm615, %v2445, 0
        %v2510 = vsel %vm615, %v2447, 0
        %v2512 = vsel %vm615, %v2449, 0
        %v2514 = vsel %vm615, %v2451, 0
        %v2516 = vsel %vm615, %v2453, 0
        %v2518 = vsel %vm615, %v2455, 0
        %v2520 = vsel %vm615, %v2457, 0
        %v2522 = vsel %vm615, %v2459, 0
        %v2524 = vsel %vm615, %v2461, 0
        %v2526 = vsel %vm615, %v2463, 0
        %v2528 = vsel %vm615, %v2465, 0
        %v2530 = vsel %vm615, %v2467, 0
        %v2532 = vsel %vm615, %v2469, 0
        %v2534 = vsel %vm615, %v2471, 0
        %v2536 = vsel %vm615, %v2473, 0
        %v2538 = vsel %vm615, %v2475, 0
        %v2540 = vsel %vm615, %v2477, 0
        %v2542 = vsel %vm615, %v2479, 0
        %v2544 = vsel %vm615, %v2481, 0
        %v2546 = vsel %vm615, %v2483, 0
        %v2548 = vsel %vm615, %v2485, 0
        %v2550 = vsel %vm615, %v2487, 0
        %v2552 = vsel %vm615, %v2489, 0
        %v2554 = vsel %vm615, %v2491, 0
        %v2556 = vsel %vm615, %v2493, 0
        %2558 = vmatprep.subr.mxu0 0.0
        %2559 = vmatpush1.xpose.msra.mxu0 %v2556
        %2560 = vmatprep.subr.mxu0 0.0
        %2561 = vmatpush1.xpose.msra.mxu0 %v2554
        %2562 = vmatprep.subr.mxu0 0.0
        %2563 = vmatpush1.xpose.msra.mxu0 %v2552
        %2564 = vmatprep.subr.mxu0 0.0
        %2565 = vmatpush1.xpose.msra.mxu0 %v2550
        %2566 = vmatprep.subr.mxu0 0.0
        %2567 = vmatpush1.xpose.msra.mxu0 %v2548
        %2568 = vmatprep.subr.mxu0 0.0
        %2569 = vmatpush1.xpose.msra.mxu0 %v2546
        %2570 = vmatprep.subr.mxu0 0.0
        %2571 = vmatpush1.xpose.msra.mxu0 %v2544
        %2572 = vmatprep.subr.mxu0 0.0
        %2573 = vmatpush1.xpose.msra.mxu0 %v2542
        %2574 = vmatprep.subr.mxu0 0.0
        %2575 = vmatpush1.xpose.msra.mxu0 %v2540
        %2576 = vmatprep.subr.mxu0 0.0
        %2577 = vmatpush1.xpose.msra.mxu0 %v2538
        %2578 = vmatprep.subr.mxu0 0.0
        %2579 = vmatpush1.xpose.msra.mxu0 %v2536
        %2580 = vmatprep.subr.mxu0 0.0
        %2581 = vmatpush1.xpose.msra.mxu0 %v2534
        %2582 = vmatprep.subr.mxu0 0.0
        %2583 = vmatpush1.xpose.msra.mxu0 %v2532
        %2584 = vmatprep.subr.mxu0 0.0
        %2585 = vmatpush1.xpose.msra.mxu0 %v2530
        %2586 = vmatprep.subr.mxu0 0.0
        %2587 = vmatpush1.xpose.msra.mxu0 %v2528
        %2588 = vmatprep.subr.mxu0 0.0
        %2589 = vmatpush1.xpose.msra.mxu0 %v2526
        %2590 = vmatprep.subr.mxu0 0.0
        %2591 = vmatpush2.xpose.msra.mxu0 0.0
        %2592 = vmatprep.subr.mxu0 0.0
        %2593 = vmatpush2.xpose.msra.mxu0 0.0
        %2594 = vmatprep.subr.mxu0 0.0
        %2595 = vmatpush2.xpose.msra.mxu0 0.0
        %2596 = vmatprep.subr.mxu0 0.0
        %2597 = vmatpush2.xpose.msra.mxu0 0.0
        %2598 = vmatprep.subr.mxu0 0.0
        %2599 = vmatpush2.xpose.msra.mxu0 0.0
        %2600 = vmatprep.subr.mxu0 0.0
        %2601 = vmatpush2.xpose.msra.mxu0 0.0
        %2602 = vmatprep.subr.mxu0 0.0
        %2603 = vmatpush2.xpose.msra.mxu0 0.0
        %2604 = vmatprep.subr.mxu0 0.0
        %2605 = vmatpush2.xpose.msra.mxu0 0.0
        %2606 = vmatprep.subr.mxu0 0.0
        %2607 = vmatpush2.xpose.msra.mxu0 0.0
        %2608 = vmatprep.subr.mxu0 0.0
        %2609 = vmatpush2.xpose.msra.mxu0 0.0
        %2610 = vmatprep.subr.mxu0 0.0
        %2611 = vmatpush2.xpose.msra.mxu0 0.0
        %2612 = vmatprep.subr.mxu0 0.0
        %2613 = vmatpush2.xpose.msra.mxu0 0.0
        %2614 = vmatprep.subr.mxu0 0.0
        %2615 = vmatpush2.xpose.msra.mxu0 0.0
        %2616 = vmatprep.subr.mxu0 0.0
        %2617 = vmatpush2.xpose.msra.mxu0 0.0
        %2618 = vmatprep.subr.mxu0 0.0
        %2619 = vmatpush2.xpose.msra.mxu0 0.0
        %2620 = vmatprep.subr.mxu0 0.0
        %2621 = vmatpush2.xpose.msra.mxu0 0.0
        %2622 = vmatprep.mubr.f32.mxu0 0.0
        %2623 = vmatmul.mubr.f32.gmra.mxu0 %v2494
        %v2624 = vpop.f32.mrf.mxu0
        %v2625 = vadd.f32 0.0, %v2624
        %v2626 = vpop.f32.mrf.mxu0
        %2627 = vmatprep.mubr.f32.mxu0 0.0
        %2628 = vmatmul.mubr.f32.gmra.mxu0 %v2496
        %v2629 = vpop.f32.mrf.mxu0
        %v2630 = vadd.f32 0.0, %v2629
        %v2631 = vpop.f32.mrf.mxu0
        %2632 = vmatprep.mubr.f32.mxu0 0.0
        %2633 = vmatmul.mubr.f32.gmra.mxu0 %v2498
        %v2634 = vpop.f32.mrf.mxu0
        %v2635 = vadd.f32 0.0, %v2634
        %v2636 = vpop.f32.mrf.mxu0
        %2637 = vmatprep.mubr.f32.mxu0 0.0
        %2638 = vmatmul.mubr.f32.gmra.mxu0 %v2500
        %v2639 = vpop.f32.mrf.mxu0
        %v2640 = vadd.f32 0.0, %v2639
        %v2641 = vpop.f32.mrf.mxu0
        %2642 = vmatprep.mubr.f32.mxu0 0.0
        %2643 = vmatmul.mubr.f32.gmra.mxu0 %v2502
        %v2644 = vpop.f32.mrf.mxu0
        %v2645 = vadd.f32 0.0, %v2644
        %v2646 = vpop.f32.mrf.mxu0
        %2647 = vmatprep.mubr.f32.mxu0 0.0
        %2648 = vmatmul.mubr.f32.gmra.mxu0 %v2504
        %v2649 = vpop.f32.mrf.mxu0
        %v2650 = vadd.f32 0.0, %v2649
        %v2651 = vpop.f32.mrf.mxu0
        %2652 = vmatprep.mubr.f32.mxu0 0.0
        %2653 = vmatmul.mubr.f32.gmra.mxu0 %v2506
        %v2654 = vpop.f32.mrf.mxu0
        %v2655 = vadd.f32 0.0, %v2654
        %v2656 = vpop.f32.mrf.mxu0
        %2657 = vmatprep.mubr.f32.mxu0 0.0
        %2658 = vmatmul.mubr.f32.gmra.mxu0 %v2508
        %v2659 = vpop.f32.mrf.mxu0
        %v2660 = vadd.f32 0.0, %v2659
        %v2661 = vpop.f32.mrf.mxu0
        %2662 = vmatprep.mubr.f32.mxu0 0.0
        %2663 = vmatmul.mubr.f32.gmra.mxu0 %v2510
        %v2664 = vpop.f32.mrf.mxu0
        %v2665 = vadd.f32 0.0, %v2664
        %v2666 = vpop.f32.mrf.mxu0
        %2667 = vmatprep.mubr.f32.mxu0 0.0
        %2668 = vmatmul.mubr.f32.gmra.mxu0 %v2512
        %v2669 = vpop.f32.mrf.mxu0
        %v2670 = vadd.f32 0.0, %v2669
        %v2671 = vpop.f32.mrf.mxu0
        %2672 = vmatprep.mubr.f32.mxu0 0.0
        %2673 = vmatmul.mubr.f32.gmra.mxu0 %v2514
        %v2674 = vpop.f32.mrf.mxu0
        %v2675 = vadd.f32 0.0, %v2674
        %v2676 = vpop.f32.mrf.mxu0
        %2677 = vmatprep.mubr.f32.mxu0 0.0
        %2678 = vmatmul.mubr.f32.gmra.mxu0 %v2516
        %v2679 = vpop.f32.mrf.mxu0
        %v2680 = vadd.f32 0.0, %v2679
        %v2681 = vpop.f32.mrf.mxu0
        %2682 = vmatprep.mubr.f32.mxu0 0.0
        %2683 = vmatmul.mubr.f32.gmra.mxu0 %v2518
        %v2684 = vpop.f32.mrf.mxu0
        %v2685 = vadd.f32 0.0, %v2684
        %v2686 = vpop.f32.mrf.mxu0
        %2687 = vmatprep.mubr.f32.mxu0 0.0
        %2688 = vmatmul.mubr.f32.gmra.mxu0 %v2520
        %v2689 = vpop.f32.mrf.mxu0
        %v2690 = vadd.f32 0.0, %v2689
        %v2691 = vpop.f32.mrf.mxu0
        %2692 = vmatprep.mubr.f32.mxu0 0.0
        %2693 = vmatmul.mubr.f32.gmra.mxu0 %v2522
        %v2694 = vpop.f32.mrf.mxu0
        %v2695 = vadd.f32 0.0, %v2694
        %v2696 = vpop.f32.mrf.mxu0
        %2697 = vmatprep.mubr.f32.mxu0 0.0
        %2698 = vmatmul.mubr.f32.gmra.mxu0 %v2524
        %v2699 = vpop.f32.mrf.mxu0
        %v2700 = vadd.f32 0.0, %v2699
        %v2701 = vpop.f32.mrf.mxu0
        %2702 = vdwg.mxu0
        %v2703 = vmul.f32 %v2625, 0.25
        %v2704 = vmul.f32 %v2630, 0.25
        %v2705 = vmul.f32 %v2635, 0.25
        %v2706 = vmul.f32 %v2640, 0.25
        %v2707 = vmul.f32 %v2645, 0.25
        %v2708 = vmul.f32 %v2650, 0.25
        %v2709 = vmul.f32 %v2655, 0.25
        %v2710 = vmul.f32 %v2660, 0.25
        %v2711 = vmul.f32 %v2665, 0.25
        %v2712 = vmul.f32 %v2670, 0.25
        %v2713 = vmul.f32 %v2675, 0.25
        %v2714 = vmul.f32 %v2680, 0.25
        %v2715 = vmul.f32 %v2685, 0.25
        %v2716 = vmul.f32 %v2690, 0.25
        %v2717 = vmul.f32 %v2695, 0.25
        %v2718 = vmul.f32 %v2700, 0.25
        %2719 = vmax.xlane.f32.xlu0 %v2703
        %v2720 = vpop.xlane.xlu0 %2719
        %2721 = vmax.xlane.f32.xlu0 %v2704
        %v2722 = vpop.xlane.xlu0 %2721
        %2723 = vmax.xlane.f32.xlu0 %v2705
        %v2724 = vpop.xlane.xlu0 %2723
        %2725 = vmax.xlane.f32.xlu0 %v2706
        %v2726 = vpop.xlane.xlu0 %2725
        %2727 = vmax.xlane.f32.xlu0 %v2707
        %v2728 = vpop.xlane.xlu0 %2727
        %2729 = vmax.xlane.f32.xlu0 %v2708
        %v2730 = vpop.xlane.xlu0 %2729
        %2731 = vmax.xlane.f32.xlu0 %v2709
        %v2732 = vpop.xlane.xlu0 %2731
        %2733 = vmax.xlane.f32.xlu0 %v2710
        %v2734 = vpop.xlane.xlu0 %2733
        %2735 = vmax.xlane.f32.xlu0 %v2711
        %v2736 = vpop.xlane.xlu0 %2735
        %2737 = vmax.xlane.f32.xlu0 %v2712
        %v2738 = vpop.xlane.xlu0 %2737
        %2739 = vmax.xlane.f32.xlu0 %v2713
        %v2740 = vpop.xlane.xlu0 %2739
        %2741 = vmax.xlane.f32.xlu0 %v2714
        %v2742 = vpop.xlane.xlu0 %2741
        %2743 = vmax.xlane.f32.xlu0 %v2715
        %v2744 = vpop.xlane.xlu0 %2743
        %2745 = vmax.xlane.f32.xlu0 %v2716
        %v2746 = vpop.xlane.xlu0 %2745
        %2747 = vmax.xlane.f32.xlu0 %v2717
        %v2748 = vpop.xlane.xlu0 %2747
        %2749 = vmax.xlane.f32.xlu0 %v2718
        %v2750 = vpop.xlane.xlu0 %2749
        %v2751 = vsub.f32 %v2703, %v2720
        %v2752 = vsub.f32 %v2704, %v2722
        %v2753 = vsub.f32 %v2705, %v2724
        %v2754 = vsub.f32 %v2706, %v2726
        %v2755 = vsub.f32 %v2707, %v2728
        %v2756 = vsub.f32 %v2708, %v2730
        %v2757 = vsub.f32 %v2709, %v2732
        %v2758 = vsub.f32 %v2710, %v2734
        %v2759 = vsub.f32 %v2711, %v2736
        %v2760 = vsub.f32 %v2712, %v2738
        %v2761 = vsub.f32 %v2713, %v2740
        %v2762 = vsub.f32 %v2714, %v2742
        %v2763 = vsub.f32 %v2715, %v2744
        %v2764 = vsub.f32 %v2716, %v2746
        %v2765 = vsub.f32 %v2717, %v2748
        %v2766 = vsub.f32 %v2718, %v2750
        %v2767 = vmul.f32 %v2751, 1.442695
        %v2768 = vpow.pop %v2767
        %v2769 = vmul.f32 %v2752, 1.442695
        %v2770 = vpow.pop %v2769
        %v2771 = vmul.f32 %v2753, 1.442695
        %v2772 = vpow.pop %v2771
        %v2773 = vmul.f32 %v2754, 1.442695
        %v2774 = vpow.pop %v2773
        %v2775 = vmul.f32 %v2755, 1.442695
        %v2776 = vpow.pop %v2775
        %v2777 = vmul.f32 %v2756, 1.442695
        %v2778 = vpow.pop %v2777
        %v2779 = vmul.f32 %v2757, 1.442695
        %v2780 = vpow.pop %v2779
        %v2781 = vmul.f32 %v2758, 1.442695
        %v2782 = vpow.pop %v2781
        %v2783 = vmul.f32 %v2759, 1.442695
        %v2784 = vpow.pop %v2783
        %v2785 = vmul.f32 %v2760, 1.442695
        %v2786 = vpow.pop %v2785
        %v2787 = vmul.f32 %v2761, 1.442695
        %v2788 = vpow.pop %v2787
        %v2789 = vmul.f32 %v2762, 1.442695
        %v2790 = vpow.pop %v2789
        %v2791 = vmul.f32 %v2763, 1.442695
        %v2792 = vpow.pop %v2791
        %v2793 = vmul.f32 %v2764, 1.442695
        %v2794 = vpow.pop %v2793
        %v2795 = vmul.f32 %v2765, 1.442695
        %v2796 = vpow.pop %v2795
        %v2797 = vmul.f32 %v2766, 1.442695
        %v2798 = vpow.pop %v2797
        %2799 = vadd.xlane.f32.xlu0 %v2768
        %v2800 = vpop.xlane.xlu0 %2799
        %2801 = vadd.xlane.f32.xlu0 %v2770
        %v2802 = vpop.xlane.xlu0 %2801
        %2803 = vadd.xlane.f32.xlu0 %v2772
        %v2804 = vpop.xlane.xlu0 %2803
        %2805 = vadd.xlane.f32.xlu0 %v2774
        %v2806 = vpop.xlane.xlu0 %2805
        %2807 = vadd.xlane.f32.xlu0 %v2776
        %v2808 = vpop.xlane.xlu0 %2807
        %2809 = vadd.xlane.f32.xlu0 %v2778
        %v2810 = vpop.xlane.xlu0 %2809
        %2811 = vadd.xlane.f32.xlu0 %v2780
        %v2812 = vpop.xlane.xlu0 %2811
        %2813 = vadd.xlane.f32.xlu0 %v2782
        %v2814 = vpop.xlane.xlu0 %2813
        %2815 = vadd.xlane.f32.xlu0 %v2784
        %v2816 = vpop.xlane.xlu0 %2815
        %2817 = vadd.xlane.f32.xlu0 %v2786
        %v2818 = vpop.xlane.xlu0 %2817
        %2819 = vadd.xlane.f32.xlu0 %v2788
        %v2820 = vpop.xlane.xlu0 %2819
        %2821 = vadd.xlane.f32.xlu0 %v2790
        %v2822 = vpop.xlane.xlu0 %2821
        %2823 = vadd.xlane.f32.xlu0 %v2792
        %v2824 = vpop.xlane.xlu0 %2823
        %2825 = vadd.xlane.f32.xlu0 %v2794
        %v2826 = vpop.xlane.xlu0 %2825
        %2827 = vadd.xlane.f32.xlu0 %v2796
        %v2828 = vpop.xlane.xlu0 %2827
        %2829 = vadd.xlane.f32.xlu0 %v2798
        %v2830 = vpop.xlane.xlu0 %2829
        %2831 = vrot.lane.b32.xlu0 %v537, 80
        %v2832 = vpop.permute.xlu0 %2831
        %2833 = vrot.lane.b32.xlu0 %v542, 80
        %v2834 = vpop.permute.xlu0 %2833
        %2835 = vrot.lane.b32.xlu0 %v547, 80
        %v2836 = vpop.permute.xlu0 %2835
        %2837 = vrot.lane.b32.xlu0 %v552, 80
        %v2838 = vpop.permute.xlu0 %2837
        %2839 = vrot.lane.b32.xlu0 %v557, 80
        %v2840 = vpop.permute.xlu0 %2839
        %2841 = vrot.lane.b32.xlu0 %v562, 80
        %v2842 = vpop.permute.xlu0 %2841
        %2843 = vrot.lane.b32.xlu0 %v567, 80
        %v2844 = vpop.permute.xlu0 %2843
        %2845 = vrot.lane.b32.xlu0 %v572, 80
        %v2846 = vpop.permute.xlu0 %2845
        %2847 = vrot.lane.b32.xlu0 %v577, 80
        %v2848 = vpop.permute.xlu0 %2847
        %2849 = vrot.lane.b32.xlu0 %v582, 80
        %v2850 = vpop.permute.xlu0 %2849
        %2851 = vrot.lane.b32.xlu0 %v587, 80
        %v2852 = vpop.permute.xlu0 %2851
        %2853 = vrot.lane.b32.xlu0 %v592, 80
        %v2854 = vpop.permute.xlu0 %2853
        %2855 = vrot.lane.b32.xlu0 %v597, 80
        %v2856 = vpop.permute.xlu0 %2855
        %2857 = vrot.lane.b32.xlu0 %v602, 80
        %v2858 = vpop.permute.xlu0 %2857
        %2859 = vrot.lane.b32.xlu0 %v607, 80
        %v2860 = vpop.permute.xlu0 %2859
        %2861 = vrot.lane.b32.xlu0 %v612, 80
        %v2862 = vpop.permute.xlu0 %2861
        %2879 = vmatprep.subr.mxu0 0.0
        %2880 = vmatpush1.msra.mxu0 %v2862
        %2881 = vmatprep.subr.mxu0 0.0
        %2882 = vmatpush1.msra.mxu0 %v2860
        %2883 = vmatprep.subr.mxu0 0.0
        %2884 = vmatpush1.msra.mxu0 %v2858
        %2885 = vmatprep.subr.mxu0 0.0
        %2886 = vmatpush1.msra.mxu0 %v2856
        %2887 = vmatprep.subr.mxu0 0.0
        %2888 = vmatpush1.msra.mxu0 %v2854
        %2889 = vmatprep.subr.mxu0 0.0
        %2890 = vmatpush1.msra.mxu0 %v2852
        %2891 = vmatprep.subr.mxu0 0.0
        %2892 = vmatpush1.msra.mxu0 %v2850
        %2893 = vmatprep.subr.mxu0 0.0
        %2894 = vmatpush1.msra.mxu0 %v2848
        %2895 = vmatprep.subr.mxu0 0.0
        %2896 = vmatpush1.msra.mxu0 %v2846
        %2897 = vmatprep.subr.mxu0 0.0
        %2898 = vmatpush1.msra.mxu0 %v2844
        %2899 = vmatprep.subr.mxu0 0.0
        %2900 = vmatpush1.msra.mxu0 %v2842
        %2901 = vmatprep.subr.mxu0 0.0
        %2902 = vmatpush1.msra.mxu0 %v2840
        %2903 = vmatprep.subr.mxu0 0.0
        %2904 = vmatpush1.msra.mxu0 %v2838
        %2905 = vmatprep.subr.mxu0 0.0
        %2906 = vmatpush1.msra.mxu0 %v2836
        %2907 = vmatprep.subr.mxu0 0.0
        %2908 = vmatpush1.msra.mxu0 %v2834
        %2909 = vmatprep.subr.mxu0 0.0
        %2910 = vmatpush1.msra.mxu0 %v2832
        %2911 = vmatprep.subr.mxu0 0.0
        %2912 = vmatpush2.msra.mxu0 0.0
        %2913 = vmatprep.subr.mxu0 0.0
        %2914 = vmatpush2.msra.mxu0 0.0
        %2915 = vmatprep.subr.mxu0 0.0
        %2916 = vmatpush2.msra.mxu0 0.0
        %2917 = vmatprep.subr.mxu0 0.0
        %2918 = vmatpush2.msra.mxu0 0.0
        %2919 = vmatprep.subr.mxu0 0.0
        %2920 = vmatpush2.msra.mxu0 0.0
        %2921 = vmatprep.subr.mxu0 0.0
        %2922 = vmatpush2.msra.mxu0 0.0
        %2923 = vmatprep.subr.mxu0 0.0
        %2924 = vmatpush2.msra.mxu0 0.0
        %2925 = vmatprep.subr.mxu0 0.0
        %2926 = vmatpush2.msra.mxu0 0.0
        %2927 = vmatprep.subr.mxu0 0.0
        %2928 = vmatpush2.msra.mxu0 0.0
        %2929 = vmatprep.subr.mxu0 0.0
        %2930 = vmatpush2.msra.mxu0 0.0
        %2931 = vmatprep.subr.mxu0 0.0
        %2932 = vmatpush2.msra.mxu0 0.0
        %2933 = vmatprep.subr.mxu0 0.0
        %2934 = vmatpush2.msra.mxu0 0.0
        %2935 = vmatprep.subr.mxu0 0.0
        %2936 = vmatpush2.msra.mxu0 0.0
        %2937 = vmatprep.subr.mxu0 0.0
        %2938 = vmatpush2.msra.mxu0 0.0
        %2939 = vmatprep.subr.mxu0 0.0
        %2940 = vmatpush2.msra.mxu0 0.0
        %2941 = vmatprep.subr.mxu0 0.0
        %2942 = vmatpush2.msra.mxu0 0.0
        %2943 = vmatprep.mubr.f32.mxu0 0.0
        %2944 = vmatmul.mubr.f32.gmra.mxu0 %v2768
        %v2945 = vpop.f32.mrf.mxu0
        %v2946 = vadd.f32 0.0, %v2945
        %v2947 = vpop.f32.mrf.mxu0
        %2948 = vmatprep.mubr.f32.mxu0 0.0
        %2949 = vmatmul.mubr.f32.gmra.mxu0 %v2770
        %v2950 = vpop.f32.mrf.mxu0
        %v2951 = vadd.f32 0.0, %v2950
        %v2952 = vpop.f32.mrf.mxu0
        %2953 = vmatprep.mubr.f32.mxu0 0.0
        %2954 = vmatmul.mubr.f32.gmra.mxu0 %v2772
        %v2955 = vpop.f32.mrf.mxu0
        %v2956 = vadd.f32 0.0, %v2955
        %v2957 = vpop.f32.mrf.mxu0
        %2958 = vmatprep.mubr.f32.mxu0 0.0
        %2959 = vmatmul.mubr.f32.gmra.mxu0 %v2774
        %v2960 = vpop.f32.mrf.mxu0
        %v2961 = vadd.f32 0.0, %v2960
        %v2962 = vpop.f32.mrf.mxu0
        %2963 = vmatprep.mubr.f32.mxu0 0.0
        %2964 = vmatmul.mubr.f32.gmra.mxu0 %v2776
        %v2965 = vpop.f32.mrf.mxu0
        %v2966 = vadd.f32 0.0, %v2965
        %v2967 = vpop.f32.mrf.mxu0
        %2968 = vmatprep.mubr.f32.mxu0 0.0
        %2969 = vmatmul.mubr.f32.gmra.mxu0 %v2778
        %v2970 = vpop.f32.mrf.mxu0
        %v2971 = vadd.f32 0.0, %v2970
        %v2972 = vpop.f32.mrf.mxu0
        %2973 = vmatprep.mubr.f32.mxu0 0.0
        %2974 = vmatmul.mubr.f32.gmra.mxu0 %v2780
        %v2975 = vpop.f32.mrf.mxu0
        %v2976 = vadd.f32 0.0, %v2975
        %v2977 = vpop.f32.mrf.mxu0
        %2978 = vmatprep.mubr.f32.mxu0 0.0
        %2979 = vmatmul.mubr.f32.gmra.mxu0 %v2782
        %v2980 = vpop.f32.mrf.mxu0
        %v2981 = vadd.f32 0.0, %v2980
        %v2982 = vpop.f32.mrf.mxu0
        %2983 = vmatprep.mubr.f32.mxu0 0.0
        %2984 = vmatmul.mubr.f32.gmra.mxu0 %v2784
        %v2985 = vpop.f32.mrf.mxu0
        %v2986 = vadd.f32 0.0, %v2985
        %v2987 = vpop.f32.mrf.mxu0
        %2988 = vmatprep.mubr.f32.mxu0 0.0
        %2989 = vmatmul.mubr.f32.gmra.mxu0 %v2786
        %v2990 = vpop.f32.mrf.mxu0
        %v2991 = vadd.f32 0.0, %v2990
        %v2992 = vpop.f32.mrf.mxu0
        %2993 = vmatprep.mubr.f32.mxu0 0.0
        %2994 = vmatmul.mubr.f32.gmra.mxu0 %v2788
        %v2995 = vpop.f32.mrf.mxu0
        %v2996 = vadd.f32 0.0, %v2995
        %v2997 = vpop.f32.mrf.mxu0
        %2998 = vmatprep.mubr.f32.mxu0 0.0
        %2999 = vmatmul.mubr.f32.gmra.mxu0 %v2790
        %v3000 = vpop.f32.mrf.mxu0
        %v3001 = vadd.f32 0.0, %v3000
        %v3002 = vpop.f32.mrf.mxu0
        %3003 = vmatprep.mubr.f32.mxu0 0.0
        %3004 = vmatmul.mubr.f32.gmra.mxu0 %v2792
        %v3005 = vpop.f32.mrf.mxu0
        %v3006 = vadd.f32 0.0, %v3005
        %v3007 = vpop.f32.mrf.mxu0
        %3008 = vmatprep.mubr.f32.mxu0 0.0
        %3009 = vmatmul.mubr.f32.gmra.mxu0 %v2794
        %v3010 = vpop.f32.mrf.mxu0
        %v3011 = vadd.f32 0.0, %v3010
        %v3012 = vpop.f32.mrf.mxu0
        %3013 = vmatprep.mubr.f32.mxu0 0.0
        %3014 = vmatmul.mubr.f32.gmra.mxu0 %v2796
        %v3015 = vpop.f32.mrf.mxu0
        %v3016 = vadd.f32 0.0, %v3015
        %v3017 = vpop.f32.mrf.mxu0
        %3018 = vmatprep.mubr.f32.mxu0 0.0
        %3019 = vmatmul.mubr.f32.gmra.mxu0 %v2798
        %v3020 = vpop.f32.mrf.mxu0
        %v3021 = vadd.f32 0.0, %v3020
        %v3022 = vpop.f32.mrf.mxu0
        %3023 = vdwg.mxu0
        %v3024 = vrcp.pop %v2800
        %v3025 = vrcp.pop %v2802
        %v3026 = vrcp.pop %v2804
        %v3027 = vrcp.pop %v2806
        %v3028 = vrcp.pop %v2808
        %v3029 = vrcp.pop %v2810
        %v3030 = vrcp.pop %v2812
        %v3031 = vrcp.pop %v2814
        %v3032 = vrcp.pop %v2816
        %v3033 = vrcp.pop %v2818
        %v3034 = vrcp.pop %v2820
        %v3035 = vrcp.pop %v2822
        %v3036 = vrcp.pop %v2824
        %v3037 = vrcp.pop %v2826
        %v3038 = vrcp.pop %v2828
        %v3039 = vrcp.pop %v2830
        %v3040 = vmul.f32 %v2946, %v3024
        %v3041 = vmul.f32 %v2951, %v3025
        %v3042 = vmul.f32 %v2956, %v3026
        %v3043 = vmul.f32 %v2961, %v3027
        %v3044 = vmul.f32 %v2966, %v3028
        %v3045 = vmul.f32 %v2971, %v3029
        %v3046 = vmul.f32 %v2976, %v3030
        %v3047 = vmul.f32 %v2981, %v3031
        %v3048 = vmul.f32 %v2986, %v3032
        %v3049 = vmul.f32 %v2991, %v3033
        %v3050 = vmul.f32 %v2996, %v3034
        %v3051 = vmul.f32 %v3001, %v3035
        %v3052 = vmul.f32 %v3006, %v3036
        %v3053 = vmul.f32 %v3011, %v3037
        %v3054 = vmul.f32 %v3016, %v3038
        %v3055 = vmul.f32 %v3021, %v3039
        %3056 = vrot.lane.b32.xlu0 %v376, 64
        %v3057 = vpop.permute.xlu0 %3056
        %3058 = vrot.lane.b32.xlu0 %v382, 64
        %v3059 = vpop.permute.xlu0 %3058
        %3060 = vrot.lane.b32.xlu0 %v388, 64
        %v3061 = vpop.permute.xlu0 %3060
        %3062 = vrot.lane.b32.xlu0 %v394, 64
        %v3063 = vpop.permute.xlu0 %3062
        %3064 = vrot.lane.b32.xlu0 %v400, 64
        %v3065 = vpop.permute.xlu0 %3064
        %3066 = vrot.lane.b32.xlu0 %v406, 64
        %v3067 = vpop.permute.xlu0 %3066
        %3068 = vrot.lane.b32.xlu0 %v412, 64
        %v3069 = vpop.permute.xlu0 %3068
        %3070 = vrot.lane.b32.xlu0 %v418, 64
        %v3071 = vpop.permute.xlu0 %3070
        %3072 = vrot.lane.b32.xlu0 %v424, 64
        %v3073 = vpop.permute.xlu0 %3072
        %3074 = vrot.lane.b32.xlu0 %v430, 64
        %v3075 = vpop.permute.xlu0 %3074
        %3076 = vrot.lane.b32.xlu0 %v436, 64
        %v3077 = vpop.permute.xlu0 %3076
        %3078 = vrot.lane.b32.xlu0 %v442, 64
        %v3079 = vpop.permute.xlu0 %3078
        %3080 = vrot.lane.b32.xlu0 %v448, 64
        %v3081 = vpop.permute.xlu0 %3080
        %3082 = vrot.lane.b32.xlu0 %v454, 64
        %v3083 = vpop.permute.xlu0 %3082
        %3084 = vrot.lane.b32.xlu0 %v460, 64
        %v3085 = vpop.permute.xlu0 %3084
        %3086 = vrot.lane.b32.xlu0 %v466, 64
        %v3087 = vpop.permute.xlu0 %3086
        %3088 = vrot.lane.b32.xlu0 %v378, 64
        %v3089 = vpop.permute.xlu0 %3088
        %3090 = vrot.lane.b32.xlu0 %v384, 64
        %v3091 = vpop.permute.xlu0 %3090
        %3092 = vrot.lane.b32.xlu0 %v390, 64
        %v3093 = vpop.permute.xlu0 %3092
        %3094 = vrot.lane.b32.xlu0 %v396, 64
        %v3095 = vpop.permute.xlu0 %3094
        %3096 = vrot.lane.b32.xlu0 %v402, 64
        %v3097 = vpop.permute.xlu0 %3096
        %3098 = vrot.lane.b32.xlu0 %v408, 64
        %v3099 = vpop.permute.xlu0 %3098
        %3100 = vrot.lane.b32.xlu0 %v414, 64
        %v3101 = vpop.permute.xlu0 %3100
        %3102 = vrot.lane.b32.xlu0 %v420, 64
        %v3103 = vpop.permute.xlu0 %3102
        %3104 = vrot.lane.b32.xlu0 %v426, 64
        %v3105 = vpop.permute.xlu0 %3104
        %3106 = vrot.lane.b32.xlu0 %v432, 64
        %v3107 = vpop.permute.xlu0 %3106
        %3108 = vrot.lane.b32.xlu0 %v438, 64
        %v3109 = vpop.permute.xlu0 %3108
        %3110 = vrot.lane.b32.xlu0 %v444, 64
        %v3111 = vpop.permute.xlu0 %3110
        %3112 = vrot.lane.b32.xlu0 %v450, 64
        %v3113 = vpop.permute.xlu0 %3112
        %3114 = vrot.lane.b32.xlu0 %v456, 64
        %v3115 = vpop.permute.xlu0 %3114
        %3116 = vrot.lane.b32.xlu0 %v462, 64
        %v3117 = vpop.permute.xlu0 %3116
        %3118 = vrot.lane.b32.xlu0 %v468, 64
        %v3119 = vpop.permute.xlu0 %3118
        %v3120 = vsel %vm615, %v3057, 0
        %v3122 = vsel %vm615, %v3059, 0
        %v3124 = vsel %vm615, %v3061, 0
        %v3126 = vsel %vm615, %v3063, 0
        %v3128 = vsel %vm615, %v3065, 0
        %v3130 = vsel %vm615, %v3067, 0
        %v3132 = vsel %vm615, %v3069, 0
        %v3134 = vsel %vm615, %v3071, 0
        %v3136 = vsel %vm615, %v3073, 0
        %v3138 = vsel %vm615, %v3075, 0
        %v3140 = vsel %vm615, %v3077, 0
        %v3142 = vsel %vm615, %v3079, 0
        %v3144 = vsel %vm615, %v3081, 0
        %v3146 = vsel %vm615, %v3083, 0
        %v3148 = vsel %vm615, %v3085, 0
        %v3150 = vsel %vm615, %v3087, 0
        %v3152 = vsel %vm615, %v3089, 0
        %v3154 = vsel %vm615, %v3091, 0
        %v3156 = vsel %vm615, %v3093, 0
        %v3158 = vsel %vm615, %v3095, 0
        %v3160 = vsel %vm615, %v3097, 0
        %v3162 = vsel %vm615, %v3099, 0
        %v3164 = vsel %vm615, %v3101, 0
        %v3166 = vsel %vm615, %v3103, 0
        %v3168 = vsel %vm615, %v3105, 0
        %v3170 = vsel %vm615, %v3107, 0
        %v3172 = vsel %vm615, %v3109, 0
        %v3174 = vsel %vm615, %v3111, 0
        %v3176 = vsel %vm615, %v3113, 0
        %v3178 = vsel %vm615, %v3115, 0
        %v3180 = vsel %vm615, %v3117, 0
        %v3182 = vsel %vm615, %v3119, 0
        %3184 = vmatprep.subr.mxu0 0.0
        %3185 = vmatpush1.xpose.msra.mxu0 %v3182
        %3186 = vmatprep.subr.mxu0 0.0
        %3187 = vmatpush1.xpose.msra.mxu0 %v3180
        %3188 = vmatprep.subr.mxu0 0.0
        %3189 = vmatpush1.xpose.msra.mxu0 %v3178
        %3190 = vmatprep.subr.mxu0 0.0
        %3191 = vmatpush1.xpose.msra.mxu0 %v3176
        %3192 = vmatprep.subr.mxu0 0.0
        %3193 = vmatpush1.xpose.msra.mxu0 %v3174
        %3194 = vmatprep.subr.mxu0 0.0
        %3195 = vmatpush1.xpose.msra.mxu0 %v3172
        %3196 = vmatprep.subr.mxu0 0.0
        %3197 = vmatpush1.xpose.msra.mxu0 %v3170
        %3198 = vmatprep.subr.mxu0 0.0
        %3199 = vmatpush1.xpose.msra.mxu0 %v3168
        %3200 = vmatprep.subr.mxu0 0.0
        %3201 = vmatpush1.xpose.msra.mxu0 %v3166
        %3202 = vmatprep.subr.mxu0 0.0
        %3203 = vmatpush1.xpose.msra.mxu0 %v3164
        %3204 = vmatprep.subr.mxu0 0.0
        %3205 = vmatpush1.xpose.msra.mxu0 %v3162
        %3206 = vmatprep.subr.mxu0 0.0
        %3207 = vmatpush1.xpose.msra.mxu0 %v3160
        %3208 = vmatprep.subr.mxu0 0.0
        %3209 = vmatpush1.xpose.msra.mxu0 %v3158
        %3210 = vmatprep.subr.mxu0 0.0
        %3211 = vmatpush1.xpose.msra.mxu0 %v3156
        %3212 = vmatprep.subr.mxu0 0.0
        %3213 = vmatpush1.xpose.msra.mxu0 %v3154
        %3214 = vmatprep.subr.mxu0 0.0
        %3215 = vmatpush1.xpose.msra.mxu0 %v3152
        %3216 = vmatprep.subr.mxu0 0.0
        %3217 = vmatpush2.xpose.msra.mxu0 0.0
        %3218 = vmatprep.subr.mxu0 0.0
        %3219 = vmatpush2.xpose.msra.mxu0 0.0
        %3220 = vmatprep.subr.mxu0 0.0
        %3221 = vmatpush2.xpose.msra.mxu0 0.0
        %3222 = vmatprep.subr.mxu0 0.0
        %3223 = vmatpush2.xpose.msra.mxu0 0.0
        %3224 = vmatprep.subr.mxu0 0.0
        %3225 = vmatpush2.xpose.msra.mxu0 0.0
        %3226 = vmatprep.subr.mxu0 0.0
        %3227 = vmatpush2.xpose.msra.mxu0 0.0
        %3228 = vmatprep.subr.mxu0 0.0
        %3229 = vmatpush2.xpose.msra.mxu0 0.0
        %3230 = vmatprep.subr.mxu0 0.0
        %3231 = vmatpush2.xpose.msra.mxu0 0.0
        %3232 = vmatprep.subr.mxu0 0.0
        %3233 = vmatpush2.xpose.msra.mxu0 0.0
        %3234 = vmatprep.subr.mxu0 0.0
        %3235 = vmatpush2.xpose.msra.mxu0 0.0
        %3236 = vmatprep.subr.mxu0 0.0
        %3237 = vmatpush2.xpose.msra.mxu0 0.0
        %3238 = vmatprep.subr.mxu0 0.0
        %3239 = vmatpush2.xpose.msra.mxu0 0.0
        %3240 = vmatprep.subr.mxu0 0.0
        %3241 = vmatpush2.xpose.msra.mxu0 0.0
        %3242 = vmatprep.subr.mxu0 0.0
        %3243 = vmatpush2.xpose.msra.mxu0 0.0
        %3244 = vmatprep.subr.mxu0 0.0
        %3245 = vmatpush2.xpose.msra.mxu0 0.0
        %3246 = vmatprep.subr.mxu0 0.0
        %3247 = vmatpush2.xpose.msra.mxu0 0.0
        %3248 = vmatprep.mubr.f32.mxu0 0.0
        %3249 = vmatmul.mubr.f32.gmra.mxu0 %v3120
        %v3250 = vpop.f32.mrf.mxu0
        %v3251 = vadd.f32 0.0, %v3250
        %v3252 = vpop.f32.mrf.mxu0
        %3253 = vmatprep.mubr.f32.mxu0 0.0
        %3254 = vmatmul.mubr.f32.gmra.mxu0 %v3122
        %v3255 = vpop.f32.mrf.mxu0
        %v3256 = vadd.f32 0.0, %v3255
        %v3257 = vpop.f32.mrf.mxu0
        %3258 = vmatprep.mubr.f32.mxu0 0.0
        %3259 = vmatmul.mubr.f32.gmra.mxu0 %v3124
        %v3260 = vpop.f32.mrf.mxu0
        %v3261 = vadd.f32 0.0, %v3260
        %v3262 = vpop.f32.mrf.mxu0
        %3263 = vmatprep.mubr.f32.mxu0 0.0
        %3264 = vmatmul.mubr.f32.gmra.mxu0 %v3126
        %v3265 = vpop.f32.mrf.mxu0
        %v3266 = vadd.f32 0.0, %v3265
        %v3267 = vpop.f32.mrf.mxu0
        %3268 = vmatprep.mubr.f32.mxu0 0.0
        %3269 = vmatmul.mubr.f32.gmra.mxu0 %v3128
        %v3270 = vpop.f32.mrf.mxu0
        %v3271 = vadd.f32 0.0, %v3270
        %v3272 = vpop.f32.mrf.mxu0
        %3273 = vmatprep.mubr.f32.mxu0 0.0
        %3274 = vmatmul.mubr.f32.gmra.mxu0 %v3130
        %v3275 = vpop.f32.mrf.mxu0
        %v3276 = vadd.f32 0.0, %v3275
        %v3277 = vpop.f32.mrf.mxu0
        %3278 = vmatprep.mubr.f32.mxu0 0.0
        %3279 = vmatmul.mubr.f32.gmra.mxu0 %v3132
        %v3280 = vpop.f32.mrf.mxu0
        %v3281 = vadd.f32 0.0, %v3280
        %v3282 = vpop.f32.mrf.mxu0
        %3283 = vmatprep.mubr.f32.mxu0 0.0
        %3284 = vmatmul.mubr.f32.gmra.mxu0 %v3134
        %v3285 = vpop.f32.mrf.mxu0
        %v3286 = vadd.f32 0.0, %v3285
        %v3287 = vpop.f32.mrf.mxu0
        %3288 = vmatprep.mubr.f32.mxu0 0.0
        %3289 = vmatmul.mubr.f32.gmra.mxu0 %v3136
        %v3290 = vpop.f32.mrf.mxu0
        %v3291 = vadd.f32 0.0, %v3290
        %v3292 = vpop.f32.mrf.mxu0
        %3293 = vmatprep.mubr.f32.mxu0 0.0
        %3294 = vmatmul.mubr.f32.gmra.mxu0 %v3138
        %v3295 = vpop.f32.mrf.mxu0
        %v3296 = vadd.f32 0.0, %v3295
        %v3297 = vpop.f32.mrf.mxu0
        %3298 = vmatprep.mubr.f32.mxu0 0.0
        %3299 = vmatmul.mubr.f32.gmra.mxu0 %v3140
        %v3300 = vpop.f32.mrf.mxu0
        %v3301 = vadd.f32 0.0, %v3300
        %v3302 = vpop.f32.mrf.mxu0
        %3303 = vmatprep.mubr.f32.mxu0 0.0
        %3304 = vmatmul.mubr.f32.gmra.mxu0 %v3142
        %v3305 = vpop.f32.mrf.mxu0
        %v3306 = vadd.f32 0.0, %v3305
        %v3307 = vpop.f32.mrf.mxu0
        %3308 = vmatprep.mubr.f32.mxu0 0.0
        %3309 = vmatmul.mubr.f32.gmra.mxu0 %v3144
        %v3310 = vpop.f32.mrf.mxu0
        %v3311 = vadd.f32 0.0, %v3310
        %v3312 = vpop.f32.mrf.mxu0
        %3313 = vmatprep.mubr.f32.mxu0 0.0
        %3314 = vmatmul.mubr.f32.gmra.mxu0 %v3146
        %v3315 = vpop.f32.mrf.mxu0
        %v3316 = vadd.f32 0.0, %v3315
        %v3317 = vpop.f32.mrf.mxu0
        %3318 = vmatprep.mubr.f32.mxu0 0.0
        %3319 = vmatmul.mubr.f32.gmra.mxu0 %v3148
        %v3320 = vpop.f32.mrf.mxu0
        %v3321 = vadd.f32 0.0, %v3320
        %v3322 = vpop.f32.mrf.mxu0
        %3323 = vmatprep.mubr.f32.mxu0 0.0
        %3324 = vmatmul.mubr.f32.gmra.mxu0 %v3150
        %v3325 = vpop.f32.mrf.mxu0
        %v3326 = vadd.f32 0.0, %v3325
        %v3327 = vpop.f32.mrf.mxu0
        %3328 = vdwg.mxu0
        %v3329 = vmul.f32 %v3251, 0.25
        %v3330 = vmul.f32 %v3256, 0.25
        %v3331 = vmul.f32 %v3261, 0.25
        %v3332 = vmul.f32 %v3266, 0.25
        %v3333 = vmul.f32 %v3271, 0.25
        %v3334 = vmul.f32 %v3276, 0.25
        %v3335 = vmul.f32 %v3281, 0.25
        %v3336 = vmul.f32 %v3286, 0.25
        %v3337 = vmul.f32 %v3291, 0.25
        %v3338 = vmul.f32 %v3296, 0.25
        %v3339 = vmul.f32 %v3301, 0.25
        %v3340 = vmul.f32 %v3306, 0.25
        %v3341 = vmul.f32 %v3311, 0.25
        %v3342 = vmul.f32 %v3316, 0.25
        %v3343 = vmul.f32 %v3321, 0.25
        %v3344 = vmul.f32 %v3326, 0.25
        %3345 = vmax.xlane.f32.xlu0 %v3329
        %v3346 = vpop.xlane.xlu0 %3345
        %3347 = vmax.xlane.f32.xlu0 %v3330
        %v3348 = vpop.xlane.xlu0 %3347
        %3349 = vmax.xlane.f32.xlu0 %v3331
        %v3350 = vpop.xlane.xlu0 %3349
        %3351 = vmax.xlane.f32.xlu0 %v3332
        %v3352 = vpop.xlane.xlu0 %3351
        %3353 = vmax.xlane.f32.xlu0 %v3333
        %v3354 = vpop.xlane.xlu0 %3353
        %3355 = vmax.xlane.f32.xlu0 %v3334
        %v3356 = vpop.xlane.xlu0 %3355
        %3357 = vmax.xlane.f32.xlu0 %v3335
        %v3358 = vpop.xlane.xlu0 %3357
        %3359 = vmax.xlane.f32.xlu0 %v3336
        %v3360 = vpop.xlane.xlu0 %3359
        %3361 = vmax.xlane.f32.xlu0 %v3337
        %v3362 = vpop.xlane.xlu0 %3361
        %3363 = vmax.xlane.f32.xlu0 %v3338
        %v3364 = vpop.xlane.xlu0 %3363
        %3365 = vmax.xlane.f32.xlu0 %v3339
        %v3366 = vpop.xlane.xlu0 %3365
        %3367 = vmax.xlane.f32.xlu0 %v3340
        %v3368 = vpop.xlane.xlu0 %3367
        %3369 = vmax.xlane.f32.xlu0 %v3341
        %v3370 = vpop.xlane.xlu0 %3369
        %3371 = vmax.xlane.f32.xlu0 %v3342
        %v3372 = vpop.xlane.xlu0 %3371
        %3373 = vmax.xlane.f32.xlu0 %v3343
        %v3374 = vpop.xlane.xlu0 %3373
        %3375 = vmax.xlane.f32.xlu0 %v3344
        %v3376 = vpop.xlane.xlu0 %3375
        %v3377 = vsub.f32 %v3329, %v3346
        %v3378 = vsub.f32 %v3330, %v3348
        %v3379 = vsub.f32 %v3331, %v3350
        %v3380 = vsub.f32 %v3332, %v3352
        %v3381 = vsub.f32 %v3333, %v3354
        %v3382 = vsub.f32 %v3334, %v3356
        %v3383 = vsub.f32 %v3335, %v3358
        %v3384 = vsub.f32 %v3336, %v3360
        %v3385 = vsub.f32 %v3337, %v3362
        %v3386 = vsub.f32 %v3338, %v3364
        %v3387 = vsub.f32 %v3339, %v3366
        %v3388 = vsub.f32 %v3340, %v3368
        %v3389 = vsub.f32 %v3341, %v3370
        %v3390 = vsub.f32 %v3342, %v3372
        %v3391 = vsub.f32 %v3343, %v3374
        %v3392 = vsub.f32 %v3344, %v3376
        %v3393 = vmul.f32 %v3377, 1.442695
        %v3394 = vpow.pop %v3393
        %v3395 = vmul.f32 %v3378, 1.442695
        %v3396 = vpow.pop %v3395
        %v3397 = vmul.f32 %v3379, 1.442695
        %v3398 = vpow.pop %v3397
        %v3399 = vmul.f32 %v3380, 1.442695
        %v3400 = vpow.pop %v3399
        %v3401 = vmul.f32 %v3381, 1.442695
        %v3402 = vpow.pop %v3401
        %v3403 = vmul.f32 %v3382, 1.442695
        %v3404 = vpow.pop %v3403
        %v3405 = vmul.f32 %v3383, 1.442695
        %v3406 = vpow.pop %v3405
        %v3407 = vmul.f32 %v3384, 1.442695
        %v3408 = vpow.pop %v3407
        %v3409 = vmul.f32 %v3385, 1.442695
        %v3410 = vpow.pop %v3409
        %v3411 = vmul.f32 %v3386, 1.442695
        %v3412 = vpow.pop %v3411
        %v3413 = vmul.f32 %v3387, 1.442695
        %v3414 = vpow.pop %v3413
        %v3415 = vmul.f32 %v3388, 1.442695
        %v3416 = vpow.pop %v3415
        %v3417 = vmul.f32 %v3389, 1.442695
        %v3418 = vpow.pop %v3417
        %v3419 = vmul.f32 %v3390, 1.442695
        %v3420 = vpow.pop %v3419
        %v3421 = vmul.f32 %v3391, 1.442695
        %v3422 = vpow.pop %v3421
        %v3423 = vmul.f32 %v3392, 1.442695
        %v3424 = vpow.pop %v3423
        %3425 = vadd.xlane.f32.xlu0 %v3394
        %v3426 = vpop.xlane.xlu0 %3425
        %3427 = vadd.xlane.f32.xlu0 %v3396
        %v3428 = vpop.xlane.xlu0 %3427
        %3429 = vadd.xlane.f32.xlu0 %v3398
        %v3430 = vpop.xlane.xlu0 %3429
        %3431 = vadd.xlane.f32.xlu0 %v3400
        %v3432 = vpop.xlane.xlu0 %3431
        %3433 = vadd.xlane.f32.xlu0 %v3402
        %v3434 = vpop.xlane.xlu0 %3433
        %3435 = vadd.xlane.f32.xlu0 %v3404
        %v3436 = vpop.xlane.xlu0 %3435
        %3437 = vadd.xlane.f32.xlu0 %v3406
        %v3438 = vpop.xlane.xlu0 %3437
        %3439 = vadd.xlane.f32.xlu0 %v3408
        %v3440 = vpop.xlane.xlu0 %3439
        %3441 = vadd.xlane.f32.xlu0 %v3410
        %v3442 = vpop.xlane.xlu0 %3441
        %3443 = vadd.xlane.f32.xlu0 %v3412
        %v3444 = vpop.xlane.xlu0 %3443
        %3445 = vadd.xlane.f32.xlu0 %v3414
        %v3446 = vpop.xlane.xlu0 %3445
        %3447 = vadd.xlane.f32.xlu0 %v3416
        %v3448 = vpop.xlane.xlu0 %3447
        %3449 = vadd.xlane.f32.xlu0 %v3418
        %v3450 = vpop.xlane.xlu0 %3449
        %3451 = vadd.xlane.f32.xlu0 %v3420
        %v3452 = vpop.xlane.xlu0 %3451
        %3453 = vadd.xlane.f32.xlu0 %v3422
        %v3454 = vpop.xlane.xlu0 %3453
        %3455 = vadd.xlane.f32.xlu0 %v3424
        %v3456 = vpop.xlane.xlu0 %3455
        %3457 = vrot.lane.b32.xlu0 %v537, 64
        %v3458 = vpop.permute.xlu0 %3457
        %3459 = vrot.lane.b32.xlu0 %v542, 64
        %v3460 = vpop.permute.xlu0 %3459
        %3461 = vrot.lane.b32.xlu0 %v547, 64
        %v3462 = vpop.permute.xlu0 %3461
        %3463 = vrot.lane.b32.xlu0 %v552, 64
        %v3464 = vpop.permute.xlu0 %3463
        %3465 = vrot.lane.b32.xlu0 %v557, 64
        %v3466 = vpop.permute.xlu0 %3465
        %3467 = vrot.lane.b32.xlu0 %v562, 64
        %v3468 = vpop.permute.xlu0 %3467
        %3469 = vrot.lane.b32.xlu0 %v567, 64
        %v3470 = vpop.permute.xlu0 %3469
        %3471 = vrot.lane.b32.xlu0 %v572, 64
        %v3472 = vpop.permute.xlu0 %3471
        %3473 = vrot.lane.b32.xlu0 %v577, 64
        %v3474 = vpop.permute.xlu0 %3473
        %3475 = vrot.lane.b32.xlu0 %v582, 64
        %v3476 = vpop.permute.xlu0 %3475
        %3477 = vrot.lane.b32.xlu0 %v587, 64
        %v3478 = vpop.permute.xlu0 %3477
        %3479 = vrot.lane.b32.xlu0 %v592, 64
        %v3480 = vpop.permute.xlu0 %3479
        %3481 = vrot.lane.b32.xlu0 %v597, 64
        %v3482 = vpop.permute.xlu0 %3481
        %3483 = vrot.lane.b32.xlu0 %v602, 64
        %v3484 = vpop.permute.xlu0 %3483
        %3485 = vrot.lane.b32.xlu0 %v607, 64
        %v3486 = vpop.permute.xlu0 %3485
        %3487 = vrot.lane.b32.xlu0 %v612, 64
        %v3488 = vpop.permute.xlu0 %3487
        %3505 = vmatprep.subr.mxu0 0.0
        %3506 = vmatpush1.msra.mxu0 %v3488
        %3507 = vmatprep.subr.mxu0 0.0
        %3508 = vmatpush1.msra.mxu0 %v3486
        %3509 = vmatprep.subr.mxu0 0.0
        %3510 = vmatpush1.msra.mxu0 %v3484
        %3511 = vmatprep.subr.mxu0 0.0
        %3512 = vmatpush1.msra.mxu0 %v3482
        %3513 = vmatprep.subr.mxu0 0.0
        %3514 = vmatpush1.msra.mxu0 %v3480
        %3515 = vmatprep.subr.mxu0 0.0
        %3516 = vmatpush1.msra.mxu0 %v3478
        %3517 = vmatprep.subr.mxu0 0.0
        %3518 = vmatpush1.msra.mxu0 %v3476
        %3519 = vmatprep.subr.mxu0 0.0
        %3520 = vmatpush1.msra.mxu0 %v3474
        %3521 = vmatprep.subr.mxu0 0.0
        %3522 = vmatpush1.msra.mxu0 %v3472
        %3523 = vmatprep.subr.mxu0 0.0
        %3524 = vmatpush1.msra.mxu0 %v3470
        %3525 = vmatprep.subr.mxu0 0.0
        %3526 = vmatpush1.msra.mxu0 %v3468
        %3527 = vmatprep.subr.mxu0 0.0
        %3528 = vmatpush1.msra.mxu0 %v3466
        %3529 = vmatprep.subr.mxu0 0.0
        %3530 = vmatpush1.msra.mxu0 %v3464
        %3531 = vmatprep.subr.mxu0 0.0
        %3532 = vmatpush1.msra.mxu0 %v3462
        %3533 = vmatprep.subr.mxu0 0.0
        %3534 = vmatpush1.msra.mxu0 %v3460
        %3535 = vmatprep.subr.mxu0 0.0
        %3536 = vmatpush1.msra.mxu0 %v3458
        %3537 = vmatprep.subr.mxu0 0.0
        %3538 = vmatpush2.msra.mxu0 0.0
        %3539 = vmatprep.subr.mxu0 0.0
        %3540 = vmatpush2.msra.mxu0 0.0
        %3541 = vmatprep.subr.mxu0 0.0
        %3542 = vmatpush2.msra.mxu0 0.0
        %3543 = vmatprep.subr.mxu0 0.0
        %3544 = vmatpush2.msra.mxu0 0.0
        %3545 = vmatprep.subr.mxu0 0.0
        %3546 = vmatpush2.msra.mxu0 0.0
        %3547 = vmatprep.subr.mxu0 0.0
        %3548 = vmatpush2.msra.mxu0 0.0
        %3549 = vmatprep.subr.mxu0 0.0
        %3550 = vmatpush2.msra.mxu0 0.0
        %3551 = vmatprep.subr.mxu0 0.0
        %3552 = vmatpush2.msra.mxu0 0.0
        %3553 = vmatprep.subr.mxu0 0.0
        %3554 = vmatpush2.msra.mxu0 0.0
        %3555 = vmatprep.subr.mxu0 0.0
        %3556 = vmatpush2.msra.mxu0 0.0
        %3557 = vmatprep.subr.mxu0 0.0
        %3558 = vmatpush2.msra.mxu0 0.0
        %3559 = vmatprep.subr.mxu0 0.0
        %3560 = vmatpush2.msra.mxu0 0.0
        %3561 = vmatprep.subr.mxu0 0.0
        %3562 = vmatpush2.msra.mxu0 0.0
        %3563 = vmatprep.subr.mxu0 0.0
        %3564 = vmatpush2.msra.mxu0 0.0
        %3565 = vmatprep.subr.mxu0 0.0
        %3566 = vmatpush2.msra.mxu0 0.0
        %3567 = vmatprep.subr.mxu0 0.0
        %3568 = vmatpush2.msra.mxu0 0.0
        %3569 = vmatprep.mubr.f32.mxu0 0.0
        %3570 = vmatmul.mubr.f32.gmra.mxu0 %v3394
        %v3571 = vpop.f32.mrf.mxu0
        %v3572 = vadd.f32 0.0, %v3571
        %v3573 = vpop.f32.mrf.mxu0
        %3574 = vmatprep.mubr.f32.mxu0 0.0
        %3575 = vmatmul.mubr.f32.gmra.mxu0 %v3396
        %v3576 = vpop.f32.mrf.mxu0
        %v3577 = vadd.f32 0.0, %v3576
        %v3578 = vpop.f32.mrf.mxu0
        %3579 = vmatprep.mubr.f32.mxu0 0.0
        %3580 = vmatmul.mubr.f32.gmra.mxu0 %v3398
        %v3581 = vpop.f32.mrf.mxu0
        %v3582 = vadd.f32 0.0, %v3581
        %v3583 = vpop.f32.mrf.mxu0
        %3584 = vmatprep.mubr.f32.mxu0 0.0
        %3585 = vmatmul.mubr.f32.gmra.mxu0 %v3400
        %v3586 = vpop.f32.mrf.mxu0
        %v3587 = vadd.f32 0.0, %v3586
        %v3588 = vpop.f32.mrf.mxu0
        %3589 = vmatprep.mubr.f32.mxu0 0.0
        %3590 = vmatmul.mubr.f32.gmra.mxu0 %v3402
        %v3591 = vpop.f32.mrf.mxu0
        %v3592 = vadd.f32 0.0, %v3591
        %v3593 = vpop.f32.mrf.mxu0
        %3594 = vmatprep.mubr.f32.mxu0 0.0
        %3595 = vmatmul.mubr.f32.gmra.mxu0 %v3404
        %v3596 = vpop.f32.mrf.mxu0
        %v3597 = vadd.f32 0.0, %v3596
        %v3598 = vpop.f32.mrf.mxu0
        %3599 = vmatprep.mubr.f32.mxu0 0.0
        %3600 = vmatmul.mubr.f32.gmra.mxu0 %v3406
        %v3601 = vpop.f32.mrf.mxu0
        %v3602 = vadd.f32 0.0, %v3601
        %v3603 = vpop.f32.mrf.mxu0
        %3604 = vmatprep.mubr.f32.mxu0 0.0
        %3605 = vmatmul.mubr.f32.gmra.mxu0 %v3408
        %v3606 = vpop.f32.mrf.mxu0
        %v3607 = vadd.f32 0.0, %v3606
        %v3608 = vpop.f32.mrf.mxu0
        %3609 = vmatprep.mubr.f32.mxu0 0.0
        %3610 = vmatmul.mubr.f32.gmra.mxu0 %v3410
        %v3611 = vpop.f32.mrf.mxu0
        %v3612 = vadd.f32 0.0, %v3611
        %v3613 = vpop.f32.mrf.mxu0
        %3614 = vmatprep.mubr.f32.mxu0 0.0
        %3615 = vmatmul.mubr.f32.gmra.mxu0 %v3412
        %v3616 = vpop.f32.mrf.mxu0
        %v3617 = vadd.f32 0.0, %v3616
        %v3618 = vpop.f32.mrf.mxu0
        %3619 = vmatprep.mubr.f32.mxu0 0.0
        %3620 = vmatmul.mubr.f32.gmra.mxu0 %v3414
        %v3621 = vpop.f32.mrf.mxu0
        %v3622 = vadd.f32 0.0, %v3621
        %v3623 = vpop.f32.mrf.mxu0
        %3624 = vmatprep.mubr.f32.mxu0 0.0
        %3625 = vmatmul.mubr.f32.gmra.mxu0 %v3416
        %v3626 = vpop.f32.mrf.mxu0
        %v3627 = vadd.f32 0.0, %v3626
        %v3628 = vpop.f32.mrf.mxu0
        %3629 = vmatprep.mubr.f32.mxu0 0.0
        %3630 = vmatmul.mubr.f32.gmra.mxu0 %v3418
        %v3631 = vpop.f32.mrf.mxu0
        %v3632 = vadd.f32 0.0, %v3631
        %v3633 = vpop.f32.mrf.mxu0
        %3634 = vmatprep.mubr.f32.mxu0 0.0
        %3635 = vmatmul.mubr.f32.gmra.mxu0 %v3420
        %v3636 = vpop.f32.mrf.mxu0
        %v3637 = vadd.f32 0.0, %v3636
        %v3638 = vpop.f32.mrf.mxu0
        %3639 = vmatprep.mubr.f32.mxu0 0.0
        %3640 = vmatmul.mubr.f32.gmra.mxu0 %v3422
        %v3641 = vpop.f32.mrf.mxu0
        %v3642 = vadd.f32 0.0, %v3641
        %v3643 = vpop.f32.mrf.mxu0
        %3644 = vmatprep.mubr.f32.mxu0 0.0
        %3645 = vmatmul.mubr.f32.gmra.mxu0 %v3424
        %v3646 = vpop.f32.mrf.mxu0
        %v3647 = vadd.f32 0.0, %v3646
        %v3648 = vpop.f32.mrf.mxu0
        %3649 = vdwg.mxu0
        %v3650 = vrcp.pop %v3426
        %v3651 = vrcp.pop %v3428
        %v3652 = vrcp.pop %v3430
        %v3653 = vrcp.pop %v3432
        %v3654 = vrcp.pop %v3434
        %v3655 = vrcp.pop %v3436
        %v3656 = vrcp.pop %v3438
        %v3657 = vrcp.pop %v3440
        %v3658 = vrcp.pop %v3442
        %v3659 = vrcp.pop %v3444
        %v3660 = vrcp.pop %v3446
        %v3661 = vrcp.pop %v3448
        %v3662 = vrcp.pop %v3450
        %v3663 = vrcp.pop %v3452
        %v3664 = vrcp.pop %v3454
        %v3665 = vrcp.pop %v3456
        %v3666 = vmul.f32 %v3572, %v3650
        %v3667 = vmul.f32 %v3577, %v3651
        %v3668 = vmul.f32 %v3582, %v3652
        %v3669 = vmul.f32 %v3587, %v3653
        %v3670 = vmul.f32 %v3592, %v3654
        %v3671 = vmul.f32 %v3597, %v3655
        %v3672 = vmul.f32 %v3602, %v3656
        %v3673 = vmul.f32 %v3607, %v3657
        %v3674 = vmul.f32 %v3612, %v3658
        %v3675 = vmul.f32 %v3617, %v3659
        %v3676 = vmul.f32 %v3622, %v3660
        %v3677 = vmul.f32 %v3627, %v3661
        %v3678 = vmul.f32 %v3632, %v3662
        %v3679 = vmul.f32 %v3637, %v3663
        %v3680 = vmul.f32 %v3642, %v3664
        %v3681 = vmul.f32 %v3647, %v3665
        %3682 = vrot.lane.b32.xlu0 %v376, 48
        %v3683 = vpop.permute.xlu0 %3682
        %3684 = vrot.lane.b32.xlu0 %v382, 48
        %v3685 = vpop.permute.xlu0 %3684
        %3686 = vrot.lane.b32.xlu0 %v388, 48
        %v3687 = vpop.permute.xlu0 %3686
        %3688 = vrot.lane.b32.xlu0 %v394, 48
        %v3689 = vpop.permute.xlu0 %3688
        %3690 = vrot.lane.b32.xlu0 %v400, 48
        %v3691 = vpop.permute.xlu0 %3690
        %3692 = vrot.lane.b32.xlu0 %v406, 48
        %v3693 = vpop.permute.xlu0 %3692
        %3694 = vrot.lane.b32.xlu0 %v412, 48
        %v3695 = vpop.permute.xlu0 %3694
        %3696 = vrot.lane.b32.xlu0 %v418, 48
        %v3697 = vpop.permute.xlu0 %3696
        %3698 = vrot.lane.b32.xlu0 %v424, 48
        %v3699 = vpop.permute.xlu0 %3698
        %3700 = vrot.lane.b32.xlu0 %v430, 48
        %v3701 = vpop.permute.xlu0 %3700
        %3702 = vrot.lane.b32.xlu0 %v436, 48
        %v3703 = vpop.permute.xlu0 %3702
        %3704 = vrot.lane.b32.xlu0 %v442, 48
        %v3705 = vpop.permute.xlu0 %3704
        %3706 = vrot.lane.b32.xlu0 %v448, 48
        %v3707 = vpop.permute.xlu0 %3706
        %3708 = vrot.lane.b32.xlu0 %v454, 48
        %v3709 = vpop.permute.xlu0 %3708
        %3710 = vrot.lane.b32.xlu0 %v460, 48
        %v3711 = vpop.permute.xlu0 %3710
        %3712 = vrot.lane.b32.xlu0 %v466, 48
        %v3713 = vpop.permute.xlu0 %3712
        %3714 = vrot.lane.b32.xlu0 %v378, 48
        %v3715 = vpop.permute.xlu0 %3714
        %3716 = vrot.lane.b32.xlu0 %v384, 48
        %v3717 = vpop.permute.xlu0 %3716
        %3718 = vrot.lane.b32.xlu0 %v390, 48
        %v3719 = vpop.permute.xlu0 %3718
        %3720 = vrot.lane.b32.xlu0 %v396, 48
        %v3721 = vpop.permute.xlu0 %3720
        %3722 = vrot.lane.b32.xlu0 %v402, 48
        %v3723 = vpop.permute.xlu0 %3722
        %3724 = vrot.lane.b32.xlu0 %v408, 48
        %v3725 = vpop.permute.xlu0 %3724
        %3726 = vrot.lane.b32.xlu0 %v414, 48
        %v3727 = vpop.permute.xlu0 %3726
        %3728 = vrot.lane.b32.xlu0 %v420, 48
        %v3729 = vpop.permute.xlu0 %3728
        %3730 = vrot.lane.b32.xlu0 %v426, 48
        %v3731 = vpop.permute.xlu0 %3730
        %3732 = vrot.lane.b32.xlu0 %v432, 48
        %v3733 = vpop.permute.xlu0 %3732
        %3734 = vrot.lane.b32.xlu0 %v438, 48
        %v3735 = vpop.permute.xlu0 %3734
        %3736 = vrot.lane.b32.xlu0 %v444, 48
        %v3737 = vpop.permute.xlu0 %3736
        %3738 = vrot.lane.b32.xlu0 %v450, 48
        %v3739 = vpop.permute.xlu0 %3738
        %3740 = vrot.lane.b32.xlu0 %v456, 48
        %v3741 = vpop.permute.xlu0 %3740
        %3742 = vrot.lane.b32.xlu0 %v462, 48
        %v3743 = vpop.permute.xlu0 %3742
        %3744 = vrot.lane.b32.xlu0 %v468, 48
        %v3745 = vpop.permute.xlu0 %3744
        %v3746 = vsel %vm615, %v3683, 0
        %v3748 = vsel %vm615, %v3685, 0
        %v3750 = vsel %vm615, %v3687, 0
        %v3752 = vsel %vm615, %v3689, 0
        %v3754 = vsel %vm615, %v3691, 0
        %v3756 = vsel %vm615, %v3693, 0
        %v3758 = vsel %vm615, %v3695, 0
        %v3760 = vsel %vm615, %v3697, 0
        %v3762 = vsel %vm615, %v3699, 0
        %v3764 = vsel %vm615, %v3701, 0
        %v3766 = vsel %vm615, %v3703, 0
        %v3768 = vsel %vm615, %v3705, 0
        %v3770 = vsel %vm615, %v3707, 0
        %v3772 = vsel %vm615, %v3709, 0
        %v3774 = vsel %vm615, %v3711, 0
        %v3776 = vsel %vm615, %v3713, 0
        %v3778 = vsel %vm615, %v3715, 0
        %v3780 = vsel %vm615, %v3717, 0
        %v3782 = vsel %vm615, %v3719, 0
        %v3784 = vsel %vm615, %v3721, 0
        %v3786 = vsel %vm615, %v3723, 0
        %v3788 = vsel %vm615, %v3725, 0
        %v3790 = vsel %vm615, %v3727, 0
        %v3792 = vsel %vm615, %v3729, 0
        %v3794 = vsel %vm615, %v3731, 0
        %v3796 = vsel %vm615, %v3733, 0
        %v3798 = vsel %vm615, %v3735, 0
        %v3800 = vsel %vm615, %v3737, 0
        %v3802 = vsel %vm615, %v3739, 0
        %v3804 = vsel %vm615, %v3741, 0
        %v3806 = vsel %vm615, %v3743, 0
        %v3808 = vsel %vm615, %v3745, 0
        %3810 = vmatprep.subr.mxu0 0.0
        %3811 = vmatpush1.xpose.msra.mxu0 %v3808
        %3812 = vmatprep.subr.mxu0 0.0
        %3813 = vmatpush1.xpose.msra.mxu0 %v3806
        %3814 = vmatprep.subr.mxu0 0.0
        %3815 = vmatpush1.xpose.msra.mxu0 %v3804
        %3816 = vmatprep.subr.mxu0 0.0
        %3817 = vmatpush1.xpose.msra.mxu0 %v3802
        %3818 = vmatprep.subr.mxu0 0.0
        %3819 = vmatpush1.xpose.msra.mxu0 %v3800
        %3820 = vmatprep.subr.mxu0 0.0
        %3821 = vmatpush1.xpose.msra.mxu0 %v3798
        %3822 = vmatprep.subr.mxu0 0.0
        %3823 = vmatpush1.xpose.msra.mxu0 %v3796
        %3824 = vmatprep.subr.mxu0 0.0
        %3825 = vmatpush1.xpose.msra.mxu0 %v3794
        %3826 = vmatprep.subr.mxu0 0.0
        %3827 = vmatpush1.xpose.msra.mxu0 %v3792
        %3828 = vmatprep.subr.mxu0 0.0
        %3829 = vmatpush1.xpose.msra.mxu0 %v3790
        %3830 = vmatprep.subr.mxu0 0.0
        %3831 = vmatpush1.xpose.msra.mxu0 %v3788
        %3832 = vmatprep.subr.mxu0 0.0
        %3833 = vmatpush1.xpose.msra.mxu0 %v3786
        %3834 = vmatprep.subr.mxu0 0.0
        %3835 = vmatpush1.xpose.msra.mxu0 %v3784
        %3836 = vmatprep.subr.mxu0 0.0
        %3837 = vmatpush1.xpose.msra.mxu0 %v3782
        %3838 = vmatprep.subr.mxu0 0.0
        %3839 = vmatpush1.xpose.msra.mxu0 %v3780
        %3840 = vmatprep.subr.mxu0 0.0
        %3841 = vmatpush1.xpose.msra.mxu0 %v3778
        %3842 = vmatprep.subr.mxu0 0.0
        %3843 = vmatpush2.xpose.msra.mxu0 0.0
        %3844 = vmatprep.subr.mxu0 0.0
        %3845 = vmatpush2.xpose.msra.mxu0 0.0
        %3846 = vmatprep.subr.mxu0 0.0
        %3847 = vmatpush2.xpose.msra.mxu0 0.0
        %3848 = vmatprep.subr.mxu0 0.0
        %3849 = vmatpush2.xpose.msra.mxu0 0.0
        %3850 = vmatprep.subr.mxu0 0.0
        %3851 = vmatpush2.xpose.msra.mxu0 0.0
        %3852 = vmatprep.subr.mxu0 0.0
        %3853 = vmatpush2.xpose.msra.mxu0 0.0
        %3854 = vmatprep.subr.mxu0 0.0
        %3855 = vmatpush2.xpose.msra.mxu0 0.0
        %3856 = vmatprep.subr.mxu0 0.0
        %3857 = vmatpush2.xpose.msra.mxu0 0.0
        %3858 = vmatprep.subr.mxu0 0.0
        %3859 = vmatpush2.xpose.msra.mxu0 0.0
        %3860 = vmatprep.subr.mxu0 0.0
        %3861 = vmatpush2.xpose.msra.mxu0 0.0
        %3862 = vmatprep.subr.mxu0 0.0
        %3863 = vmatpush2.xpose.msra.mxu0 0.0
        %3864 = vmatprep.subr.mxu0 0.0
        %3865 = vmatpush2.xpose.msra.mxu0 0.0
        %3866 = vmatprep.subr.mxu0 0.0
        %3867 = vmatpush2.xpose.msra.mxu0 0.0
        %3868 = vmatprep.subr.mxu0 0.0
        %3869 = vmatpush2.xpose.msra.mxu0 0.0
        %3870 = vmatprep.subr.mxu0 0.0
        %3871 = vmatpush2.xpose.msra.mxu0 0.0
        %3872 = vmatprep.subr.mxu0 0.0
        %3873 = vmatpush2.xpose.msra.mxu0 0.0
        %3874 = vmatprep.mubr.f32.mxu0 0.0
        %3875 = vmatmul.mubr.f32.gmra.mxu0 %v3746
        %v3876 = vpop.f32.mrf.mxu0
        %v3877 = vadd.f32 0.0, %v3876
        %v3878 = vpop.f32.mrf.mxu0
        %3879 = vmatprep.mubr.f32.mxu0 0.0
        %3880 = vmatmul.mubr.f32.gmra.mxu0 %v3748
        %v3881 = vpop.f32.mrf.mxu0
        %v3882 = vadd.f32 0.0, %v3881
        %v3883 = vpop.f32.mrf.mxu0
        %3884 = vmatprep.mubr.f32.mxu0 0.0
        %3885 = vmatmul.mubr.f32.gmra.mxu0 %v3750
        %v3886 = vpop.f32.mrf.mxu0
        %v3887 = vadd.f32 0.0, %v3886
        %v3888 = vpop.f32.mrf.mxu0
        %3889 = vmatprep.mubr.f32.mxu0 0.0
        %3890 = vmatmul.mubr.f32.gmra.mxu0 %v3752
        %v3891 = vpop.f32.mrf.mxu0
        %v3892 = vadd.f32 0.0, %v3891
        %v3893 = vpop.f32.mrf.mxu0
        %3894 = vmatprep.mubr.f32.mxu0 0.0
        %3895 = vmatmul.mubr.f32.gmra.mxu0 %v3754
        %v3896 = vpop.f32.mrf.mxu0
        %v3897 = vadd.f32 0.0, %v3896
        %v3898 = vpop.f32.mrf.mxu0
        %3899 = vmatprep.mubr.f32.mxu0 0.0
        %3900 = vmatmul.mubr.f32.gmra.mxu0 %v3756
        %v3901 = vpop.f32.mrf.mxu0
        %v3902 = vadd.f32 0.0, %v3901
        %v3903 = vpop.f32.mrf.mxu0
        %3904 = vmatprep.mubr.f32.mxu0 0.0
        %3905 = vmatmul.mubr.f32.gmra.mxu0 %v3758
        %v3906 = vpop.f32.mrf.mxu0
        %v3907 = vadd.f32 0.0, %v3906
        %v3908 = vpop.f32.mrf.mxu0
        %3909 = vmatprep.mubr.f32.mxu0 0.0
        %3910 = vmatmul.mubr.f32.gmra.mxu0 %v3760
        %v3911 = vpop.f32.mrf.mxu0
        %v3912 = vadd.f32 0.0, %v3911
        %v3913 = vpop.f32.mrf.mxu0
        %3914 = vmatprep.mubr.f32.mxu0 0.0
        %3915 = vmatmul.mubr.f32.gmra.mxu0 %v3762
        %v3916 = vpop.f32.mrf.mxu0
        %v3917 = vadd.f32 0.0, %v3916
        %v3918 = vpop.f32.mrf.mxu0
        %3919 = vmatprep.mubr.f32.mxu0 0.0
        %3920 = vmatmul.mubr.f32.gmra.mxu0 %v3764
        %v3921 = vpop.f32.mrf.mxu0
        %v3922 = vadd.f32 0.0, %v3921
        %v3923 = vpop.f32.mrf.mxu0
        %3924 = vmatprep.mubr.f32.mxu0 0.0
        %3925 = vmatmul.mubr.f32.gmra.mxu0 %v3766
        %v3926 = vpop.f32.mrf.mxu0
        %v3927 = vadd.f32 0.0, %v3926
        %v3928 = vpop.f32.mrf.mxu0
        %3929 = vmatprep.mubr.f32.mxu0 0.0
        %3930 = vmatmul.mubr.f32.gmra.mxu0 %v3768
        %v3931 = vpop.f32.mrf.mxu0
        %v3932 = vadd.f32 0.0, %v3931
        %v3933 = vpop.f32.mrf.mxu0
        %3934 = vmatprep.mubr.f32.mxu0 0.0
        %3935 = vmatmul.mubr.f32.gmra.mxu0 %v3770
        %v3936 = vpop.f32.mrf.mxu0
        %v3937 = vadd.f32 0.0, %v3936
        %v3938 = vpop.f32.mrf.mxu0
        %3939 = vmatprep.mubr.f32.mxu0 0.0
        %3940 = vmatmul.mubr.f32.gmra.mxu0 %v3772
        %v3941 = vpop.f32.mrf.mxu0
        %v3942 = vadd.f32 0.0, %v3941
        %v3943 = vpop.f32.mrf.mxu0
        %3944 = vmatprep.mubr.f32.mxu0 0.0
        %3945 = vmatmul.mubr.f32.gmra.mxu0 %v3774
        %v3946 = vpop.f32.mrf.mxu0
        %v3947 = vadd.f32 0.0, %v3946
        %v3948 = vpop.f32.mrf.mxu0
        %3949 = vmatprep.mubr.f32.mxu0 0.0
        %3950 = vmatmul.mubr.f32.gmra.mxu0 %v3776
        %v3951 = vpop.f32.mrf.mxu0
        %v3952 = vadd.f32 0.0, %v3951
        %v3953 = vpop.f32.mrf.mxu0
        %3954 = vdwg.mxu0
        %v3955 = vmul.f32 %v3877, 0.25
        %v3956 = vmul.f32 %v3882, 0.25
        %v3957 = vmul.f32 %v3887, 0.25
        %v3958 = vmul.f32 %v3892, 0.25
        %v3959 = vmul.f32 %v3897, 0.25
        %v3960 = vmul.f32 %v3902, 0.25
        %v3961 = vmul.f32 %v3907, 0.25
        %v3962 = vmul.f32 %v3912, 0.25
        %v3963 = vmul.f32 %v3917, 0.25
        %v3964 = vmul.f32 %v3922, 0.25
        %v3965 = vmul.f32 %v3927, 0.25
        %v3966 = vmul.f32 %v3932, 0.25
        %v3967 = vmul.f32 %v3937, 0.25
        %v3968 = vmul.f32 %v3942, 0.25
        %v3969 = vmul.f32 %v3947, 0.25
        %v3970 = vmul.f32 %v3952, 0.25
        %3971 = vmax.xlane.f32.xlu0 %v3955
        %v3972 = vpop.xlane.xlu0 %3971
        %3973 = vmax.xlane.f32.xlu0 %v3956
        %v3974 = vpop.xlane.xlu0 %3973
        %3975 = vmax.xlane.f32.xlu0 %v3957
        %v3976 = vpop.xlane.xlu0 %3975
        %3977 = vmax.xlane.f32.xlu0 %v3958
        %v3978 = vpop.xlane.xlu0 %3977
        %3979 = vmax.xlane.f32.xlu0 %v3959
        %v3980 = vpop.xlane.xlu0 %3979
        %3981 = vmax.xlane.f32.xlu0 %v3960
        %v3982 = vpop.xlane.xlu0 %3981
        %3983 = vmax.xlane.f32.xlu0 %v3961
        %v3984 = vpop.xlane.xlu0 %3983
        %3985 = vmax.xlane.f32.xlu0 %v3962
        %v3986 = vpop.xlane.xlu0 %3985
        %3987 = vmax.xlane.f32.xlu0 %v3963
        %v3988 = vpop.xlane.xlu0 %3987
        %3989 = vmax.xlane.f32.xlu0 %v3964
        %v3990 = vpop.xlane.xlu0 %3989
        %3991 = vmax.xlane.f32.xlu0 %v3965
        %v3992 = vpop.xlane.xlu0 %3991
        %3993 = vmax.xlane.f32.xlu0 %v3966
        %v3994 = vpop.xlane.xlu0 %3993
        %3995 = vmax.xlane.f32.xlu0 %v3967
        %v3996 = vpop.xlane.xlu0 %3995
        %3997 = vmax.xlane.f32.xlu0 %v3968
        %v3998 = vpop.xlane.xlu0 %3997
        %3999 = vmax.xlane.f32.xlu0 %v3969
        %v4000 = vpop.xlane.xlu0 %3999
        %4001 = vmax.xlane.f32.xlu0 %v3970
        %v4002 = vpop.xlane.xlu0 %4001
        %v4003 = vsub.f32 %v3955, %v3972
        %v4004 = vsub.f32 %v3956, %v3974
        %v4005 = vsub.f32 %v3957, %v3976
        %v4006 = vsub.f32 %v3958, %v3978
        %v4007 = vsub.f32 %v3959, %v3980
        %v4008 = vsub.f32 %v3960, %v3982
        %v4009 = vsub.f32 %v3961, %v3984
        %v4010 = vsub.f32 %v3962, %v3986
        %v4011 = vsub.f32 %v3963, %v3988
        %v4012 = vsub.f32 %v3964, %v3990
        %v4013 = vsub.f32 %v3965, %v3992
        %v4014 = vsub.f32 %v3966, %v3994
        %v4015 = vsub.f32 %v3967, %v3996
        %v4016 = vsub.f32 %v3968, %v3998
        %v4017 = vsub.f32 %v3969, %v4000
        %v4018 = vsub.f32 %v3970, %v4002
        %v4019 = vmul.f32 %v4003, 1.442695
        %v4020 = vpow.pop %v4019
        %v4021 = vmul.f32 %v4004, 1.442695
        %v4022 = vpow.pop %v4021
        %v4023 = vmul.f32 %v4005, 1.442695
        %v4024 = vpow.pop %v4023
        %v4025 = vmul.f32 %v4006, 1.442695
        %v4026 = vpow.pop %v4025
        %v4027 = vmul.f32 %v4007, 1.442695
        %v4028 = vpow.pop %v4027
        %v4029 = vmul.f32 %v4008, 1.442695
        %v4030 = vpow.pop %v4029
        %v4031 = vmul.f32 %v4009, 1.442695
        %v4032 = vpow.pop %v4031
        %v4033 = vmul.f32 %v4010, 1.442695
        %v4034 = vpow.pop %v4033
        %v4035 = vmul.f32 %v4011, 1.442695
        %v4036 = vpow.pop %v4035
        %v4037 = vmul.f32 %v4012, 1.442695
        %v4038 = vpow.pop %v4037
        %v4039 = vmul.f32 %v4013, 1.442695
        %v4040 = vpow.pop %v4039
        %v4041 = vmul.f32 %v4014, 1.442695
        %v4042 = vpow.pop %v4041
        %v4043 = vmul.f32 %v4015, 1.442695
        %v4044 = vpow.pop %v4043
        %v4045 = vmul.f32 %v4016, 1.442695
        %v4046 = vpow.pop %v4045
        %v4047 = vmul.f32 %v4017, 1.442695
        %v4048 = vpow.pop %v4047
        %v4049 = vmul.f32 %v4018, 1.442695
        %v4050 = vpow.pop %v4049
        %4051 = vadd.xlane.f32.xlu0 %v4020
        %v4052 = vpop.xlane.xlu0 %4051
        %4053 = vadd.xlane.f32.xlu0 %v4022
        %v4054 = vpop.xlane.xlu0 %4053
        %4055 = vadd.xlane.f32.xlu0 %v4024
        %v4056 = vpop.xlane.xlu0 %4055
        %4057 = vadd.xlane.f32.xlu0 %v4026
        %v4058 = vpop.xlane.xlu0 %4057
        %4059 = vadd.xlane.f32.xlu0 %v4028
        %v4060 = vpop.xlane.xlu0 %4059
        %4061 = vadd.xlane.f32.xlu0 %v4030
        %v4062 = vpop.xlane.xlu0 %4061
        %4063 = vadd.xlane.f32.xlu0 %v4032
        %v4064 = vpop.xlane.xlu0 %4063
        %4065 = vadd.xlane.f32.xlu0 %v4034
        %v4066 = vpop.xlane.xlu0 %4065
        %4067 = vadd.xlane.f32.xlu0 %v4036
        %v4068 = vpop.xlane.xlu0 %4067
        %4069 = vadd.xlane.f32.xlu0 %v4038
        %v4070 = vpop.xlane.xlu0 %4069
        %4071 = vadd.xlane.f32.xlu0 %v4040
        %v4072 = vpop.xlane.xlu0 %4071
        %4073 = vadd.xlane.f32.xlu0 %v4042
        %v4074 = vpop.xlane.xlu0 %4073
        %4075 = vadd.xlane.f32.xlu0 %v4044
        %v4076 = vpop.xlane.xlu0 %4075
        %4077 = vadd.xlane.f32.xlu0 %v4046
        %v4078 = vpop.xlane.xlu0 %4077
        %4079 = vadd.xlane.f32.xlu0 %v4048
        %v4080 = vpop.xlane.xlu0 %4079
        %4081 = vadd.xlane.f32.xlu0 %v4050
        %v4082 = vpop.xlane.xlu0 %4081
        %4083 = vrot.lane.b32.xlu0 %v537, 48
        %v4084 = vpop.permute.xlu0 %4083
        %4085 = vrot.lane.b32.xlu0 %v542, 48
        %v4086 = vpop.permute.xlu0 %4085
        %4087 = vrot.lane.b32.xlu0 %v547, 48
        %v4088 = vpop.permute.xlu0 %4087
        %4089 = vrot.lane.b32.xlu0 %v552, 48
        %v4090 = vpop.permute.xlu0 %4089
        %4091 = vrot.lane.b32.xlu0 %v557, 48
        %v4092 = vpop.permute.xlu0 %4091
        %4093 = vrot.lane.b32.xlu0 %v562, 48
        %v4094 = vpop.permute.xlu0 %4093
        %4095 = vrot.lane.b32.xlu0 %v567, 48
        %v4096 = vpop.permute.xlu0 %4095
        %4097 = vrot.lane.b32.xlu0 %v572, 48
        %v4098 = vpop.permute.xlu0 %4097
        %4099 = vrot.lane.b32.xlu0 %v577, 48
        %v4100 = vpop.permute.xlu0 %4099
        %4101 = vrot.lane.b32.xlu0 %v582, 48
        %v4102 = vpop.permute.xlu0 %4101
        %4103 = vrot.lane.b32.xlu0 %v587, 48
        %v4104 = vpop.permute.xlu0 %4103
        %4105 = vrot.lane.b32.xlu0 %v592, 48
        %v4106 = vpop.permute.xlu0 %4105
        %4107 = vrot.lane.b32.xlu0 %v597, 48
        %v4108 = vpop.permute.xlu0 %4107
        %4109 = vrot.lane.b32.xlu0 %v602, 48
        %v4110 = vpop.permute.xlu0 %4109
        %4111 = vrot.lane.b32.xlu0 %v607, 48
        %v4112 = vpop.permute.xlu0 %4111
        %4113 = vrot.lane.b32.xlu0 %v612, 48
        %v4114 = vpop.permute.xlu0 %4113
        %4131 = vmatprep.subr.mxu0 0.0
        %4132 = vmatpush1.msra.mxu0 %v4114
        %4133 = vmatprep.subr.mxu0 0.0
        %4134 = vmatpush1.msra.mxu0 %v4112
        %4135 = vmatprep.subr.mxu0 0.0
        %4136 = vmatpush1.msra.mxu0 %v4110
        %4137 = vmatprep.subr.mxu0 0.0
        %4138 = vmatpush1.msra.mxu0 %v4108
        %4139 = vmatprep.subr.mxu0 0.0
        %4140 = vmatpush1.msra.mxu0 %v4106
        %4141 = vmatprep.subr.mxu0 0.0
        %4142 = vmatpush1.msra.mxu0 %v4104
        %4143 = vmatprep.subr.mxu0 0.0
        %4144 = vmatpush1.msra.mxu0 %v4102
        %4145 = vmatprep.subr.mxu0 0.0
        %4146 = vmatpush1.msra.mxu0 %v4100
        %4147 = vmatprep.subr.mxu0 0.0
        %4148 = vmatpush1.msra.mxu0 %v4098
        %4149 = vmatprep.subr.mxu0 0.0
        %4150 = vmatpush1.msra.mxu0 %v4096
        %4151 = vmatprep.subr.mxu0 0.0
        %4152 = vmatpush1.msra.mxu0 %v4094
        %4153 = vmatprep.subr.mxu0 0.0
        %4154 = vmatpush1.msra.mxu0 %v4092
        %4155 = vmatprep.subr.mxu0 0.0
        %4156 = vmatpush1.msra.mxu0 %v4090
        %4157 = vmatprep.subr.mxu0 0.0
        %4158 = vmatpush1.msra.mxu0 %v4088
        %4159 = vmatprep.subr.mxu0 0.0
        %4160 = vmatpush1.msra.mxu0 %v4086
        %4161 = vmatprep.subr.mxu0 0.0
        %4162 = vmatpush1.msra.mxu0 %v4084
        %4163 = vmatprep.subr.mxu0 0.0
        %4164 = vmatpush2.msra.mxu0 0.0
        %4165 = vmatprep.subr.mxu0 0.0
        %4166 = vmatpush2.msra.mxu0 0.0
        %4167 = vmatprep.subr.mxu0 0.0
        %4168 = vmatpush2.msra.mxu0 0.0
        %4169 = vmatprep.subr.mxu0 0.0
        %4170 = vmatpush2.msra.mxu0 0.0
        %4171 = vmatprep.subr.mxu0 0.0
        %4172 = vmatpush2.msra.mxu0 0.0
        %4173 = vmatprep.subr.mxu0 0.0
        %4174 = vmatpush2.msra.mxu0 0.0
        %4175 = vmatprep.subr.mxu0 0.0
        %4176 = vmatpush2.msra.mxu0 0.0
        %4177 = vmatprep.subr.mxu0 0.0
        %4178 = vmatpush2.msra.mxu0 0.0
        %4179 = vmatprep.subr.mxu0 0.0
        %4180 = vmatpush2.msra.mxu0 0.0
        %4181 = vmatprep.subr.mxu0 0.0
        %4182 = vmatpush2.msra.mxu0 0.0
        %4183 = vmatprep.subr.mxu0 0.0
        %4184 = vmatpush2.msra.mxu0 0.0
        %4185 = vmatprep.subr.mxu0 0.0
        %4186 = vmatpush2.msra.mxu0 0.0
        %4187 = vmatprep.subr.mxu0 0.0
        %4188 = vmatpush2.msra.mxu0 0.0
        %4189 = vmatprep.subr.mxu0 0.0
        %4190 = vmatpush2.msra.mxu0 0.0
        %4191 = vmatprep.subr.mxu0 0.0
        %4192 = vmatpush2.msra.mxu0 0.0
        %4193 = vmatprep.subr.mxu0 0.0
        %4194 = vmatpush2.msra.mxu0 0.0
        %4195 = vmatprep.mubr.f32.mxu0 0.0
        %4196 = vmatmul.mubr.f32.gmra.mxu0 %v4020
        %v4197 = vpop.f32.mrf.mxu0
        %v4198 = vadd.f32 0.0, %v4197
        %v4199 = vpop.f32.mrf.mxu0
        %4200 = vmatprep.mubr.f32.mxu0 0.0
        %4201 = vmatmul.mubr.f32.gmra.mxu0 %v4022
        %v4202 = vpop.f32.mrf.mxu0
        %v4203 = vadd.f32 0.0, %v4202
        %v4204 = vpop.f32.mrf.mxu0
        %4205 = vmatprep.mubr.f32.mxu0 0.0
        %4206 = vmatmul.mubr.f32.gmra.mxu0 %v4024
        %v4207 = vpop.f32.mrf.mxu0
        %v4208 = vadd.f32 0.0, %v4207
        %v4209 = vpop.f32.mrf.mxu0
        %4210 = vmatprep.mubr.f32.mxu0 0.0
        %4211 = vmatmul.mubr.f32.gmra.mxu0 %v4026
        %v4212 = vpop.f32.mrf.mxu0
        %v4213 = vadd.f32 0.0, %v4212
        %v4214 = vpop.f32.mrf.mxu0
        %4215 = vmatprep.mubr.f32.mxu0 0.0
        %4216 = vmatmul.mubr.f32.gmra.mxu0 %v4028
        %v4217 = vpop.f32.mrf.mxu0
        %v4218 = vadd.f32 0.0, %v4217
        %v4219 = vpop.f32.mrf.mxu0
        %4220 = vmatprep.mubr.f32.mxu0 0.0
        %4221 = vmatmul.mubr.f32.gmra.mxu0 %v4030
        %v4222 = vpop.f32.mrf.mxu0
        %v4223 = vadd.f32 0.0, %v4222
        %v4224 = vpop.f32.mrf.mxu0
        %4225 = vmatprep.mubr.f32.mxu0 0.0
        %4226 = vmatmul.mubr.f32.gmra.mxu0 %v4032
        %v4227 = vpop.f32.mrf.mxu0
        %v4228 = vadd.f32 0.0, %v4227
        %v4229 = vpop.f32.mrf.mxu0
        %4230 = vmatprep.mubr.f32.mxu0 0.0
        %4231 = vmatmul.mubr.f32.gmra.mxu0 %v4034
        %v4232 = vpop.f32.mrf.mxu0
        %v4233 = vadd.f32 0.0, %v4232
        %v4234 = vpop.f32.mrf.mxu0
        %4235 = vmatprep.mubr.f32.mxu0 0.0
        %4236 = vmatmul.mubr.f32.gmra.mxu0 %v4036
        %v4237 = vpop.f32.mrf.mxu0
        %v4238 = vadd.f32 0.0, %v4237
        %v4239 = vpop.f32.mrf.mxu0
        %4240 = vmatprep.mubr.f32.mxu0 0.0
        %4241 = vmatmul.mubr.f32.gmra.mxu0 %v4038
        %v4242 = vpop.f32.mrf.mxu0
        %v4243 = vadd.f32 0.0, %v4242
        %v4244 = vpop.f32.mrf.mxu0
        %4245 = vmatprep.mubr.f32.mxu0 0.0
        %4246 = vmatmul.mubr.f32.gmra.mxu0 %v4040
        %v4247 = vpop.f32.mrf.mxu0
        %v4248 = vadd.f32 0.0, %v4247
        %v4249 = vpop.f32.mrf.mxu0
        %4250 = vmatprep.mubr.f32.mxu0 0.0
        %4251 = vmatmul.mubr.f32.gmra.mxu0 %v4042
        %v4252 = vpop.f32.mrf.mxu0
        %v4253 = vadd.f32 0.0, %v4252
        %v4254 = vpop.f32.mrf.mxu0
        %4255 = vmatprep.mubr.f32.mxu0 0.0
        %4256 = vmatmul.mubr.f32.gmra.mxu0 %v4044
        %v4257 = vpop.f32.mrf.mxu0
        %v4258 = vadd.f32 0.0, %v4257
        %v4259 = vpop.f32.mrf.mxu0
        %4260 = vmatprep.mubr.f32.mxu0 0.0
        %4261 = vmatmul.mubr.f32.gmra.mxu0 %v4046
        %v4262 = vpop.f32.mrf.mxu0
        %v4263 = vadd.f32 0.0, %v4262
        %v4264 = vpop.f32.mrf.mxu0
        %4265 = vmatprep.mubr.f32.mxu0 0.0
        %4266 = vmatmul.mubr.f32.gmra.mxu0 %v4048
        %v4267 = vpop.f32.mrf.mxu0
        %v4268 = vadd.f32 0.0, %v4267
        %v4269 = vpop.f32.mrf.mxu0
        %4270 = vmatprep.mubr.f32.mxu0 0.0
        %4271 = vmatmul.mubr.f32.gmra.mxu0 %v4050
        %v4272 = vpop.f32.mrf.mxu0
        %v4273 = vadd.f32 0.0, %v4272
        %v4274 = vpop.f32.mrf.mxu0
        %4275 = vdwg.mxu0
        %v4276 = vrcp.pop %v4052
        %v4277 = vrcp.pop %v4054
        %v4278 = vrcp.pop %v4056
        %v4279 = vrcp.pop %v4058
        %v4280 = vrcp.pop %v4060
        %v4281 = vrcp.pop %v4062
        %v4282 = vrcp.pop %v4064
        %v4283 = vrcp.pop %v4066
        %v4284 = vrcp.pop %v4068
        %v4285 = vrcp.pop %v4070
        %v4286 = vrcp.pop %v4072
        %v4287 = vrcp.pop %v4074
        %v4288 = vrcp.pop %v4076
        %v4289 = vrcp.pop %v4078
        %v4290 = vrcp.pop %v4080
        %v4291 = vrcp.pop %v4082
        %v4292 = vmul.f32 %v4198, %v4276
        %v4293 = vmul.f32 %v4203, %v4277
        %v4294 = vmul.f32 %v4208, %v4278
        %v4295 = vmul.f32 %v4213, %v4279
        %v4296 = vmul.f32 %v4218, %v4280
        %v4297 = vmul.f32 %v4223, %v4281
        %v4298 = vmul.f32 %v4228, %v4282
        %v4299 = vmul.f32 %v4233, %v4283
        %v4300 = vmul.f32 %v4238, %v4284
        %v4301 = vmul.f32 %v4243, %v4285
        %v4302 = vmul.f32 %v4248, %v4286
        %v4303 = vmul.f32 %v4253, %v4287
        %v4304 = vmul.f32 %v4258, %v4288
        %v4305 = vmul.f32 %v4263, %v4289
        %v4306 = vmul.f32 %v4268, %v4290
        %v4307 = vmul.f32 %v4273, %v4291
        %4308 = vrot.lane.b32.xlu0 %v376, 32
        %v4309 = vpop.permute.xlu0 %4308
        %4310 = vrot.lane.b32.xlu0 %v382, 32
        %v4311 = vpop.permute.xlu0 %4310
        %4312 = vrot.lane.b32.xlu0 %v388, 32
        %v4313 = vpop.permute.xlu0 %4312
        %4314 = vrot.lane.b32.xlu0 %v394, 32
        %v4315 = vpop.permute.xlu0 %4314
        %4316 = vrot.lane.b32.xlu0 %v400, 32
        %v4317 = vpop.permute.xlu0 %4316
        %4318 = vrot.lane.b32.xlu0 %v406, 32
        %v4319 = vpop.permute.xlu0 %4318
        %4320 = vrot.lane.b32.xlu0 %v412, 32
        %v4321 = vpop.permute.xlu0 %4320
        %4322 = vrot.lane.b32.xlu0 %v418, 32
        %v4323 = vpop.permute.xlu0 %4322
        %4324 = vrot.lane.b32.xlu0 %v424, 32
        %v4325 = vpop.permute.xlu0 %4324
        %4326 = vrot.lane.b32.xlu0 %v430, 32
        %v4327 = vpop.permute.xlu0 %4326
        %4328 = vrot.lane.b32.xlu0 %v436, 32
        %v4329 = vpop.permute.xlu0 %4328
        %4330 = vrot.lane.b32.xlu0 %v442, 32
        %v4331 = vpop.permute.xlu0 %4330
        %4332 = vrot.lane.b32.xlu0 %v448, 32
        %v4333 = vpop.permute.xlu0 %4332
        %4334 = vrot.lane.b32.xlu0 %v454, 32
        %v4335 = vpop.permute.xlu0 %4334
        %4336 = vrot.lane.b32.xlu0 %v460, 32
        %v4337 = vpop.permute.xlu0 %4336
        %4338 = vrot.lane.b32.xlu0 %v466, 32
        %v4339 = vpop.permute.xlu0 %4338
        %4340 = vrot.lane.b32.xlu0 %v378, 32
        %v4341 = vpop.permute.xlu0 %4340
        %4342 = vrot.lane.b32.xlu0 %v384, 32
        %v4343 = vpop.permute.xlu0 %4342
        %4344 = vrot.lane.b32.xlu0 %v390, 32
        %v4345 = vpop.permute.xlu0 %4344
        %4346 = vrot.lane.b32.xlu0 %v396, 32
        %v4347 = vpop.permute.xlu0 %4346
        %4348 = vrot.lane.b32.xlu0 %v402, 32
        %v4349 = vpop.permute.xlu0 %4348
        %4350 = vrot.lane.b32.xlu0 %v408, 32
        %v4351 = vpop.permute.xlu0 %4350
        %4352 = vrot.lane.b32.xlu0 %v414, 32
        %v4353 = vpop.permute.xlu0 %4352
        %4354 = vrot.lane.b32.xlu0 %v420, 32
        %v4355 = vpop.permute.xlu0 %4354
        %4356 = vrot.lane.b32.xlu0 %v426, 32
        %v4357 = vpop.permute.xlu0 %4356
        %4358 = vrot.lane.b32.xlu0 %v432, 32
        %v4359 = vpop.permute.xlu0 %4358
        %4360 = vrot.lane.b32.xlu0 %v438, 32
        %v4361 = vpop.permute.xlu0 %4360
        %4362 = vrot.lane.b32.xlu0 %v444, 32
        %v4363 = vpop.permute.xlu0 %4362
        %4364 = vrot.lane.b32.xlu0 %v450, 32
        %v4365 = vpop.permute.xlu0 %4364
        %4366 = vrot.lane.b32.xlu0 %v456, 32
        %v4367 = vpop.permute.xlu0 %4366
        %4368 = vrot.lane.b32.xlu0 %v462, 32
        %v4369 = vpop.permute.xlu0 %4368
        %4370 = vrot.lane.b32.xlu0 %v468, 32
        %v4371 = vpop.permute.xlu0 %4370
        %v4372 = vsel %vm615, %v4309, 0
        %v4374 = vsel %vm615, %v4311, 0
        %v4376 = vsel %vm615, %v4313, 0
        %v4378 = vsel %vm615, %v4315, 0
        %v4380 = vsel %vm615, %v4317, 0
        %v4382 = vsel %vm615, %v4319, 0
        %v4384 = vsel %vm615, %v4321, 0
        %v4386 = vsel %vm615, %v4323, 0
        %v4388 = vsel %vm615, %v4325, 0
        %v4390 = vsel %vm615, %v4327, 0
        %v4392 = vsel %vm615, %v4329, 0
        %v4394 = vsel %vm615, %v4331, 0
        %v4396 = vsel %vm615, %v4333, 0
        %v4398 = vsel %vm615, %v4335, 0
        %v4400 = vsel %vm615, %v4337, 0
        %v4402 = vsel %vm615, %v4339, 0
        %v4404 = vsel %vm615, %v4341, 0
        %v4406 = vsel %vm615, %v4343, 0
        %v4408 = vsel %vm615, %v4345, 0
        %v4410 = vsel %vm615, %v4347, 0
        %v4412 = vsel %vm615, %v4349, 0
        %v4414 = vsel %vm615, %v4351, 0
        %v4416 = vsel %vm615, %v4353, 0
        %v4418 = vsel %vm615, %v4355, 0
        %v4420 = vsel %vm615, %v4357, 0
        %v4422 = vsel %vm615, %v4359, 0
        %v4424 = vsel %vm615, %v4361, 0
        %v4426 = vsel %vm615, %v4363, 0
        %v4428 = vsel %vm615, %v4365, 0
        %v4430 = vsel %vm615, %v4367, 0
        %v4432 = vsel %vm615, %v4369, 0
        %v4434 = vsel %vm615, %v4371, 0
        %4436 = vmatprep.subr.mxu0 0.0
        %4437 = vmatpush1.xpose.msra.mxu0 %v4434
        %4438 = vmatprep.subr.mxu0 0.0
        %4439 = vmatpush1.xpose.msra.mxu0 %v4432
        %4440 = vmatprep.subr.mxu0 0.0
        %4441 = vmatpush1.xpose.msra.mxu0 %v4430
        %4442 = vmatprep.subr.mxu0 0.0
        %4443 = vmatpush1.xpose.msra.mxu0 %v4428
        %4444 = vmatprep.subr.mxu0 0.0
        %4445 = vmatpush1.xpose.msra.mxu0 %v4426
        %4446 = vmatprep.subr.mxu0 0.0
        %4447 = vmatpush1.xpose.msra.mxu0 %v4424
        %4448 = vmatprep.subr.mxu0 0.0
        %4449 = vmatpush1.xpose.msra.mxu0 %v4422
        %4450 = vmatprep.subr.mxu0 0.0
        %4451 = vmatpush1.xpose.msra.mxu0 %v4420
        %4452 = vmatprep.subr.mxu0 0.0
        %4453 = vmatpush1.xpose.msra.mxu0 %v4418
        %4454 = vmatprep.subr.mxu0 0.0
        %4455 = vmatpush1.xpose.msra.mxu0 %v4416
        %4456 = vmatprep.subr.mxu0 0.0
        %4457 = vmatpush1.xpose.msra.mxu0 %v4414
        %4458 = vmatprep.subr.mxu0 0.0
        %4459 = vmatpush1.xpose.msra.mxu0 %v4412
        %4460 = vmatprep.subr.mxu0 0.0
        %4461 = vmatpush1.xpose.msra.mxu0 %v4410
        %4462 = vmatprep.subr.mxu0 0.0
        %4463 = vmatpush1.xpose.msra.mxu0 %v4408
        %4464 = vmatprep.subr.mxu0 0.0
        %4465 = vmatpush1.xpose.msra.mxu0 %v4406
        %4466 = vmatprep.subr.mxu0 0.0
        %4467 = vmatpush1.xpose.msra.mxu0 %v4404
        %4468 = vmatprep.subr.mxu0 0.0
        %4469 = vmatpush2.xpose.msra.mxu0 0.0
        %4470 = vmatprep.subr.mxu0 0.0
        %4471 = vmatpush2.xpose.msra.mxu0 0.0
        %4472 = vmatprep.subr.mxu0 0.0
        %4473 = vmatpush2.xpose.msra.mxu0 0.0
        %4474 = vmatprep.subr.mxu0 0.0
        %4475 = vmatpush2.xpose.msra.mxu0 0.0
        %4476 = vmatprep.subr.mxu0 0.0
        %4477 = vmatpush2.xpose.msra.mxu0 0.0
        %4478 = vmatprep.subr.mxu0 0.0
        %4479 = vmatpush2.xpose.msra.mxu0 0.0
        %4480 = vmatprep.subr.mxu0 0.0
        %4481 = vmatpush2.xpose.msra.mxu0 0.0
        %4482 = vmatprep.subr.mxu0 0.0
        %4483 = vmatpush2.xpose.msra.mxu0 0.0
        %4484 = vmatprep.subr.mxu0 0.0
        %4485 = vmatpush2.xpose.msra.mxu0 0.0
        %4486 = vmatprep.subr.mxu0 0.0
        %4487 = vmatpush2.xpose.msra.mxu0 0.0
        %4488 = vmatprep.subr.mxu0 0.0
        %4489 = vmatpush2.xpose.msra.mxu0 0.0
        %4490 = vmatprep.subr.mxu0 0.0
        %4491 = vmatpush2.xpose.msra.mxu0 0.0
        %4492 = vmatprep.subr.mxu0 0.0
        %4493 = vmatpush2.xpose.msra.mxu0 0.0
        %4494 = vmatprep.subr.mxu0 0.0
        %4495 = vmatpush2.xpose.msra.mxu0 0.0
        %4496 = vmatprep.subr.mxu0 0.0
        %4497 = vmatpush2.xpose.msra.mxu0 0.0
        %4498 = vmatprep.subr.mxu0 0.0
        %4499 = vmatpush2.xpose.msra.mxu0 0.0
        %4500 = vmatprep.mubr.f32.mxu0 0.0
        %4501 = vmatmul.mubr.f32.gmra.mxu0 %v4372
        %v4502 = vpop.f32.mrf.mxu0
        %v4503 = vadd.f32 0.0, %v4502
        %v4504 = vpop.f32.mrf.mxu0
        %4505 = vmatprep.mubr.f32.mxu0 0.0
        %4506 = vmatmul.mubr.f32.gmra.mxu0 %v4374
        %v4507 = vpop.f32.mrf.mxu0
        %v4508 = vadd.f32 0.0, %v4507
        %v4509 = vpop.f32.mrf.mxu0
        %4510 = vmatprep.mubr.f32.mxu0 0.0
        %4511 = vmatmul.mubr.f32.gmra.mxu0 %v4376
        %v4512 = vpop.f32.mrf.mxu0
        %v4513 = vadd.f32 0.0, %v4512
        %v4514 = vpop.f32.mrf.mxu0
        %4515 = vmatprep.mubr.f32.mxu0 0.0
        %4516 = vmatmul.mubr.f32.gmra.mxu0 %v4378
        %v4517 = vpop.f32.mrf.mxu0
        %v4518 = vadd.f32 0.0, %v4517
        %v4519 = vpop.f32.mrf.mxu0
        %4520 = vmatprep.mubr.f32.mxu0 0.0
        %4521 = vmatmul.mubr.f32.gmra.mxu0 %v4380
        %v4522 = vpop.f32.mrf.mxu0
        %v4523 = vadd.f32 0.0, %v4522
        %v4524 = vpop.f32.mrf.mxu0
        %4525 = vmatprep.mubr.f32.mxu0 0.0
        %4526 = vmatmul.mubr.f32.gmra.mxu0 %v4382
        %v4527 = vpop.f32.mrf.mxu0
        %v4528 = vadd.f32 0.0, %v4527
        %v4529 = vpop.f32.mrf.mxu0
        %4530 = vmatprep.mubr.f32.mxu0 0.0
        %4531 = vmatmul.mubr.f32.gmra.mxu0 %v4384
        %v4532 = vpop.f32.mrf.mxu0
        %v4533 = vadd.f32 0.0, %v4532
        %v4534 = vpop.f32.mrf.mxu0
        %4535 = vmatprep.mubr.f32.mxu0 0.0
        %4536 = vmatmul.mubr.f32.gmra.mxu0 %v4386
        %v4537 = vpop.f32.mrf.mxu0
        %v4538 = vadd.f32 0.0, %v4537
        %v4539 = vpop.f32.mrf.mxu0
        %4540 = vmatprep.mubr.f32.mxu0 0.0
        %4541 = vmatmul.mubr.f32.gmra.mxu0 %v4388
        %v4542 = vpop.f32.mrf.mxu0
        %v4543 = vadd.f32 0.0, %v4542
        %v4544 = vpop.f32.mrf.mxu0
        %4545 = vmatprep.mubr.f32.mxu0 0.0
        %4546 = vmatmul.mubr.f32.gmra.mxu0 %v4390
        %v4547 = vpop.f32.mrf.mxu0
        %v4548 = vadd.f32 0.0, %v4547
        %v4549 = vpop.f32.mrf.mxu0
        %4550 = vmatprep.mubr.f32.mxu0 0.0
        %4551 = vmatmul.mubr.f32.gmra.mxu0 %v4392
        %v4552 = vpop.f32.mrf.mxu0
        %v4553 = vadd.f32 0.0, %v4552
        %v4554 = vpop.f32.mrf.mxu0
        %4555 = vmatprep.mubr.f32.mxu0 0.0
        %4556 = vmatmul.mubr.f32.gmra.mxu0 %v4394
        %v4557 = vpop.f32.mrf.mxu0
        %v4558 = vadd.f32 0.0, %v4557
        %v4559 = vpop.f32.mrf.mxu0
        %4560 = vmatprep.mubr.f32.mxu0 0.0
        %4561 = vmatmul.mubr.f32.gmra.mxu0 %v4396
        %v4562 = vpop.f32.mrf.mxu0
        %v4563 = vadd.f32 0.0, %v4562
        %v4564 = vpop.f32.mrf.mxu0
        %4565 = vmatprep.mubr.f32.mxu0 0.0
        %4566 = vmatmul.mubr.f32.gmra.mxu0 %v4398
        %v4567 = vpop.f32.mrf.mxu0
        %v4568 = vadd.f32 0.0, %v4567
        %v4569 = vpop.f32.mrf.mxu0
        %4570 = vmatprep.mubr.f32.mxu0 0.0
        %4571 = vmatmul.mubr.f32.gmra.mxu0 %v4400
        %v4572 = vpop.f32.mrf.mxu0
        %v4573 = vadd.f32 0.0, %v4572
        %v4574 = vpop.f32.mrf.mxu0
        %4575 = vmatprep.mubr.f32.mxu0 0.0
        %4576 = vmatmul.mubr.f32.gmra.mxu0 %v4402
        %v4577 = vpop.f32.mrf.mxu0
        %v4578 = vadd.f32 0.0, %v4577
        %v4579 = vpop.f32.mrf.mxu0
        %4580 = vdwg.mxu0
        %v4581 = vmul.f32 %v4503, 0.25
        %v4582 = vmul.f32 %v4508, 0.25
        %v4583 = vmul.f32 %v4513, 0.25
        %v4584 = vmul.f32 %v4518, 0.25
        %v4585 = vmul.f32 %v4523, 0.25
        %v4586 = vmul.f32 %v4528, 0.25
        %v4587 = vmul.f32 %v4533, 0.25
        %v4588 = vmul.f32 %v4538, 0.25
        %v4589 = vmul.f32 %v4543, 0.25
        %v4590 = vmul.f32 %v4548, 0.25
        %v4591 = vmul.f32 %v4553, 0.25
        %v4592 = vmul.f32 %v4558, 0.25
        %v4593 = vmul.f32 %v4563, 0.25
        %v4594 = vmul.f32 %v4568, 0.25
        %v4595 = vmul.f32 %v4573, 0.25
        %v4596 = vmul.f32 %v4578, 0.25
        %4597 = vmax.xlane.f32.xlu0 %v4581
        %v4598 = vpop.xlane.xlu0 %4597
        %4599 = vmax.xlane.f32.xlu0 %v4582
        %v4600 = vpop.xlane.xlu0 %4599
        %4601 = vmax.xlane.f32.xlu0 %v4583
        %v4602 = vpop.xlane.xlu0 %4601
        %4603 = vmax.xlane.f32.xlu0 %v4584
        %v4604 = vpop.xlane.xlu0 %4603
        %4605 = vmax.xlane.f32.xlu0 %v4585
        %v4606 = vpop.xlane.xlu0 %4605
        %4607 = vmax.xlane.f32.xlu0 %v4586
        %v4608 = vpop.xlane.xlu0 %4607
        %4609 = vmax.xlane.f32.xlu0 %v4587
        %v4610 = vpop.xlane.xlu0 %4609
        %4611 = vmax.xlane.f32.xlu0 %v4588
        %v4612 = vpop.xlane.xlu0 %4611
        %4613 = vmax.xlane.f32.xlu0 %v4589
        %v4614 = vpop.xlane.xlu0 %4613
        %4615 = vmax.xlane.f32.xlu0 %v4590
        %v4616 = vpop.xlane.xlu0 %4615
        %4617 = vmax.xlane.f32.xlu0 %v4591
        %v4618 = vpop.xlane.xlu0 %4617
        %4619 = vmax.xlane.f32.xlu0 %v4592
        %v4620 = vpop.xlane.xlu0 %4619
        %4621 = vmax.xlane.f32.xlu0 %v4593
        %v4622 = vpop.xlane.xlu0 %4621
        %4623 = vmax.xlane.f32.xlu0 %v4594
        %v4624 = vpop.xlane.xlu0 %4623
        %4625 = vmax.xlane.f32.xlu0 %v4595
        %v4626 = vpop.xlane.xlu0 %4625
        %4627 = vmax.xlane.f32.xlu0 %v4596
        %v4628 = vpop.xlane.xlu0 %4627
        %v4629 = vsub.f32 %v4581, %v4598
        %v4630 = vsub.f32 %v4582, %v4600
        %v4631 = vsub.f32 %v4583, %v4602
        %v4632 = vsub.f32 %v4584, %v4604
        %v4633 = vsub.f32 %v4585, %v4606
        %v4634 = vsub.f32 %v4586, %v4608
        %v4635 = vsub.f32 %v4587, %v4610
        %v4636 = vsub.f32 %v4588, %v4612
        %v4637 = vsub.f32 %v4589, %v4614
        %v4638 = vsub.f32 %v4590, %v4616
        %v4639 = vsub.f32 %v4591, %v4618
        %v4640 = vsub.f32 %v4592, %v4620
        %v4641 = vsub.f32 %v4593, %v4622
        %v4642 = vsub.f32 %v4594, %v4624
        %v4643 = vsub.f32 %v4595, %v4626
        %v4644 = vsub.f32 %v4596, %v4628
        %v4645 = vmul.f32 %v4629, 1.442695
        %v4646 = vpow.pop %v4645
        %v4647 = vmul.f32 %v4630, 1.442695
        %v4648 = vpow.pop %v4647
        %v4649 = vmul.f32 %v4631, 1.442695
        %v4650 = vpow.pop %v4649
        %v4651 = vmul.f32 %v4632, 1.442695
        %v4652 = vpow.pop %v4651
        %v4653 = vmul.f32 %v4633, 1.442695
        %v4654 = vpow.pop %v4653
        %v4655 = vmul.f32 %v4634, 1.442695
        %v4656 = vpow.pop %v4655
        %v4657 = vmul.f32 %v4635, 1.442695
        %v4658 = vpow.pop %v4657
        %v4659 = vmul.f32 %v4636, 1.442695
        %v4660 = vpow.pop %v4659
        %v4661 = vmul.f32 %v4637, 1.442695
        %v4662 = vpow.pop %v4661
        %v4663 = vmul.f32 %v4638, 1.442695
        %v4664 = vpow.pop %v4663
        %v4665 = vmul.f32 %v4639, 1.442695
        %v4666 = vpow.pop %v4665
        %v4667 = vmul.f32 %v4640, 1.442695
        %v4668 = vpow.pop %v4667
        %v4669 = vmul.f32 %v4641, 1.442695
        %v4670 = vpow.pop %v4669
        %v4671 = vmul.f32 %v4642, 1.442695
        %v4672 = vpow.pop %v4671
        %v4673 = vmul.f32 %v4643, 1.442695
        %v4674 = vpow.pop %v4673
        %v4675 = vmul.f32 %v4644, 1.442695
        %v4676 = vpow.pop %v4675
        %4677 = vadd.xlane.f32.xlu0 %v4646
        %v4678 = vpop.xlane.xlu0 %4677
        %4679 = vadd.xlane.f32.xlu0 %v4648
        %v4680 = vpop.xlane.xlu0 %4679
        %4681 = vadd.xlane.f32.xlu0 %v4650
        %v4682 = vpop.xlane.xlu0 %4681
        %4683 = vadd.xlane.f32.xlu0 %v4652
        %v4684 = vpop.xlane.xlu0 %4683
        %4685 = vadd.xlane.f32.xlu0 %v4654
        %v4686 = vpop.xlane.xlu0 %4685
        %4687 = vadd.xlane.f32.xlu0 %v4656
        %v4688 = vpop.xlane.xlu0 %4687
        %4689 = vadd.xlane.f32.xlu0 %v4658
        %v4690 = vpop.xlane.xlu0 %4689
        %4691 = vadd.xlane.f32.xlu0 %v4660
        %v4692 = vpop.xlane.xlu0 %4691
        %4693 = vadd.xlane.f32.xlu0 %v4662
        %v4694 = vpop.xlane.xlu0 %4693
        %4695 = vadd.xlane.f32.xlu0 %v4664
        %v4696 = vpop.xlane.xlu0 %4695
        %4697 = vadd.xlane.f32.xlu0 %v4666
        %v4698 = vpop.xlane.xlu0 %4697
        %4699 = vadd.xlane.f32.xlu0 %v4668
        %v4700 = vpop.xlane.xlu0 %4699
        %4701 = vadd.xlane.f32.xlu0 %v4670
        %v4702 = vpop.xlane.xlu0 %4701
        %4703 = vadd.xlane.f32.xlu0 %v4672
        %v4704 = vpop.xlane.xlu0 %4703
        %4705 = vadd.xlane.f32.xlu0 %v4674
        %v4706 = vpop.xlane.xlu0 %4705
        %4707 = vadd.xlane.f32.xlu0 %v4676
        %v4708 = vpop.xlane.xlu0 %4707
        %4709 = vrot.lane.b32.xlu0 %v537, 32
        %v4710 = vpop.permute.xlu0 %4709
        %4711 = vrot.lane.b32.xlu0 %v542, 32
        %v4712 = vpop.permute.xlu0 %4711
        %4713 = vrot.lane.b32.xlu0 %v547, 32
        %v4714 = vpop.permute.xlu0 %4713
        %4715 = vrot.lane.b32.xlu0 %v552, 32
        %v4716 = vpop.permute.xlu0 %4715
        %4717 = vrot.lane.b32.xlu0 %v557, 32
        %v4718 = vpop.permute.xlu0 %4717
        %4719 = vrot.lane.b32.xlu0 %v562, 32
        %v4720 = vpop.permute.xlu0 %4719
        %4721 = vrot.lane.b32.xlu0 %v567, 32
        %v4722 = vpop.permute.xlu0 %4721
        %4723 = vrot.lane.b32.xlu0 %v572, 32
        %v4724 = vpop.permute.xlu0 %4723
        %4725 = vrot.lane.b32.xlu0 %v577, 32
        %v4726 = vpop.permute.xlu0 %4725
        %4727 = vrot.lane.b32.xlu0 %v582, 32
        %v4728 = vpop.permute.xlu0 %4727
        %4729 = vrot.lane.b32.xlu0 %v587, 32
        %v4730 = vpop.permute.xlu0 %4729
        %4731 = vrot.lane.b32.xlu0 %v592, 32
        %v4732 = vpop.permute.xlu0 %4731
        %4733 = vrot.lane.b32.xlu0 %v597, 32
        %v4734 = vpop.permute.xlu0 %4733
        %4735 = vrot.lane.b32.xlu0 %v602, 32
        %v4736 = vpop.permute.xlu0 %4735
        %4737 = vrot.lane.b32.xlu0 %v607, 32
        %v4738 = vpop.permute.xlu0 %4737
        %4739 = vrot.lane.b32.xlu0 %v612, 32
        %v4740 = vpop.permute.xlu0 %4739
        %4757 = vmatprep.subr.mxu0 0.0
        %4758 = vmatpush1.msra.mxu0 %v4740
        %4759 = vmatprep.subr.mxu0 0.0
        %4760 = vmatpush1.msra.mxu0 %v4738
        %4761 = vmatprep.subr.mxu0 0.0
        %4762 = vmatpush1.msra.mxu0 %v4736
        %4763 = vmatprep.subr.mxu0 0.0
        %4764 = vmatpush1.msra.mxu0 %v4734
        %4765 = vmatprep.subr.mxu0 0.0
        %4766 = vmatpush1.msra.mxu0 %v4732
        %4767 = vmatprep.subr.mxu0 0.0
        %4768 = vmatpush1.msra.mxu0 %v4730
        %4769 = vmatprep.subr.mxu0 0.0
        %4770 = vmatpush1.msra.mxu0 %v4728
        %4771 = vmatprep.subr.mxu0 0.0
        %4772 = vmatpush1.msra.mxu0 %v4726
        %4773 = vmatprep.subr.mxu0 0.0
        %4774 = vmatpush1.msra.mxu0 %v4724
        %4775 = vmatprep.subr.mxu0 0.0
        %4776 = vmatpush1.msra.mxu0 %v4722
        %4777 = vmatprep.subr.mxu0 0.0
        %4778 = vmatpush1.msra.mxu0 %v4720
        %4779 = vmatprep.subr.mxu0 0.0
        %4780 = vmatpush1.msra.mxu0 %v4718
        %4781 = vmatprep.subr.mxu0 0.0
        %4782 = vmatpush1.msra.mxu0 %v4716
        %4783 = vmatprep.subr.mxu0 0.0
        %4784 = vmatpush1.msra.mxu0 %v4714
        %4785 = vmatprep.subr.mxu0 0.0
        %4786 = vmatpush1.msra.mxu0 %v4712
        %4787 = vmatprep.subr.mxu0 0.0
        %4788 = vmatpush1.msra.mxu0 %v4710
        %4789 = vmatprep.subr.mxu0 0.0
        %4790 = vmatpush2.msra.mxu0 0.0
        %4791 = vmatprep.subr.mxu0 0.0
        %4792 = vmatpush2.msra.mxu0 0.0
        %4793 = vmatprep.subr.mxu0 0.0
        %4794 = vmatpush2.msra.mxu0 0.0
        %4795 = vmatprep.subr.mxu0 0.0
        %4796 = vmatpush2.msra.mxu0 0.0
        %4797 = vmatprep.subr.mxu0 0.0
        %4798 = vmatpush2.msra.mxu0 0.0
        %4799 = vmatprep.subr.mxu0 0.0
        %4800 = vmatpush2.msra.mxu0 0.0
        %4801 = vmatprep.subr.mxu0 0.0
        %4802 = vmatpush2.msra.mxu0 0.0
        %4803 = vmatprep.subr.mxu0 0.0
        %4804 = vmatpush2.msra.mxu0 0.0
        %4805 = vmatprep.subr.mxu0 0.0
        %4806 = vmatpush2.msra.mxu0 0.0
        %4807 = vmatprep.subr.mxu0 0.0
        %4808 = vmatpush2.msra.mxu0 0.0
        %4809 = vmatprep.subr.mxu0 0.0
        %4810 = vmatpush2.msra.mxu0 0.0
        %4811 = vmatprep.subr.mxu0 0.0
        %4812 = vmatpush2.msra.mxu0 0.0
        %4813 = vmatprep.subr.mxu0 0.0
        %4814 = vmatpush2.msra.mxu0 0.0
        %4815 = vmatprep.subr.mxu0 0.0
        %4816 = vmatpush2.msra.mxu0 0.0
        %4817 = vmatprep.subr.mxu0 0.0
        %4818 = vmatpush2.msra.mxu0 0.0
        %4819 = vmatprep.subr.mxu0 0.0
        %4820 = vmatpush2.msra.mxu0 0.0
        %4821 = vmatprep.mubr.f32.mxu0 0.0
        %4822 = vmatmul.mubr.f32.gmra.mxu0 %v4646
        %v4823 = vpop.f32.mrf.mxu0
        %v4824 = vadd.f32 0.0, %v4823
        %v4825 = vpop.f32.mrf.mxu0
        %4826 = vmatprep.mubr.f32.mxu0 0.0
        %4827 = vmatmul.mubr.f32.gmra.mxu0 %v4648
        %v4828 = vpop.f32.mrf.mxu0
        %v4829 = vadd.f32 0.0, %v4828
        %v4830 = vpop.f32.mrf.mxu0
        %4831 = vmatprep.mubr.f32.mxu0 0.0
        %4832 = vmatmul.mubr.f32.gmra.mxu0 %v4650
        %v4833 = vpop.f32.mrf.mxu0
        %v4834 = vadd.f32 0.0, %v4833
        %v4835 = vpop.f32.mrf.mxu0
        %4836 = vmatprep.mubr.f32.mxu0 0.0
        %4837 = vmatmul.mubr.f32.gmra.mxu0 %v4652
        %v4838 = vpop.f32.mrf.mxu0
        %v4839 = vadd.f32 0.0, %v4838
        %v4840 = vpop.f32.mrf.mxu0
        %4841 = vmatprep.mubr.f32.mxu0 0.0
        %4842 = vmatmul.mubr.f32.gmra.mxu0 %v4654
        %v4843 = vpop.f32.mrf.mxu0
        %v4844 = vadd.f32 0.0, %v4843
        %v4845 = vpop.f32.mrf.mxu0
        %4846 = vmatprep.mubr.f32.mxu0 0.0
        %4847 = vmatmul.mubr.f32.gmra.mxu0 %v4656
        %v4848 = vpop.f32.mrf.mxu0
        %v4849 = vadd.f32 0.0, %v4848
        %v4850 = vpop.f32.mrf.mxu0
        %4851 = vmatprep.mubr.f32.mxu0 0.0
        %4852 = vmatmul.mubr.f32.gmra.mxu0 %v4658
        %v4853 = vpop.f32.mrf.mxu0
        %v4854 = vadd.f32 0.0, %v4853
        %v4855 = vpop.f32.mrf.mxu0
        %4856 = vmatprep.mubr.f32.mxu0 0.0
        %4857 = vmatmul.mubr.f32.gmra.mxu0 %v4660
        %v4858 = vpop.f32.mrf.mxu0
        %v4859 = vadd.f32 0.0, %v4858
        %v4860 = vpop.f32.mrf.mxu0
        %4861 = vmatprep.mubr.f32.mxu0 0.0
        %4862 = vmatmul.mubr.f32.gmra.mxu0 %v4662
        %v4863 = vpop.f32.mrf.mxu0
        %v4864 = vadd.f32 0.0, %v4863
        %v4865 = vpop.f32.mrf.mxu0
        %4866 = vmatprep.mubr.f32.mxu0 0.0
        %4867 = vmatmul.mubr.f32.gmra.mxu0 %v4664
        %v4868 = vpop.f32.mrf.mxu0
        %v4869 = vadd.f32 0.0, %v4868
        %v4870 = vpop.f32.mrf.mxu0
        %4871 = vmatprep.mubr.f32.mxu0 0.0
        %4872 = vmatmul.mubr.f32.gmra.mxu0 %v4666
        %v4873 = vpop.f32.mrf.mxu0
        %v4874 = vadd.f32 0.0, %v4873
        %v4875 = vpop.f32.mrf.mxu0
        %4876 = vmatprep.mubr.f32.mxu0 0.0
        %4877 = vmatmul.mubr.f32.gmra.mxu0 %v4668
        %v4878 = vpop.f32.mrf.mxu0
        %v4879 = vadd.f32 0.0, %v4878
        %v4880 = vpop.f32.mrf.mxu0
        %4881 = vmatprep.mubr.f32.mxu0 0.0
        %4882 = vmatmul.mubr.f32.gmra.mxu0 %v4670
        %v4883 = vpop.f32.mrf.mxu0
        %v4884 = vadd.f32 0.0, %v4883
        %v4885 = vpop.f32.mrf.mxu0
        %4886 = vmatprep.mubr.f32.mxu0 0.0
        %4887 = vmatmul.mubr.f32.gmra.mxu0 %v4672
        %v4888 = vpop.f32.mrf.mxu0
        %v4889 = vadd.f32 0.0, %v4888
        %v4890 = vpop.f32.mrf.mxu0
        %4891 = vmatprep.mubr.f32.mxu0 0.0
        %4892 = vmatmul.mubr.f32.gmra.mxu0 %v4674
        %v4893 = vpop.f32.mrf.mxu0
        %v4894 = vadd.f32 0.0, %v4893
        %v4895 = vpop.f32.mrf.mxu0
        %4896 = vmatprep.mubr.f32.mxu0 0.0
        %4897 = vmatmul.mubr.f32.gmra.mxu0 %v4676
        %v4898 = vpop.f32.mrf.mxu0
        %v4899 = vadd.f32 0.0, %v4898
        %v4900 = vpop.f32.mrf.mxu0
        %4901 = vdwg.mxu0
        %v4902 = vrcp.pop %v4678
        %v4903 = vrcp.pop %v4680
        %v4904 = vrcp.pop %v4682
        %v4905 = vrcp.pop %v4684
        %v4906 = vrcp.pop %v4686
        %v4907 = vrcp.pop %v4688
        %v4908 = vrcp.pop %v4690
        %v4909 = vrcp.pop %v4692
        %v4910 = vrcp.pop %v4694
        %v4911 = vrcp.pop %v4696
        %v4912 = vrcp.pop %v4698
        %v4913 = vrcp.pop %v4700
        %v4914 = vrcp.pop %v4702
        %v4915 = vrcp.pop %v4704
        %v4916 = vrcp.pop %v4706
        %v4917 = vrcp.pop %v4708
        %v4918 = vmul.f32 %v4824, %v4902
        %v4919 = vmul.f32 %v4829, %v4903
        %v4920 = vmul.f32 %v4834, %v4904
        %v4921 = vmul.f32 %v4839, %v4905
        %v4922 = vmul.f32 %v4844, %v4906
        %v4923 = vmul.f32 %v4849, %v4907
        %v4924 = vmul.f32 %v4854, %v4908
        %v4925 = vmul.f32 %v4859, %v4909
        %v4926 = vmul.f32 %v4864, %v4910
        %v4927 = vmul.f32 %v4869, %v4911
        %v4928 = vmul.f32 %v4874, %v4912
        %v4929 = vmul.f32 %v4879, %v4913
        %v4930 = vmul.f32 %v4884, %v4914
        %v4931 = vmul.f32 %v4889, %v4915
        %v4932 = vmul.f32 %v4894, %v4916
        %v4933 = vmul.f32 %v4899, %v4917
        %4934 = vrot.lane.b32.xlu0 %v376, 16
        %v4935 = vpop.permute.xlu0 %4934
        %4936 = vrot.lane.b32.xlu0 %v382, 16
        %v4937 = vpop.permute.xlu0 %4936
        %4938 = vrot.lane.b32.xlu0 %v388, 16
        %v4939 = vpop.permute.xlu0 %4938
        %4940 = vrot.lane.b32.xlu0 %v394, 16
        %v4941 = vpop.permute.xlu0 %4940
        %4942 = vrot.lane.b32.xlu0 %v400, 16
        %v4943 = vpop.permute.xlu0 %4942
        %4944 = vrot.lane.b32.xlu0 %v406, 16
        %v4945 = vpop.permute.xlu0 %4944
        %4946 = vrot.lane.b32.xlu0 %v412, 16
        %v4947 = vpop.permute.xlu0 %4946
        %4948 = vrot.lane.b32.xlu0 %v418, 16
        %v4949 = vpop.permute.xlu0 %4948
        %4950 = vrot.lane.b32.xlu0 %v424, 16
        %v4951 = vpop.permute.xlu0 %4950
        %4952 = vrot.lane.b32.xlu0 %v430, 16
        %v4953 = vpop.permute.xlu0 %4952
        %4954 = vrot.lane.b32.xlu0 %v436, 16
        %v4955 = vpop.permute.xlu0 %4954
        %4956 = vrot.lane.b32.xlu0 %v442, 16
        %v4957 = vpop.permute.xlu0 %4956
        %4958 = vrot.lane.b32.xlu0 %v448, 16
        %v4959 = vpop.permute.xlu0 %4958
        %4960 = vrot.lane.b32.xlu0 %v454, 16
        %v4961 = vpop.permute.xlu0 %4960
        %4962 = vrot.lane.b32.xlu0 %v460, 16
        %v4963 = vpop.permute.xlu0 %4962
        %4964 = vrot.lane.b32.xlu0 %v466, 16
        %v4965 = vpop.permute.xlu0 %4964
        %4966 = vrot.lane.b32.xlu0 %v378, 16
        %v4967 = vpop.permute.xlu0 %4966
        %4968 = vrot.lane.b32.xlu0 %v384, 16
        %v4969 = vpop.permute.xlu0 %4968
        %4970 = vrot.lane.b32.xlu0 %v390, 16
        %v4971 = vpop.permute.xlu0 %4970
        %4972 = vrot.lane.b32.xlu0 %v396, 16
        %v4973 = vpop.permute.xlu0 %4972
        %4974 = vrot.lane.b32.xlu0 %v402, 16
        %v4975 = vpop.permute.xlu0 %4974
        %4976 = vrot.lane.b32.xlu0 %v408, 16
        %v4977 = vpop.permute.xlu0 %4976
        %4978 = vrot.lane.b32.xlu0 %v414, 16
        %v4979 = vpop.permute.xlu0 %4978
        %4980 = vrot.lane.b32.xlu0 %v420, 16
        %v4981 = vpop.permute.xlu0 %4980
        %4982 = vrot.lane.b32.xlu0 %v426, 16
        %v4983 = vpop.permute.xlu0 %4982
        %4984 = vrot.lane.b32.xlu0 %v432, 16
        %v4985 = vpop.permute.xlu0 %4984
        %4986 = vrot.lane.b32.xlu0 %v438, 16
        %v4987 = vpop.permute.xlu0 %4986
        %4988 = vrot.lane.b32.xlu0 %v444, 16
        %v4989 = vpop.permute.xlu0 %4988
        %4990 = vrot.lane.b32.xlu0 %v450, 16
        %v4991 = vpop.permute.xlu0 %4990
        %4992 = vrot.lane.b32.xlu0 %v456, 16
        %v4993 = vpop.permute.xlu0 %4992
        %4994 = vrot.lane.b32.xlu0 %v462, 16
        %v4995 = vpop.permute.xlu0 %4994
        %4996 = vrot.lane.b32.xlu0 %v468, 16
        %v4997 = vpop.permute.xlu0 %4996
        %v4998 = vsel %vm615, %v4935, 0
        %v5000 = vsel %vm615, %v4937, 0
        %v5002 = vsel %vm615, %v4939, 0
        %v5004 = vsel %vm615, %v4941, 0
        %v5006 = vsel %vm615, %v4943, 0
        %v5008 = vsel %vm615, %v4945, 0
        %v5010 = vsel %vm615, %v4947, 0
        %v5012 = vsel %vm615, %v4949, 0
        %v5014 = vsel %vm615, %v4951, 0
        %v5016 = vsel %vm615, %v4953, 0
        %v5018 = vsel %vm615, %v4955, 0
        %v5020 = vsel %vm615, %v4957, 0
        %v5022 = vsel %vm615, %v4959, 0
        %v5024 = vsel %vm615, %v4961, 0
        %v5026 = vsel %vm615, %v4963, 0
        %v5028 = vsel %vm615, %v4965, 0
        %v5030 = vsel %vm615, %v4967, 0
        %v5032 = vsel %vm615, %v4969, 0
        %v5034 = vsel %vm615, %v4971, 0
        %v5036 = vsel %vm615, %v4973, 0
        %v5038 = vsel %vm615, %v4975, 0
        %v5040 = vsel %vm615, %v4977, 0
        %v5042 = vsel %vm615, %v4979, 0
        %v5044 = vsel %vm615, %v4981, 0
        %v5046 = vsel %vm615, %v4983, 0
        %v5048 = vsel %vm615, %v4985, 0
        %v5050 = vsel %vm615, %v4987, 0
        %v5052 = vsel %vm615, %v4989, 0
        %v5054 = vsel %vm615, %v4991, 0
        %v5056 = vsel %vm615, %v4993, 0
        %v5058 = vsel %vm615, %v4995, 0
        %v5060 = vsel %vm615, %v4997, 0
        %5062 = vmatprep.subr.mxu0 0.0
        %5063 = vmatpush1.xpose.msra.mxu0 %v5060
        %5064 = vmatprep.subr.mxu0 0.0
        %5065 = vmatpush1.xpose.msra.mxu0 %v5058
        %5066 = vmatprep.subr.mxu0 0.0
        %5067 = vmatpush1.xpose.msra.mxu0 %v5056
        %5068 = vmatprep.subr.mxu0 0.0
        %5069 = vmatpush1.xpose.msra.mxu0 %v5054
        %5070 = vmatprep.subr.mxu0 0.0
        %5071 = vmatpush1.xpose.msra.mxu0 %v5052
        %5072 = vmatprep.subr.mxu0 0.0
        %5073 = vmatpush1.xpose.msra.mxu0 %v5050
        %5074 = vmatprep.subr.mxu0 0.0
        %5075 = vmatpush1.xpose.msra.mxu0 %v5048
        %5076 = vmatprep.subr.mxu0 0.0
        %5077 = vmatpush1.xpose.msra.mxu0 %v5046
        %5078 = vmatprep.subr.mxu0 0.0
        %5079 = vmatpush1.xpose.msra.mxu0 %v5044
        %5080 = vmatprep.subr.mxu0 0.0
        %5081 = vmatpush1.xpose.msra.mxu0 %v5042
        %5082 = vmatprep.subr.mxu0 0.0
        %5083 = vmatpush1.xpose.msra.mxu0 %v5040
        %5084 = vmatprep.subr.mxu0 0.0
        %5085 = vmatpush1.xpose.msra.mxu0 %v5038
        %5086 = vmatprep.subr.mxu0 0.0
        %5087 = vmatpush1.xpose.msra.mxu0 %v5036
        %5088 = vmatprep.subr.mxu0 0.0
        %5089 = vmatpush1.xpose.msra.mxu0 %v5034
        %5090 = vmatprep.subr.mxu0 0.0
        %5091 = vmatpush1.xpose.msra.mxu0 %v5032
        %5092 = vmatprep.subr.mxu0 0.0
        %5093 = vmatpush1.xpose.msra.mxu0 %v5030
        %5094 = vmatprep.subr.mxu0 0.0
        %5095 = vmatpush2.xpose.msra.mxu0 0.0
        %5096 = vmatprep.subr.mxu0 0.0
        %5097 = vmatpush2.xpose.msra.mxu0 0.0
        %5098 = vmatprep.subr.mxu0 0.0
        %5099 = vmatpush2.xpose.msra.mxu0 0.0
        %5100 = vmatprep.subr.mxu0 0.0
        %5101 = vmatpush2.xpose.msra.mxu0 0.0
        %5102 = vmatprep.subr.mxu0 0.0
        %5103 = vmatpush2.xpose.msra.mxu0 0.0
        %5104 = vmatprep.subr.mxu0 0.0
        %5105 = vmatpush2.xpose.msra.mxu0 0.0
        %5106 = vmatprep.subr.mxu0 0.0
        %5107 = vmatpush2.xpose.msra.mxu0 0.0
        %5108 = vmatprep.subr.mxu0 0.0
        %5109 = vmatpush2.xpose.msra.mxu0 0.0
        %5110 = vmatprep.subr.mxu0 0.0
        %5111 = vmatpush2.xpose.msra.mxu0 0.0
        %5112 = vmatprep.subr.mxu0 0.0
        %5113 = vmatpush2.xpose.msra.mxu0 0.0
        %5114 = vmatprep.subr.mxu0 0.0
        %5115 = vmatpush2.xpose.msra.mxu0 0.0
        %5116 = vmatprep.subr.mxu0 0.0
        %5117 = vmatpush2.xpose.msra.mxu0 0.0
        %5118 = vmatprep.subr.mxu0 0.0
        %5119 = vmatpush2.xpose.msra.mxu0 0.0
        %5120 = vmatprep.subr.mxu0 0.0
        %5121 = vmatpush2.xpose.msra.mxu0 0.0
        %5122 = vmatprep.subr.mxu0 0.0
        %5123 = vmatpush2.xpose.msra.mxu0 0.0
        %5124 = vmatprep.subr.mxu0 0.0
        %5125 = vmatpush2.xpose.msra.mxu0 0.0
        %5126 = vmatprep.mubr.f32.mxu0 0.0
        %5127 = vmatmul.mubr.f32.gmra.mxu0 %v4998
        %v5128 = vpop.f32.mrf.mxu0
        %v5129 = vadd.f32 0.0, %v5128
        %v5130 = vpop.f32.mrf.mxu0
        %5131 = vmatprep.mubr.f32.mxu0 0.0
        %5132 = vmatmul.mubr.f32.gmra.mxu0 %v5000
        %v5133 = vpop.f32.mrf.mxu0
        %v5134 = vadd.f32 0.0, %v5133
        %v5135 = vpop.f32.mrf.mxu0
        %5136 = vmatprep.mubr.f32.mxu0 0.0
        %5137 = vmatmul.mubr.f32.gmra.mxu0 %v5002
        %v5138 = vpop.f32.mrf.mxu0
        %v5139 = vadd.f32 0.0, %v5138
        %v5140 = vpop.f32.mrf.mxu0
        %5141 = vmatprep.mubr.f32.mxu0 0.0
        %5142 = vmatmul.mubr.f32.gmra.mxu0 %v5004
        %v5143 = vpop.f32.mrf.mxu0
        %v5144 = vadd.f32 0.0, %v5143
        %v5145 = vpop.f32.mrf.mxu0
        %5146 = vmatprep.mubr.f32.mxu0 0.0
        %5147 = vmatmul.mubr.f32.gmra.mxu0 %v5006
        %v5148 = vpop.f32.mrf.mxu0
        %v5149 = vadd.f32 0.0, %v5148
        %v5150 = vpop.f32.mrf.mxu0
        %5151 = vmatprep.mubr.f32.mxu0 0.0
        %5152 = vmatmul.mubr.f32.gmra.mxu0 %v5008
        %v5153 = vpop.f32.mrf.mxu0
        %v5154 = vadd.f32 0.0, %v5153
        %v5155 = vpop.f32.mrf.mxu0
        %5156 = vmatprep.mubr.f32.mxu0 0.0
        %5157 = vmatmul.mubr.f32.gmra.mxu0 %v5010
        %v5158 = vpop.f32.mrf.mxu0
        %v5159 = vadd.f32 0.0, %v5158
        %v5160 = vpop.f32.mrf.mxu0
        %5161 = vmatprep.mubr.f32.mxu0 0.0
        %5162 = vmatmul.mubr.f32.gmra.mxu0 %v5012
        %v5163 = vpop.f32.mrf.mxu0
        %v5164 = vadd.f32 0.0, %v5163
        %v5165 = vpop.f32.mrf.mxu0
        %5166 = vmatprep.mubr.f32.mxu0 0.0
        %5167 = vmatmul.mubr.f32.gmra.mxu0 %v5014
        %v5168 = vpop.f32.mrf.mxu0
        %v5169 = vadd.f32 0.0, %v5168
        %v5170 = vpop.f32.mrf.mxu0
        %5171 = vmatprep.mubr.f32.mxu0 0.0
        %5172 = vmatmul.mubr.f32.gmra.mxu0 %v5016
        %v5173 = vpop.f32.mrf.mxu0
        %v5174 = vadd.f32 0.0, %v5173
        %v5175 = vpop.f32.mrf.mxu0
        %5176 = vmatprep.mubr.f32.mxu0 0.0
        %5177 = vmatmul.mubr.f32.gmra.mxu0 %v5018
        %v5178 = vpop.f32.mrf.mxu0
        %v5179 = vadd.f32 0.0, %v5178
        %v5180 = vpop.f32.mrf.mxu0
        %5181 = vmatprep.mubr.f32.mxu0 0.0
        %5182 = vmatmul.mubr.f32.gmra.mxu0 %v5020
        %v5183 = vpop.f32.mrf.mxu0
        %v5184 = vadd.f32 0.0, %v5183
        %v5185 = vpop.f32.mrf.mxu0
        %5186 = vmatprep.mubr.f32.mxu0 0.0
        %5187 = vmatmul.mubr.f32.gmra.mxu0 %v5022
        %v5188 = vpop.f32.mrf.mxu0
        %v5189 = vadd.f32 0.0, %v5188
        %v5190 = vpop.f32.mrf.mxu0
        %5191 = vmatprep.mubr.f32.mxu0 0.0
        %5192 = vmatmul.mubr.f32.gmra.mxu0 %v5024
        %v5193 = vpop.f32.mrf.mxu0
        %v5194 = vadd.f32 0.0, %v5193
        %v5195 = vpop.f32.mrf.mxu0
        %5196 = vmatprep.mubr.f32.mxu0 0.0
        %5197 = vmatmul.mubr.f32.gmra.mxu0 %v5026
        %v5198 = vpop.f32.mrf.mxu0
        %v5199 = vadd.f32 0.0, %v5198
        %v5200 = vpop.f32.mrf.mxu0
        %5201 = vmatprep.mubr.f32.mxu0 0.0
        %5202 = vmatmul.mubr.f32.gmra.mxu0 %v5028
        %v5203 = vpop.f32.mrf.mxu0
        %v5204 = vadd.f32 0.0, %v5203
        %v5205 = vpop.f32.mrf.mxu0
        %5206 = vdwg.mxu0
        %v5207 = vmul.f32 %v5129, 0.25
        %v5208 = vmul.f32 %v5134, 0.25
        %v5209 = vmul.f32 %v5139, 0.25
        %v5210 = vmul.f32 %v5144, 0.25
        %v5211 = vmul.f32 %v5149, 0.25
        %v5212 = vmul.f32 %v5154, 0.25
        %v5213 = vmul.f32 %v5159, 0.25
        %v5214 = vmul.f32 %v5164, 0.25
        %v5215 = vmul.f32 %v5169, 0.25
        %v5216 = vmul.f32 %v5174, 0.25
        %v5217 = vmul.f32 %v5179, 0.25
        %v5218 = vmul.f32 %v5184, 0.25
        %v5219 = vmul.f32 %v5189, 0.25
        %v5220 = vmul.f32 %v5194, 0.25
        %v5221 = vmul.f32 %v5199, 0.25
        %v5222 = vmul.f32 %v5204, 0.25
        %5223 = vmax.xlane.f32.xlu0 %v5207
        %v5224 = vpop.xlane.xlu0 %5223
        %5225 = vmax.xlane.f32.xlu0 %v5208
        %v5226 = vpop.xlane.xlu0 %5225
        %5227 = vmax.xlane.f32.xlu0 %v5209
        %v5228 = vpop.xlane.xlu0 %5227
        %5229 = vmax.xlane.f32.xlu0 %v5210
        %v5230 = vpop.xlane.xlu0 %5229
        %5231 = vmax.xlane.f32.xlu0 %v5211
        %v5232 = vpop.xlane.xlu0 %5231
        %5233 = vmax.xlane.f32.xlu0 %v5212
        %v5234 = vpop.xlane.xlu0 %5233
        %5235 = vmax.xlane.f32.xlu0 %v5213
        %v5236 = vpop.xlane.xlu0 %5235
        %5237 = vmax.xlane.f32.xlu0 %v5214
        %v5238 = vpop.xlane.xlu0 %5237
        %5239 = vmax.xlane.f32.xlu0 %v5215
        %v5240 = vpop.xlane.xlu0 %5239
        %5241 = vmax.xlane.f32.xlu0 %v5216
        %v5242 = vpop.xlane.xlu0 %5241
        %5243 = vmax.xlane.f32.xlu0 %v5217
        %v5244 = vpop.xlane.xlu0 %5243
        %5245 = vmax.xlane.f32.xlu0 %v5218
        %v5246 = vpop.xlane.xlu0 %5245
        %5247 = vmax.xlane.f32.xlu0 %v5219
        %v5248 = vpop.xlane.xlu0 %5247
        %5249 = vmax.xlane.f32.xlu0 %v5220
        %v5250 = vpop.xlane.xlu0 %5249
        %5251 = vmax.xlane.f32.xlu0 %v5221
        %v5252 = vpop.xlane.xlu0 %5251
        %5253 = vmax.xlane.f32.xlu0 %v5222
        %v5254 = vpop.xlane.xlu0 %5253
        %v5255 = vsub.f32 %v5207, %v5224
        %v5256 = vsub.f32 %v5208, %v5226
        %v5257 = vsub.f32 %v5209, %v5228
        %v5258 = vsub.f32 %v5210, %v5230
        %v5259 = vsub.f32 %v5211, %v5232
        %v5260 = vsub.f32 %v5212, %v5234
        %v5261 = vsub.f32 %v5213, %v5236
        %v5262 = vsub.f32 %v5214, %v5238
        %v5263 = vsub.f32 %v5215, %v5240
        %v5264 = vsub.f32 %v5216, %v5242
        %v5265 = vsub.f32 %v5217, %v5244
        %v5266 = vsub.f32 %v5218, %v5246
        %v5267 = vsub.f32 %v5219, %v5248
        %v5268 = vsub.f32 %v5220, %v5250
        %v5269 = vsub.f32 %v5221, %v5252
        %v5270 = vsub.f32 %v5222, %v5254
        %v5271 = vmul.f32 %v5255, 1.442695
        %v5272 = vpow.pop %v5271
        %v5273 = vmul.f32 %v5256, 1.442695
        %v5274 = vpow.pop %v5273
        %v5275 = vmul.f32 %v5257, 1.442695
        %v5276 = vpow.pop %v5275
        %v5277 = vmul.f32 %v5258, 1.442695
        %v5278 = vpow.pop %v5277
        %v5279 = vmul.f32 %v5259, 1.442695
        %v5280 = vpow.pop %v5279
        %v5281 = vmul.f32 %v5260, 1.442695
        %v5282 = vpow.pop %v5281
        %v5283 = vmul.f32 %v5261, 1.442695
        %v5284 = vpow.pop %v5283
        %v5285 = vmul.f32 %v5262, 1.442695
        %v5286 = vpow.pop %v5285
        %v5287 = vmul.f32 %v5263, 1.442695
        %v5288 = vpow.pop %v5287
        %v5289 = vmul.f32 %v5264, 1.442695
        %v5290 = vpow.pop %v5289
        %v5291 = vmul.f32 %v5265, 1.442695
        %v5292 = vpow.pop %v5291
        %v5293 = vmul.f32 %v5266, 1.442695
        %v5294 = vpow.pop %v5293
        %v5295 = vmul.f32 %v5267, 1.442695
        %v5296 = vpow.pop %v5295
        %v5297 = vmul.f32 %v5268, 1.442695
        %v5298 = vpow.pop %v5297
        %v5299 = vmul.f32 %v5269, 1.442695
        %v5300 = vpow.pop %v5299
        %v5301 = vmul.f32 %v5270, 1.442695
        %v5302 = vpow.pop %v5301
        %5303 = vadd.xlane.f32.xlu0 %v5272
        %v5304 = vpop.xlane.xlu0 %5303
        %5305 = vadd.xlane.f32.xlu0 %v5274
        %v5306 = vpop.xlane.xlu0 %5305
        %5307 = vadd.xlane.f32.xlu0 %v5276
        %v5308 = vpop.xlane.xlu0 %5307
        %5309 = vadd.xlane.f32.xlu0 %v5278
        %v5310 = vpop.xlane.xlu0 %5309
        %5311 = vadd.xlane.f32.xlu0 %v5280
        %v5312 = vpop.xlane.xlu0 %5311
        %5313 = vadd.xlane.f32.xlu0 %v5282
        %v5314 = vpop.xlane.xlu0 %5313
        %5315 = vadd.xlane.f32.xlu0 %v5284
        %v5316 = vpop.xlane.xlu0 %5315
        %5317 = vadd.xlane.f32.xlu0 %v5286
        %v5318 = vpop.xlane.xlu0 %5317
        %5319 = vadd.xlane.f32.xlu0 %v5288
        %v5320 = vpop.xlane.xlu0 %5319
        %5321 = vadd.xlane.f32.xlu0 %v5290
        %v5322 = vpop.xlane.xlu0 %5321
        %5323 = vadd.xlane.f32.xlu0 %v5292
        %v5324 = vpop.xlane.xlu0 %5323
        %5325 = vadd.xlane.f32.xlu0 %v5294
        %v5326 = vpop.xlane.xlu0 %5325
        %5327 = vadd.xlane.f32.xlu0 %v5296
        %v5328 = vpop.xlane.xlu0 %5327
        %5329 = vadd.xlane.f32.xlu0 %v5298
        %v5330 = vpop.xlane.xlu0 %5329
        %5331 = vadd.xlane.f32.xlu0 %v5300
        %v5332 = vpop.xlane.xlu0 %5331
        %5333 = vadd.xlane.f32.xlu0 %v5302
        %v5334 = vpop.xlane.xlu0 %5333
        %5335 = vrot.lane.b32.xlu0 %v537, 16
        %v5336 = vpop.permute.xlu0 %5335
        %5337 = vrot.lane.b32.xlu0 %v542, 16
        %v5338 = vpop.permute.xlu0 %5337
        %5339 = vrot.lane.b32.xlu0 %v547, 16
        %v5340 = vpop.permute.xlu0 %5339
        %5341 = vrot.lane.b32.xlu0 %v552, 16
        %v5342 = vpop.permute.xlu0 %5341
        %5343 = vrot.lane.b32.xlu0 %v557, 16
        %v5344 = vpop.permute.xlu0 %5343
        %5345 = vrot.lane.b32.xlu0 %v562, 16
        %v5346 = vpop.permute.xlu0 %5345
        %5347 = vrot.lane.b32.xlu0 %v567, 16
        %v5348 = vpop.permute.xlu0 %5347
        %5349 = vrot.lane.b32.xlu0 %v572, 16
        %v5350 = vpop.permute.xlu0 %5349
        %5351 = vrot.lane.b32.xlu0 %v577, 16
        %v5352 = vpop.permute.xlu0 %5351
        %5353 = vrot.lane.b32.xlu0 %v582, 16
        %v5354 = vpop.permute.xlu0 %5353
        %5355 = vrot.lane.b32.xlu0 %v587, 16
        %v5356 = vpop.permute.xlu0 %5355
        %5357 = vrot.lane.b32.xlu0 %v592, 16
        %v5358 = vpop.permute.xlu0 %5357
        %5359 = vrot.lane.b32.xlu0 %v597, 16
        %v5360 = vpop.permute.xlu0 %5359
        %5361 = vrot.lane.b32.xlu0 %v602, 16
        %v5362 = vpop.permute.xlu0 %5361
        %5363 = vrot.lane.b32.xlu0 %v607, 16
        %v5364 = vpop.permute.xlu0 %5363
        %5365 = vrot.lane.b32.xlu0 %v612, 16
        %v5366 = vpop.permute.xlu0 %5365
        %5383 = vmatprep.subr.mxu0 0.0
        %5384 = vmatpush1.msra.mxu0 %v5366
        %5385 = vmatprep.subr.mxu0 0.0
        %5386 = vmatpush1.msra.mxu0 %v5364
        %5387 = vmatprep.subr.mxu0 0.0
        %5388 = vmatpush1.msra.mxu0 %v5362
        %5389 = vmatprep.subr.mxu0 0.0
        %5390 = vmatpush1.msra.mxu0 %v5360
        %5391 = vmatprep.subr.mxu0 0.0
        %5392 = vmatpush1.msra.mxu0 %v5358
        %5393 = vmatprep.subr.mxu0 0.0
        %5394 = vmatpush1.msra.mxu0 %v5356
        %5395 = vmatprep.subr.mxu0 0.0
        %5396 = vmatpush1.msra.mxu0 %v5354
        %5397 = vmatprep.subr.mxu0 0.0
        %5398 = vmatpush1.msra.mxu0 %v5352
        %5399 = vmatprep.subr.mxu0 0.0
        %5400 = vmatpush1.msra.mxu0 %v5350
        %5401 = vmatprep.subr.mxu0 0.0
        %5402 = vmatpush1.msra.mxu0 %v5348
        %5403 = vmatprep.subr.mxu0 0.0
        %5404 = vmatpush1.msra.mxu0 %v5346
        %5405 = vmatprep.subr.mxu0 0.0
        %5406 = vmatpush1.msra.mxu0 %v5344
        %5407 = vmatprep.subr.mxu0 0.0
        %5408 = vmatpush1.msra.mxu0 %v5342
        %5409 = vmatprep.subr.mxu0 0.0
        %5410 = vmatpush1.msra.mxu0 %v5340
        %5411 = vmatprep.subr.mxu0 0.0
        %5412 = vmatpush1.msra.mxu0 %v5338
        %5413 = vmatprep.subr.mxu0 0.0
        %5414 = vmatpush1.msra.mxu0 %v5336
        %5415 = vmatprep.subr.mxu0 0.0
        %5416 = vmatpush2.msra.mxu0 0.0
        %5417 = vmatprep.subr.mxu0 0.0
        %5418 = vmatpush2.msra.mxu0 0.0
        %5419 = vmatprep.subr.mxu0 0.0
        %5420 = vmatpush2.msra.mxu0 0.0
        %5421 = vmatprep.subr.mxu0 0.0
        %5422 = vmatpush2.msra.mxu0 0.0
        %5423 = vmatprep.subr.mxu0 0.0
        %5424 = vmatpush2.msra.mxu0 0.0
        %5425 = vmatprep.subr.mxu0 0.0
        %5426 = vmatpush2.msra.mxu0 0.0
        %5427 = vmatprep.subr.mxu0 0.0
        %5428 = vmatpush2.msra.mxu0 0.0
        %5429 = vmatprep.subr.mxu0 0.0
        %5430 = vmatpush2.msra.mxu0 0.0
        %5431 = vmatprep.subr.mxu0 0.0
        %5432 = vmatpush2.msra.mxu0 0.0
        %5433 = vmatprep.subr.mxu0 0.0
        %5434 = vmatpush2.msra.mxu0 0.0
        %5435 = vmatprep.subr.mxu0 0.0
        %5436 = vmatpush2.msra.mxu0 0.0
        %5437 = vmatprep.subr.mxu0 0.0
        %5438 = vmatpush2.msra.mxu0 0.0
        %5439 = vmatprep.subr.mxu0 0.0
        %5440 = vmatpush2.msra.mxu0 0.0
        %5441 = vmatprep.subr.mxu0 0.0
        %5442 = vmatpush2.msra.mxu0 0.0
        %5443 = vmatprep.subr.mxu0 0.0
        %5444 = vmatpush2.msra.mxu0 0.0
        %5445 = vmatprep.subr.mxu0 0.0
        %5446 = vmatpush2.msra.mxu0 0.0
        %5447 = vmatprep.mubr.f32.mxu0 0.0
        %5448 = vmatmul.mubr.f32.gmra.mxu0 %v5272
        %v5449 = vpop.f32.mrf.mxu0
        %v5450 = vadd.f32 0.0, %v5449
        %v5451 = vpop.f32.mrf.mxu0
        %5452 = vmatprep.mubr.f32.mxu0 0.0
        %5453 = vmatmul.mubr.f32.gmra.mxu0 %v5274
        %v5454 = vpop.f32.mrf.mxu0
        %v5455 = vadd.f32 0.0, %v5454
        %v5456 = vpop.f32.mrf.mxu0
        %5457 = vmatprep.mubr.f32.mxu0 0.0
        %5458 = vmatmul.mubr.f32.gmra.mxu0 %v5276
        %v5459 = vpop.f32.mrf.mxu0
        %v5460 = vadd.f32 0.0, %v5459
        %v5461 = vpop.f32.mrf.mxu0
        %5462 = vmatprep.mubr.f32.mxu0 0.0
        %5463 = vmatmul.mubr.f32.gmra.mxu0 %v5278
        %v5464 = vpop.f32.mrf.mxu0
        %v5465 = vadd.f32 0.0, %v5464
        %v5466 = vpop.f32.mrf.mxu0
        %5467 = vmatprep.mubr.f32.mxu0 0.0
        %5468 = vmatmul.mubr.f32.gmra.mxu0 %v5280
        %v5469 = vpop.f32.mrf.mxu0
        %v5470 = vadd.f32 0.0, %v5469
        %v5471 = vpop.f32.mrf.mxu0
        %5472 = vmatprep.mubr.f32.mxu0 0.0
        %5473 = vmatmul.mubr.f32.gmra.mxu0 %v5282
        %v5474 = vpop.f32.mrf.mxu0
        %v5475 = vadd.f32 0.0, %v5474
        %v5476 = vpop.f32.mrf.mxu0
        %5477 = vmatprep.mubr.f32.mxu0 0.0
        %5478 = vmatmul.mubr.f32.gmra.mxu0 %v5284
        %v5479 = vpop.f32.mrf.mxu0
        %v5480 = vadd.f32 0.0, %v5479
        %v5481 = vpop.f32.mrf.mxu0
        %5482 = vmatprep.mubr.f32.mxu0 0.0
        %5483 = vmatmul.mubr.f32.gmra.mxu0 %v5286
        %v5484 = vpop.f32.mrf.mxu0
        %v5485 = vadd.f32 0.0, %v5484
        %v5486 = vpop.f32.mrf.mxu0
        %5487 = vmatprep.mubr.f32.mxu0 0.0
        %5488 = vmatmul.mubr.f32.gmra.mxu0 %v5288
        %v5489 = vpop.f32.mrf.mxu0
        %v5490 = vadd.f32 0.0, %v5489
        %v5491 = vpop.f32.mrf.mxu0
        %5492 = vmatprep.mubr.f32.mxu0 0.0
        %5493 = vmatmul.mubr.f32.gmra.mxu0 %v5290
        %v5494 = vpop.f32.mrf.mxu0
        %v5495 = vadd.f32 0.0, %v5494
        %v5496 = vpop.f32.mrf.mxu0
        %5497 = vmatprep.mubr.f32.mxu0 0.0
        %5498 = vmatmul.mubr.f32.gmra.mxu0 %v5292
        %v5499 = vpop.f32.mrf.mxu0
        %v5500 = vadd.f32 0.0, %v5499
        %v5501 = vpop.f32.mrf.mxu0
        %5502 = vmatprep.mubr.f32.mxu0 0.0
        %5503 = vmatmul.mubr.f32.gmra.mxu0 %v5294
        %v5504 = vpop.f32.mrf.mxu0
        %v5505 = vadd.f32 0.0, %v5504
        %v5506 = vpop.f32.mrf.mxu0
        %5507 = vmatprep.mubr.f32.mxu0 0.0
        %5508 = vmatmul.mubr.f32.gmra.mxu0 %v5296
        %v5509 = vpop.f32.mrf.mxu0
        %v5510 = vadd.f32 0.0, %v5509
        %v5511 = vpop.f32.mrf.mxu0
        %5512 = vmatprep.mubr.f32.mxu0 0.0
        %5513 = vmatmul.mubr.f32.gmra.mxu0 %v5298
        %v5514 = vpop.f32.mrf.mxu0
        %v5515 = vadd.f32 0.0, %v5514
        %v5516 = vpop.f32.mrf.mxu0
        %5517 = vmatprep.mubr.f32.mxu0 0.0
        %5518 = vmatmul.mubr.f32.gmra.mxu0 %v5300
        %v5519 = vpop.f32.mrf.mxu0
        %v5520 = vadd.f32 0.0, %v5519
        %v5521 = vpop.f32.mrf.mxu0
        %5522 = vmatprep.mubr.f32.mxu0 0.0
        %5523 = vmatmul.mubr.f32.gmra.mxu0 %v5302
        %v5524 = vpop.f32.mrf.mxu0
        %v5525 = vadd.f32 0.0, %v5524
        %v5526 = vpop.f32.mrf.mxu0
        %5527 = vdwg.mxu0
        %v5528 = vrcp.pop %v5304
        %v5529 = vrcp.pop %v5306
        %v5530 = vrcp.pop %v5308
        %v5531 = vrcp.pop %v5310
        %v5532 = vrcp.pop %v5312
        %v5533 = vrcp.pop %v5314
        %v5534 = vrcp.pop %v5316
        %v5535 = vrcp.pop %v5318
        %v5536 = vrcp.pop %v5320
        %v5537 = vrcp.pop %v5322
        %v5538 = vrcp.pop %v5324
        %v5539 = vrcp.pop %v5326
        %v5540 = vrcp.pop %v5328
        %v5541 = vrcp.pop %v5330
        %v5542 = vrcp.pop %v5332
        %v5543 = vrcp.pop %v5334
        %v5544 = vmul.f32 %v5450, %v5528
        %v5545 = vmul.f32 %v5455, %v5529
        %v5546 = vmul.f32 %v5460, %v5530
        %v5547 = vmul.f32 %v5465, %v5531
        %v5548 = vmul.f32 %v5470, %v5532
        %v5549 = vmul.f32 %v5475, %v5533
        %v5550 = vmul.f32 %v5480, %v5534
        %v5551 = vmul.f32 %v5485, %v5535
        %v5552 = vmul.f32 %v5490, %v5536
        %v5553 = vmul.f32 %v5495, %v5537
        %v5554 = vmul.f32 %v5500, %v5538
        %v5555 = vmul.f32 %v5505, %v5539
        %v5556 = vmul.f32 %v5510, %v5540
        %v5557 = vmul.f32 %v5515, %v5541
        %v5558 = vmul.f32 %v5520, %v5542
        %v5559 = vmul.f32 %v5525, %v5543
        %5576 = vrot.lane.b32.xlu0 %v1788, 16
        %v5577 = vpop.permute.xlu0 %5576
        %5578 = vrot.lane.b32.xlu0 %v1789, 16
        %v5579 = vpop.permute.xlu0 %5578
        %5580 = vrot.lane.b32.xlu0 %v1790, 16
        %v5581 = vpop.permute.xlu0 %5580
        %5582 = vrot.lane.b32.xlu0 %v1791, 16
        %v5583 = vpop.permute.xlu0 %5582
        %5584 = vrot.lane.b32.xlu0 %v1792, 16
        %v5585 = vpop.permute.xlu0 %5584
        %5586 = vrot.lane.b32.xlu0 %v1793, 16
        %v5587 = vpop.permute.xlu0 %5586
        %5588 = vrot.lane.b32.xlu0 %v1794, 16
        %v5589 = vpop.permute.xlu0 %5588
        %5590 = vrot.lane.b32.xlu0 %v1795, 16
        %v5591 = vpop.permute.xlu0 %5590
        %5592 = vrot.lane.b32.xlu0 %v1796, 16
        %v5593 = vpop.permute.xlu0 %5592
        %5594 = vrot.lane.b32.xlu0 %v1797, 16
        %v5595 = vpop.permute.xlu0 %5594
        %5596 = vrot.lane.b32.xlu0 %v1798, 16
        %v5597 = vpop.permute.xlu0 %5596
        %5598 = vrot.lane.b32.xlu0 %v1799, 16
        %v5599 = vpop.permute.xlu0 %5598
        %5600 = vrot.lane.b32.xlu0 %v1800, 16
        %v5601 = vpop.permute.xlu0 %5600
        %5602 = vrot.lane.b32.xlu0 %v1801, 16
        %v5603 = vpop.permute.xlu0 %5602
        %5604 = vrot.lane.b32.xlu0 %v1802, 16
        %v5605 = vpop.permute.xlu0 %5604
        %5606 = vrot.lane.b32.xlu0 %v1803, 16
        %v5607 = vpop.permute.xlu0 %5606
        %5640 = vrot.lane.b32.xlu0 %v2414, 32
        %v5641 = vpop.permute.xlu0 %5640
        %5642 = vrot.lane.b32.xlu0 %v2415, 32
        %v5643 = vpop.permute.xlu0 %5642
        %5644 = vrot.lane.b32.xlu0 %v2416, 32
        %v5645 = vpop.permute.xlu0 %5644
        %5646 = vrot.lane.b32.xlu0 %v2417, 32
        %v5647 = vpop.permute.xlu0 %5646
        %5648 = vrot.lane.b32.xlu0 %v2418, 32
        %v5649 = vpop.permute.xlu0 %5648
        %5650 = vrot.lane.b32.xlu0 %v2419, 32
        %v5651 = vpop.permute.xlu0 %5650
        %5652 = vrot.lane.b32.xlu0 %v2420, 32
        %v5653 = vpop.permute.xlu0 %5652
        %5654 = vrot.lane.b32.xlu0 %v2421, 32
        %v5655 = vpop.permute.xlu0 %5654
        %5656 = vrot.lane.b32.xlu0 %v2422, 32
        %v5657 = vpop.permute.xlu0 %5656
        %5658 = vrot.lane.b32.xlu0 %v2423, 32
        %v5659 = vpop.permute.xlu0 %5658
        %5660 = vrot.lane.b32.xlu0 %v2424, 32
        %v5661 = vpop.permute.xlu0 %5660
        %5662 = vrot.lane.b32.xlu0 %v2425, 32
        %v5663 = vpop.permute.xlu0 %5662
        %5664 = vrot.lane.b32.xlu0 %v2426, 32
        %v5665 = vpop.permute.xlu0 %5664
        %5666 = vrot.lane.b32.xlu0 %v2427, 32
        %v5667 = vpop.permute.xlu0 %5666
        %5668 = vrot.lane.b32.xlu0 %v2428, 32
        %v5669 = vpop.permute.xlu0 %5668
        %5670 = vrot.lane.b32.xlu0 %v2429, 32
        %v5671 = vpop.permute.xlu0 %5670
        %5704 = vrot.lane.b32.xlu0 %v3040, 48
        %v5705 = vpop.permute.xlu0 %5704
        %5706 = vrot.lane.b32.xlu0 %v3041, 48
        %v5707 = vpop.permute.xlu0 %5706
        %5708 = vrot.lane.b32.xlu0 %v3042, 48
        %v5709 = vpop.permute.xlu0 %5708
        %5710 = vrot.lane.b32.xlu0 %v3043, 48
        %v5711 = vpop.permute.xlu0 %5710
        %5712 = vrot.lane.b32.xlu0 %v3044, 48
        %v5713 = vpop.permute.xlu0 %5712
        %5714 = vrot.lane.b32.xlu0 %v3045, 48
        %v5715 = vpop.permute.xlu0 %5714
        %5716 = vrot.lane.b32.xlu0 %v3046, 48
        %v5717 = vpop.permute.xlu0 %5716
        %5718 = vrot.lane.b32.xlu0 %v3047, 48
        %v5719 = vpop.permute.xlu0 %5718
        %5720 = vrot.lane.b32.xlu0 %v3048, 48
        %v5721 = vpop.permute.xlu0 %5720
        %5722 = vrot.lane.b32.xlu0 %v3049, 48
        %v5723 = vpop.permute.xlu0 %5722
        %5724 = vrot.lane.b32.xlu0 %v3050, 48
        %v5725 = vpop.permute.xlu0 %5724
        %5726 = vrot.lane.b32.xlu0 %v3051, 48
        %v5727 = vpop.permute.xlu0 %5726
        %5728 = vrot.lane.b32.xlu0 %v3052, 48
        %v5729 = vpop.permute.xlu0 %5728
        %5730 = vrot.lane.b32.xlu0 %v3053, 48
        %v5731 = vpop.permute.xlu0 %5730
        %5732 = vrot.lane.b32.xlu0 %v3054, 48
        %v5733 = vpop.permute.xlu0 %5732
        %5734 = vrot.lane.b32.xlu0 %v3055, 48
        %v5735 = vpop.permute.xlu0 %5734
        %5768 = vrot.lane.b32.xlu0 %v3666, 64
        %v5769 = vpop.permute.xlu0 %5768
        %5770 = vrot.lane.b32.xlu0 %v3667, 64
        %v5771 = vpop.permute.xlu0 %5770
        %5772 = vrot.lane.b32.xlu0 %v3668, 64
        %v5773 = vpop.permute.xlu0 %5772
        %5774 = vrot.lane.b32.xlu0 %v3669, 64
        %v5775 = vpop.permute.xlu0 %5774
        %5776 = vrot.lane.b32.xlu0 %v3670, 64
        %v5777 = vpop.permute.xlu0 %5776
        %5778 = vrot.lane.b32.xlu0 %v3671, 64
        %v5779 = vpop.permute.xlu0 %5778
        %5780 = vrot.lane.b32.xlu0 %v3672, 64
        %v5781 = vpop.permute.xlu0 %5780
        %5782 = vrot.lane.b32.xlu0 %v3673, 64
        %v5783 = vpop.permute.xlu0 %5782
        %5784 = vrot.lane.b32.xlu0 %v3674, 64
        %v5785 = vpop.permute.xlu0 %5784
        %5786 = vrot.lane.b32.xlu0 %v3675, 64
        %v5787 = vpop.permute.xlu0 %5786
        %5788 = vrot.lane.b32.xlu0 %v3676, 64
        %v5789 = vpop.permute.xlu0 %5788
        %5790 = vrot.lane.b32.xlu0 %v3677, 64
        %v5791 = vpop.permute.xlu0 %5790
        %5792 = vrot.lane.b32.xlu0 %v3678, 64
        %v5793 = vpop.permute.xlu0 %5792
        %5794 = vrot.lane.b32.xlu0 %v3679, 64
        %v5795 = vpop.permute.xlu0 %5794
        %5796 = vrot.lane.b32.xlu0 %v3680, 64
        %v5797 = vpop.permute.xlu0 %5796
        %5798 = vrot.lane.b32.xlu0 %v3681, 64
        %v5799 = vpop.permute.xlu0 %5798
        %5832 = vrot.lane.b32.xlu0 %v4292, 80
        %v5833 = vpop.permute.xlu0 %5832
        %5834 = vrot.lane.b32.xlu0 %v4293, 80
        %v5835 = vpop.permute.xlu0 %5834
        %5836 = vrot.lane.b32.xlu0 %v4294, 80
        %v5837 = vpop.permute.xlu0 %5836
        %5838 = vrot.lane.b32.xlu0 %v4295, 80
        %v5839 = vpop.permute.xlu0 %5838
        %5840 = vrot.lane.b32.xlu0 %v4296, 80
        %v5841 = vpop.permute.xlu0 %5840
        %5842 = vrot.lane.b32.xlu0 %v4297, 80
        %v5843 = vpop.permute.xlu0 %5842
        %5844 = vrot.lane.b32.xlu0 %v4298, 80
        %v5845 = vpop.permute.xlu0 %5844
        %5846 = vrot.lane.b32.xlu0 %v4299, 80
        %v5847 = vpop.permute.xlu0 %5846
        %5848 = vrot.lane.b32.xlu0 %v4300, 80
        %v5849 = vpop.permute.xlu0 %5848
        %5850 = vrot.lane.b32.xlu0 %v4301, 80
        %v5851 = vpop.permute.xlu0 %5850
        %5852 = vrot.lane.b32.xlu0 %v4302, 80
        %v5853 = vpop.permute.xlu0 %5852
        %5854 = vrot.lane.b32.xlu0 %v4303, 80
        %v5855 = vpop.permute.xlu0 %5854
        %5856 = vrot.lane.b32.xlu0 %v4304, 80
        %v5857 = vpop.permute.xlu0 %5856
        %5858 = vrot.lane.b32.xlu0 %v4305, 80
        %v5859 = vpop.permute.xlu0 %5858
        %5860 = vrot.lane.b32.xlu0 %v4306, 80
        %v5861 = vpop.permute.xlu0 %5860
        %5862 = vrot.lane.b32.xlu0 %v4307, 80
        %v5863 = vpop.permute.xlu0 %5862
        %5896 = vrot.lane.b32.xlu0 %v4918, 96
        %v5897 = vpop.permute.xlu0 %5896
        %5898 = vrot.lane.b32.xlu0 %v4919, 96
        %v5899 = vpop.permute.xlu0 %5898
        %5900 = vrot.lane.b32.xlu0 %v4920, 96
        %v5901 = vpop.permute.xlu0 %5900
        %5902 = vrot.lane.b32.xlu0 %v4921, 96
        %v5903 = vpop.permute.xlu0 %5902
        %5904 = vrot.lane.b32.xlu0 %v4922, 96
        %v5905 = vpop.permute.xlu0 %5904
        %5906 = vrot.lane.b32.xlu0 %v4923, 96
        %v5907 = vpop.permute.xlu0 %5906
        %5908 = vrot.lane.b32.xlu0 %v4924, 96
        %v5909 = vpop.permute.xlu0 %5908
        %5910 = vrot.lane.b32.xlu0 %v4925, 96
        %v5911 = vpop.permute.xlu0 %5910
        %5912 = vrot.lane.b32.xlu0 %v4926, 96
        %v5913 = vpop.permute.xlu0 %5912
        %5914 = vrot.lane.b32.xlu0 %v4927, 96
        %v5915 = vpop.permute.xlu0 %5914
        %5916 = vrot.lane.b32.xlu0 %v4928, 96
        %v5917 = vpop.permute.xlu0 %5916
        %5918 = vrot.lane.b32.xlu0 %v4929, 96
        %v5919 = vpop.permute.xlu0 %5918
        %5920 = vrot.lane.b32.xlu0 %v4930, 96
        %v5921 = vpop.permute.xlu0 %5920
        %5922 = vrot.lane.b32.xlu0 %v4931, 96
        %v5923 = vpop.permute.xlu0 %5922
        %5924 = vrot.lane.b32.xlu0 %v4932, 96
        %v5925 = vpop.permute.xlu0 %5924
        %5926 = vrot.lane.b32.xlu0 %v4933, 96
        %v5927 = vpop.permute.xlu0 %5926
        %5960 = vrot.lane.b32.xlu0 %v5544, 112
        %v5961 = vpop.permute.xlu0 %5960
        %5962 = vrot.lane.b32.xlu0 %v5545, 112
        %v5963 = vpop.permute.xlu0 %5962
        %5964 = vrot.lane.b32.xlu0 %v5546, 112
        %v5965 = vpop.permute.xlu0 %5964
        %5966 = vrot.lane.b32.xlu0 %v5547, 112
        %v5967 = vpop.permute.xlu0 %5966
        %5968 = vrot.lane.b32.xlu0 %v5548, 112
        %v5969 = vpop.permute.xlu0 %5968
        %5970 = vrot.lane.b32.xlu0 %v5549, 112
        %v5971 = vpop.permute.xlu0 %5970
        %5972 = vrot.lane.b32.xlu0 %v5550, 112
        %v5973 = vpop.permute.xlu0 %5972
        %5974 = vrot.lane.b32.xlu0 %v5551, 112
        %v5975 = vpop.permute.xlu0 %5974
        %5976 = vrot.lane.b32.xlu0 %v5552, 112
        %v5977 = vpop.permute.xlu0 %5976
        %5978 = vrot.lane.b32.xlu0 %v5553, 112
        %v5979 = vpop.permute.xlu0 %5978
        %5980 = vrot.lane.b32.xlu0 %v5554, 112
        %v5981 = vpop.permute.xlu0 %5980
        %5982 = vrot.lane.b32.xlu0 %v5555, 112
        %v5983 = vpop.permute.xlu0 %5982
        %5984 = vrot.lane.b32.xlu0 %v5556, 112
        %v5985 = vpop.permute.xlu0 %5984
        %5986 = vrot.lane.b32.xlu0 %v5557, 112
        %v5987 = vpop.permute.xlu0 %5986
        %5988 = vrot.lane.b32.xlu0 %v5558, 112
        %v5989 = vpop.permute.xlu0 %5988
        %5990 = vrot.lane.b32.xlu0 %v5559, 112
        %v5991 = vpop.permute.xlu0 %5990
        %v6008 = vsel %vm615, %v1146, %v5577
        %v6009 = vsel %vm615, %v1147, %v5579
        %v6010 = vsel %vm615, %v1148, %v5581
        %v6011 = vsel %vm615, %v1149, %v5583
        %v6012 = vsel %vm615, %v1150, %v5585
        %v6013 = vsel %vm615, %v1151, %v5587
        %v6014 = vsel %vm615, %v1152, %v5589
        %v6015 = vsel %vm615, %v1153, %v5591
        %v6016 = vsel %vm615, %v1154, %v5593
        %v6017 = vsel %vm615, %v1155, %v5595
        %v6018 = vsel %vm615, %v1156, %v5597
        %v6019 = vsel %vm615, %v1157, %v5599
        %v6020 = vsel %vm615, %v1158, %v5601
        %v6021 = vsel %vm615, %v1159, %v5603
        %v6022 = vsel %vm615, %v1160, %v5605
        %v6023 = vsel %vm615, %v1161, %v5607
        %vm6024 = vcmask 261120
        %v6025 = vsel %vm6024, %v6008, %v5641
        %v6026 = vsel %vm6024, %v6009, %v5643
        %v6027 = vsel %vm6024, %v6010, %v5645
        %v6028 = vsel %vm6024, %v6011, %v5647
        %v6029 = vsel %vm6024, %v6012, %v5649
        %v6030 = vsel %vm6024, %v6013, %v5651
        %v6031 = vsel %vm6024, %v6014, %v5653
        %v6032 = vsel %vm6024, %v6015, %v5655
        %v6033 = vsel %vm6024, %v6016, %v5657
        %v6034 = vsel %vm6024, %v6017, %v5659
        %v6035 = vsel %vm6024, %v6018, %v5661
        %v6036 = vsel %vm6024, %v6019, %v5663
        %v6037 = vsel %vm6024, %v6020, %v5665
        %v6038 = vsel %vm6024, %v6021, %v5667
        %v6039 = vsel %vm6024, %v6022, %v5669
        %v6040 = vsel %vm6024, %v6023, %v5671
        %vm6041 = vcmask 392192
        %v6042 = vsel %vm6041, %v6025, %v5705
        %v6043 = vsel %vm6041, %v6026, %v5707
        %v6044 = vsel %vm6041, %v6027, %v5709
        %v6045 = vsel %vm6041, %v6028, %v5711
        %v6046 = vsel %vm6041, %v6029, %v5713
        %v6047 = vsel %vm6041, %v6030, %v5715
        %v6048 = vsel %vm6041, %v6031, %v5717
        %v6049 = vsel %vm6041, %v6032, %v5719
        %v6050 = vsel %vm6041, %v6033, %v5721
        %v6051 = vsel %vm6041, %v6034, %v5723
        %v6052 = vsel %vm6041, %v6035, %v5725
        %v6053 = vsel %vm6041, %v6036, %v5727
        %v6054 = vsel %vm6041, %v6037, %v5729
        %v6055 = vsel %vm6041, %v6038, %v5731
        %v6056 = vsel %vm6041, %v6039, %v5733
        %v6057 = vsel %vm6041, %v6040, %v5735
        %vm6058 = vcmask 523264
        %v6059 = vsel %vm6058, %v6042, %v5769
        %v6060 = vsel %vm6058, %v6043, %v5771
        %v6061 = vsel %vm6058, %v6044, %v5773
        %v6062 = vsel %vm6058, %v6045, %v5775
        %v6063 = vsel %vm6058, %v6046, %v5777
        %v6064 = vsel %vm6058, %v6047, %v5779
        %v6065 = vsel %vm6058, %v6048, %v5781
        %v6066 = vsel %vm6058, %v6049, %v5783
        %v6067 = vsel %vm6058, %v6050, %v5785
        %v6068 = vsel %vm6058, %v6051, %v5787
        %v6069 = vsel %vm6058, %v6052, %v5789
        %v6070 = vsel %vm6058, %v6053, %v5791
        %v6071 = vsel %vm6058, %v6054, %v5793
        %v6072 = vsel %vm6058, %v6055, %v5795
        %v6073 = vsel %vm6058, %v6056, %v5797
        %v6074 = vsel %vm6058, %v6057, %v5799
        %vm6075 = vcmask 654336
        %v6076 = vsel %vm6075, %v6059, %v5833
        %v6077 = vsel %vm6075, %v6060, %v5835
        %v6078 = vsel %vm6075, %v6061, %v5837
        %v6079 = vsel %vm6075, %v6062, %v5839
        %v6080 = vsel %vm6075, %v6063, %v5841
        %v6081 = vsel %vm6075, %v6064, %v5843
        %v6082 = vsel %vm6075, %v6065, %v5845
        %v6083 = vsel %vm6075, %v6066, %v5847
        %v6084 = vsel %vm6075, %v6067, %v5849
        %v6085 = vsel %vm6075, %v6068, %v5851
        %v6086 = vsel %vm6075, %v6069, %v5853
        %v6087 = vsel %vm6075, %v6070, %v5855
        %v6088 = vsel %vm6075, %v6071, %v5857
        %v6089 = vsel %vm6075, %v6072, %v5859
        %v6090 = vsel %vm6075, %v6073, %v5861
        %v6091 = vsel %vm6075, %v6074, %v5863
        %vm6092 = vcmask 785408
        %v6093 = vsel %vm6092, %v6076, %v5897
        %v6094 = vsel %vm6092, %v6077, %v5899
        %v6095 = vsel %vm6092, %v6078, %v5901
        %v6096 = vsel %vm6092, %v6079, %v5903
        %v6097 = vsel %vm6092, %v6080, %v5905
        %v6098 = vsel %vm6092, %v6081, %v5907
        %v6099 = vsel %vm6092, %v6082, %v5909
        %v6100 = vsel %vm6092, %v6083, %v5911
        %v6101 = vsel %vm6092, %v6084, %v5913
        %v6102 = vsel %vm6092, %v6085, %v5915
        %v6103 = vsel %vm6092, %v6086, %v5917
        %v6104 = vsel %vm6092, %v6087, %v5919
        %v6105 = vsel %vm6092, %v6088, %v5921
        %v6106 = vsel %vm6092, %v6089, %v5923
        %v6107 = vsel %vm6092, %v6090, %v5925
        %v6108 = vsel %vm6092, %v6091, %v5927
        %vm6109 = vcmask 916480
        %v6110 = vsel %vm6109, %v6093, %v5961
        %v6111 = vsel %vm6109, %v6094, %v5963
        %v6112 = vsel %vm6109, %v6095, %v5965
        %v6113 = vsel %vm6109, %v6096, %v5967
        %v6114 = vsel %vm6109, %v6097, %v5969
        %v6115 = vsel %vm6109, %v6098, %v5971
        %v6116 = vsel %vm6109, %v6099, %v5973
        %v6117 = vsel %vm6109, %v6100, %v5975
        %v6118 = vsel %vm6109, %v6101, %v5977
        %v6119 = vsel %vm6109, %v6102, %v5979
        %v6120 = vsel %vm6109, %v6103, %v5981
        %v6121 = vsel %vm6109, %v6104, %v5983
        %v6122 = vsel %vm6109, %v6105, %v5985
        %v6123 = vsel %vm6109, %v6106, %v5987
        %v6124 = vsel %vm6109, %v6107, %v5989
        %v6125 = vsel %vm6109, %v6108, %v5991
        %v6126 = vld [vmem:[#allocation7] sm:$0xff]
        %v6127 = vld [vmem:[#allocation7 + $0x8] sm:$0xff]
        %v6128 = vld [vmem:[#allocation7 + $0x10] sm:$0xff]
        %v6129 = vld [vmem:[#allocation7 + $0x18] sm:$0xff]
        %v6130 = vld [vmem:[#allocation7 + $0x20] sm:$0xff]
        %v6131 = vld [vmem:[#allocation7 + $0x28] sm:$0xff]
        %v6132 = vld [vmem:[#allocation7 + $0x30] sm:$0xff]
        %v6133 = vld [vmem:[#allocation7 + $0x38] sm:$0xff]
        %v6134 = vld [vmem:[#allocation7 + $0x40] sm:$0xff]
        %v6135 = vld [vmem:[#allocation7 + $0x48] sm:$0xff]
        %v6136 = vld [vmem:[#allocation7 + $0x50] sm:$0xff]
        %v6137 = vld [vmem:[#allocation7 + $0x58] sm:$0xff]
        %v6138 = vld [vmem:[#allocation7 + $0x60] sm:$0xff]
        %v6139 = vld [vmem:[#allocation7 + $0x68] sm:$0xff]
        %v6140 = vld [vmem:[#allocation7 + $0x70] sm:$0xff]
        %v6141 = vld [vmem:[#allocation7 + $0x78] sm:$0xff]
        %v6142 = vld [vmem:[%s3] sm:$0x1]
        %v6144 = vlaneseq
        %v6145 = vshrl.u32 %v6144, 7
        %v6146 = vsub.s32 0, %v6145
        %v6147 = vrot.slane %v6142, %v6146
        %6149 = vmatprep.subr.mxu0 0.0
        %6150 = vmatpush1.msra.mxu0 %v6141
        %6151 = vmatprep.subr.mxu0 0.0
        %6152 = vmatpush1.msra.mxu0 %v6140
        %6153 = vmatprep.subr.mxu0 0.0
        %6154 = vmatpush1.msra.mxu0 %v6139
        %6155 = vmatprep.subr.mxu0 0.0
        %6156 = vmatpush1.msra.mxu0 %v6138
        %6157 = vmatprep.subr.mxu0 0.0
        %6158 = vmatpush1.msra.mxu0 %v6137
        %6159 = vmatprep.subr.mxu0 0.0
        %6160 = vmatpush1.msra.mxu0 %v6136
        %6161 = vmatprep.subr.mxu0 0.0
        %6162 = vmatpush1.msra.mxu0 %v6135
        %6163 = vmatprep.subr.mxu0 0.0
        %6164 = vmatpush1.msra.mxu0 %v6134
        %6165 = vmatprep.subr.mxu0 0.0
        %6166 = vmatpush1.msra.mxu0 %v6133
        %6167 = vmatprep.subr.mxu0 0.0
        %6168 = vmatpush1.msra.mxu0 %v6132
        %6169 = vmatprep.subr.mxu0 0.0
        %6170 = vmatpush1.msra.mxu0 %v6131
        %6171 = vmatprep.subr.mxu0 0.0
        %6172 = vmatpush1.msra.mxu0 %v6130
        %6173 = vmatprep.subr.mxu0 0.0
        %6174 = vmatpush1.msra.mxu0 %v6129
        %6175 = vmatprep.subr.mxu0 0.0
        %6176 = vmatpush1.msra.mxu0 %v6128
        %6177 = vmatprep.subr.mxu0 0.0
        %6178 = vmatpush1.msra.mxu0 %v6127
        %6179 = vmatprep.subr.mxu0 0.0
        %6180 = vmatpush1.msra.mxu0 %v6126
        %6181 = vmatprep.subr.mxu0 0.0
        %6182 = vmatpush2.msra.mxu0 0.0
        %6183 = vmatprep.subr.mxu0 0.0
        %6184 = vmatpush2.msra.mxu0 0.0
        %6185 = vmatprep.subr.mxu0 0.0
        %6186 = vmatpush2.msra.mxu0 0.0
        %6187 = vmatprep.subr.mxu0 0.0
        %6188 = vmatpush2.msra.mxu0 0.0
        %6189 = vmatprep.subr.mxu0 0.0
        %6190 = vmatpush2.msra.mxu0 0.0
        %6191 = vmatprep.subr.mxu0 0.0
        %6192 = vmatpush2.msra.mxu0 0.0
        %6193 = vmatprep.subr.mxu0 0.0
        %6194 = vmatpush2.msra.mxu0 0.0
        %6195 = vmatprep.subr.mxu0 0.0
        %6196 = vmatpush2.msra.mxu0 0.0
        %6197 = vmatprep.subr.mxu0 0.0
        %6198 = vmatpush2.msra.mxu0 0.0
        %6199 = vmatprep.subr.mxu0 0.0
        %6200 = vmatpush2.msra.mxu0 0.0
        %6201 = vmatprep.subr.mxu0 0.0
        %6202 = vmatpush2.msra.mxu0 0.0
        %6203 = vmatprep.subr.mxu0 0.0
        %6204 = vmatpush2.msra.mxu0 0.0
        %6205 = vmatprep.subr.mxu0 0.0
        %6206 = vmatpush2.msra.mxu0 0.0
        %6207 = vmatprep.subr.mxu0 0.0
        %6208 = vmatpush2.msra.mxu0 0.0
        %6209 = vmatprep.subr.mxu0 0.0
        %6210 = vmatpush2.msra.mxu0 0.0
        %6211 = vmatprep.subr.mxu0 0.0
        %6212 = vmatpush2.msra.mxu0 0.0
        %6213 = vmatprep.mubr.f32.mxu0 0.0
        %6214 = vmatmul.mubr.f32.gmra.mxu0 %v6110
        %v6215 = vpop.f32.mrf.mxu0
        %v6216 = vadd.f32 %v6147, %v6215
        %v6217 = vpop.f32.mrf.mxu0
        %6218 = vmatprep.mubr.f32.mxu0 0.0
        %6219 = vmatmul.mubr.f32.gmra.mxu0 %v6111
        %v6220 = vpop.f32.mrf.mxu0
        %v6221 = vadd.f32 %v6147, %v6220
        %v6222 = vpop.f32.mrf.mxu0
        %6223 = vmatprep.mubr.f32.mxu0 0.0
        %6224 = vmatmul.mubr.f32.gmra.mxu0 %v6112
        %v6225 = vpop.f32.mrf.mxu0
        %v6226 = vadd.f32 %v6147, %v6225
        %v6227 = vpop.f32.mrf.mxu0
        %6228 = vmatprep.mubr.f32.mxu0 0.0
        %6229 = vmatmul.mubr.f32.gmra.mxu0 %v6113
        %v6230 = vpop.f32.mrf.mxu0
        %v6231 = vadd.f32 %v6147, %v6230
        %v6232 = vpop.f32.mrf.mxu0
        %6233 = vmatprep.mubr.f32.mxu0 0.0
        %6234 = vmatmul.mubr.f32.gmra.mxu0 %v6114
        %v6235 = vpop.f32.mrf.mxu0
        %v6236 = vadd.f32 %v6147, %v6235
        %v6237 = vpop.f32.mrf.mxu0
        %6238 = vmatprep.mubr.f32.mxu0 0.0
        %6239 = vmatmul.mubr.f32.gmra.mxu0 %v6115
        %v6240 = vpop.f32.mrf.mxu0
        %v6241 = vadd.f32 %v6147, %v6240
        %v6242 = vpop.f32.mrf.mxu0
        %6243 = vmatprep.mubr.f32.mxu0 0.0
        %6244 = vmatmul.mubr.f32.gmra.mxu0 %v6116
        %v6245 = vpop.f32.mrf.mxu0
        %v6246 = vadd.f32 %v6147, %v6245
        %v6247 = vpop.f32.mrf.mxu0
        %6248 = vmatprep.mubr.f32.mxu0 0.0
        %6249 = vmatmul.mubr.f32.gmra.mxu0 %v6117
        %v6250 = vpop.f32.mrf.mxu0
        %v6251 = vadd.f32 %v6147, %v6250
        %v6252 = vpop.f32.mrf.mxu0
        %6253 = vmatprep.mubr.f32.mxu0 0.0
        %6254 = vmatmul.mubr.f32.gmra.mxu0 %v6118
        %v6255 = vpop.f32.mrf.mxu0
        %v6256 = vadd.f32 %v6147, %v6255
        %v6257 = vpop.f32.mrf.mxu0
        %6258 = vmatprep.mubr.f32.mxu0 0.0
        %6259 = vmatmul.mubr.f32.gmra.mxu0 %v6119
        %v6260 = vpop.f32.mrf.mxu0
        %v6261 = vadd.f32 %v6147, %v6260
        %v6262 = vpop.f32.mrf.mxu0
        %6263 = vmatprep.mubr.f32.mxu0 0.0
        %6264 = vmatmul.mubr.f32.gmra.mxu0 %v6120
        %v6265 = vpop.f32.mrf.mxu0
        %v6266 = vadd.f32 %v6147, %v6265
        %v6267 = vpop.f32.mrf.mxu0
        %6268 = vmatprep.mubr.f32.mxu0 0.0
        %6269 = vmatmul.mubr.f32.gmra.mxu0 %v6121
        %v6270 = vpop.f32.mrf.mxu0
        %v6271 = vadd.f32 %v6147, %v6270
        %v6272 = vpop.f32.mrf.mxu0
        %6273 = vmatprep.mubr.f32.mxu0 0.0
        %6274 = vmatmul.mubr.f32.gmra.mxu0 %v6122
        %v6275 = vpop.f32.mrf.mxu0
        %v6276 = vadd.f32 %v6147, %v6275
        %v6277 = vpop.f32.mrf.mxu0
        %6278 = vmatprep.mubr.f32.mxu0 0.0
        %6279 = vmatmul.mubr.f32.gmra.mxu0 %v6123
        %v6280 = vpop.f32.mrf.mxu0
        %v6281 = vadd.f32 %v6147, %v6280
        %v6282 = vpop.f32.mrf.mxu0
        %6283 = vmatprep.mubr.f32.mxu0 0.0
        %6284 = vmatmul.mubr.f32.gmra.mxu0 %v6124
        %v6285 = vpop.f32.mrf.mxu0
        %v6286 = vadd.f32 %v6147, %v6285
        %v6287 = vpop.f32.mrf.mxu0
        %6288 = vmatprep.mubr.f32.mxu0 0.0
        %6289 = vmatmul.mubr.f32.gmra.mxu0 %v6125
        %v6290 = vpop.f32.mrf.mxu0
        %v6291 = vadd.f32 %v6147, %v6290
        %v6292 = vpop.f32.mrf.mxu0
        %6293 = vdwg.mxu0
        %6294 = vst [vmem:[%s244] sm:$0xff] %v6216
        %6295 = vst [vmem:[%s244 + $0x8] sm:$0xff] %v6221
        %6296 = vst [vmem:[%s244 + $0x10] sm:$0xff] %v6226
        %6297 = vst [vmem:[%s244 + $0x18] sm:$0xff] %v6231
        %6298 = vst [vmem:[%s244 + $0x20] sm:$0xff] %v6236
        %6299 = vst [vmem:[%s244 + $0x28] sm:$0xff] %v6241
        %6300 = vst [vmem:[%s244 + $0x30] sm:$0xff] %v6246
        %6301 = vst [vmem:[%s244 + $0x38] sm:$0xff] %v6251
        %6302 = vst [vmem:[%s244 + $0x40] sm:$0xff] %v6256
        %6303 = vst [vmem:[%s244 + $0x48] sm:$0xff] %v6261
        %6304 = vst [vmem:[%s244 + $0x50] sm:$0xff] %v6266
        %6305 = vst [vmem:[%s244 + $0x58] sm:$0xff] %v6271
        %6306 = vst [vmem:[%s244 + $0x60] sm:$0xff] %v6276
        %6307 = vst [vmem:[%s244 + $0x68] sm:$0xff] %v6281
        %6308 = vst [vmem:[%s244 + $0x70] sm:$0xff] %v6286
        %6309 = vst [vmem:[%s244 + $0x78] sm:$0xff] %v6291
        %s6310 = sand.u32 %s119, 1
        %s6311 = scalar_lea.sflag [#allocation4], %s6310
        %s6312 = sand.u32 %s119, 1
        %s6313 = smul.addr %s6312, 128
        %s6314 = scalar_lea.vmem [#allocation8], %s6313
        // Predicated region
        $region49: #{attention_forward.1} parent=35 // pred_check
          %p6315 = pneg %p129
        $region50: #{attention_forward.1} parent=35 // pred_check_branch
          %6317 = sbr.rel (%p6315) target = $region52
        $region51: #{attention_forward.1} parent=35 // pred_region
          %s6319 = ssub.s32 2048, 2048
          %6320 = vsyncadd %s6311, %s6319
          %s6321 = smul.addr %s22, 16
          %s6322 = smul.addr %s6321, 128
          %s6323 = scalar_lea.hbm %s4, %s6322
          %s6324 = sshll.u32 %s6314, 4
          %s6325 = int_to_ptr.vmem [resolvable:$true] %s6324
          %6330 = dma.vmem_to_hbm [thread:$0]  %s6325, 2048, %s6323, %s6311, 128, 128, 8
        $region52: #{attention_forward.1} parent=35 // pred_fallthru
          _
      $region36: #{attention_forward.1} parent=5 // pred_fallthru
        _
      %p6331 = scmp.le.s32.totalorder 2, %s17
      // Predicated region
      $region53: #{attention_forward.1} parent=5 // pred_check
        %p6332 = pneg %p6331
      $region54: #{attention_forward.1} parent=5 // pred_check_branch
        %6334 = sbr.rel (%p6332) target = $region56
      $region55: #{attention_forward.1} parent=5 // pred_region
        %s6335 = ssub.s32 %s17, 2
        // Predicated region
        $region57: #{attention_forward.1} parent=55 // pred_check
          %p6336 = pneg %p135
        $region58: #{attention_forward.1} parent=55 // pred_check_branch
          %6338 = sbr.rel (%p6336) target = $region60
        $region59: #{attention_forward.1} parent=55 // pred_region
          %s6339 = sand.u32 %s120, 1
          %s6340 = scalar_lea.sflag [#allocation4], %s6339
          %s6341 = sand.u32 %s120, 1
          %s6342 = smul.addr %s6341, 128
          %s6343 = scalar_lea.vmem [#allocation8], %s6342
          %6344 = dma.done %s6340, 2048
        $region60: #{attention_forward.1} parent=55 // pred_fallthru
          _
      $region56: #{attention_forward.1} parent=5 // pred_fallthru
        _
    $region6: #{attention_forward.1} parent=1 // loop_footer
      %s21 = sadd.s32 1, %s17
    $region7: #{attention_forward.1} parent=1 // loop_footer_branch
      %16 = sbr.rel target = $region3
    $region8: #{attention_forward.1} parent=1 // loop_exit
      _
    %6345 = vsyncpa [#allocation3], 1
    %s6346 = scalar_lea.sflag [#allocation3], 1
    %6347 = vsyncpa %s6346, 1
    %6348 = vsyncpa [#allocation6], 1
    %6349 = vsyncpa [#allocation4], 1
    %s6350 = scalar_lea.sflag [#allocation4], 1
    %6351 = vsyncpa %s6350, 1

</llo_original>
